<compile_context>
chip_gen: v7x
topology: tpu7x:2x2x1
jax: 0.10.0
libtpu: 0.0.40
codegen_flags: <defaults>
</compile_context>

<pallas_src>
import jax
import jax.numpy as jnp
from jax.experimental import pallas as pl
from jax.experimental.pallas import tpu as pltpu

VOCAB = 50            # `dim` argument of CNN.__init__
EMBED = 300
C_OUT = 128
KSIZE = 7
SEQ_LEN = 15          # implied by MaxPool1d(15 - 7 + 1)
L_OUT = SEQ_LEN - KSIZE + 1          # 9
PADK = 384                           # 7 * 50 = 350, padded up to 3 * 128 lanes
N_GROUPS = PADK // 128               # 3 lane groups of the folded table
MAX_B_TILE = 512                     # batch tile cap (multiple of 128)

# Which conv taps k can light lanes inside each 128-lane group of the folded table
# (tap k occupies absolute lanes [50k, 50k+50)).
GROUP_TAPS = tuple(
    tuple(k for k in range(KSIZE)
          if k * VOCAB < 128 * (g + 1) and k * VOCAB + VOCAB > 128 * g)
    for g in range(N_GROUPS))        # -> ((0,1,2), (2,3,4,5), (5,6))


def cnn_kernel(ids_ref, wcat_ref, bc_ref, wf_ref, bf_ref, out_ref, d_ref):
    bt = ids_ref.shape[0]
    ids = ids_ref[...]                                     # (bt, 15) int32

    # Hoisted per-position lane differences: D_j = local_lane - ids[:, j].
    # Each later compare is then `D_{t+k} == 50k - 128g` (scalar constant),
    # so the 63 (t,k) pairs never re-broadcast the token ids across lanes.
    lane = jax.lax.broadcasted_iota(jnp.int32, (bt, 128), 1)
    for j in range(SEQ_LEN):
        d_ref[j] = lane - ids[:, j:j + 1]                  # (bt, 128) int32

    # Conv1d + MaxPool1d fused, patch built per 128-lane group.
    pooled = None
    for t in range(L_OUT):
        d = [d_ref[t + k] for k in range(KSIZE)]           # 7 (bt,128) loads
        conv_t = None
        for g, taps in enumerate(GROUP_TAPS):
            hot = None
            for k in taps:
                eq = d[k] == (VOCAB * k - 128 * g)         # compare vs scalar const
                hot = eq if hot is None else hot | eq      # taps disjoint per group
            part = jnp.dot(hot.astype(jnp.float32), wcat_ref[g],
                           preferred_element_type=jnp.float32)   # (bt, 128) K=128 MXU
            conv_t = part if conv_t is None else conv_t + part
        pooled = conv_t if pooled is None else jnp.maximum(pooled, conv_t)

    # Conv bias after the max (bias constant along the pooled axis), then ReLU.
    act = jnp.maximum(pooled + bc_ref[...], 0.0)           # (bt, 128)

    # Linear 128 -> 1 as an MXU matmul producing a lane-dense (1, bt) row.
    logits = jax.lax.dot_general(
        wf_ref[...], act,
        dimension_numbers=(((1,), (1,)), ((), ())),
        preferred_element_type=jnp.float32)                # (1, bt)
    out_ref[...] = jax.nn.sigmoid(logits + bf_ref[...])


def _pick_b_tile(batch):
    """Batch tile: small batches stay in one tiny tile; big batches use up to 512
    lanes per step while keeping >= 2 grid steps (v7x megacore) when possible."""
    if batch < 128:
        return max(8, ((batch + 7) // 8) * 8)              # sublane-aligned single tile
    n128 = pl.cdiv(batch, 128)
    return 128 * min(MAX_B_TILE // 128, max(1, n128 // 2))


def cnn_forward(x_ids, embed_tbl, conv_w, conv_b, fc_w, fc_b, *, b_tile=None):
    """x_ids: (B, SEQ_LEN) integer token indices."""
    B = x_ids.shape[0]
    if b_tile is None:
        b_tile = _pick_b_tile(B)
    n_tiles = pl.cdiv(B, b_tile)
    b_pad = n_tiles * b_tile

    ids = x_ids.astype(jnp.int32)
    if b_pad != B:
        ids = jnp.pad(ids, ((0, b_pad - B), (0, 0)))       # pad with token 0 (valid id)

    # Fold embedding + conv weight: T[k, v, o] = sum_c embed[v, c] * conv_w[o, c, k]
    # (HIGHEST precision so the folded table matches the f32 reference to < 1e-6).
    tbl = jnp.einsum("vc,ock->kvo",
                     embed_tbl.astype(jnp.float32),
                     conv_w.astype(jnp.float32),
                     precision=jax.lax.Precision.HIGHEST)  # (7, 50, 128)
    wflat = tbl.reshape(KSIZE * VOCAB, C_OUT)              # row index = k*50 + v
    wflat = jnp.pad(wflat, ((0, PADK - KSIZE * VOCAB), (0, 0)))   # 350 -> 384 rows
    wcat = wflat.reshape(N_GROUPS, 128, C_OUT)             # per-128-row groups

    bc = conv_b.reshape(1, C_OUT).astype(jnp.float32)
    wf = fc_w.reshape(1, C_OUT).astype(jnp.float32)
    bf = fc_b.reshape(1, 1).astype(jnp.float32)

    cost = pl.CostEstimate(
        flops=2 * b_pad * L_OUT * PADK * C_OUT + 2 * b_pad * C_OUT,
        transcendentals=b_pad,
        bytes_accessed=(ids.size + wcat.size + b_pad + 2 * C_OUT + 1) * 4)

    out = pl.pallas_call(
        cnn_kernel,
        out_shape=jax.ShapeDtypeStruct((1, b_pad), jnp.float32),
        grid_spec=pltpu.PrefetchScalarGridSpec(
            num_scalar_prefetch=0,
            grid=(n_tiles,),
            in_specs=[
                pl.BlockSpec((b_tile, SEQ_LEN), lambda i: (i, 0)),       # ids (streamed)
                pl.BlockSpec((N_GROUPS, 128, C_OUT), lambda i: (0, 0, 0)),  # folded table
                pl.BlockSpec((1, C_OUT), lambda i: (0, 0)),              # conv bias
                pl.BlockSpec((1, C_OUT), lambda i: (0, 0)),              # fc weight
                pl.BlockSpec((1, 1), lambda i: (0, 0)),                  # fc bias
            ],
            out_specs=pl.BlockSpec((1, b_tile), lambda i: (0, i)),       # lane-dense row
            scratch_shapes=[pltpu.VMEM((SEQ_LEN, b_tile, 128), jnp.int32)],  # hoisted D_j
        ),
        compiler_params=pltpu.CompilerParams(
            dimension_semantics=("parallel",)),
        cost_estimate=cost,
    )(ids, wcat, bc, wf, bf)

    return jnp.transpose(out)[:B]                          # (B, 1)


def _reference(x_ids, embed_tbl, conv_w, conv_b, fc_w, fc_b):
    """Pure-JAX reference mirroring the PyTorch forward exactly (f32 precision)."""
    hp = jax.lax.Precision.HIGHEST
    x1 = jnp.take(embed_tbl, x_ids, axis=0)                # (B, L, 300)
    x1 = jnp.transpose(x1, (0, 2, 1))                      # (B, 300, L)
    outs = []
    for t in range(L_OUT):
        seg = x1[:, :, t:t + KSIZE]                        # (B, 300, 7)
        outs.append(jnp.einsum("bck,ock->bo", seg, conv_w, precision=hp) + conv_b)
    x2 = jnp.stack(outs, axis=-1)                          # (B, 128, 9)
    x3 = jnp.max(x2, axis=-1, keepdims=True)               # MaxPool1d(9) -> (B, 128, 1)
    x3 = jnp.maximum(x3, 0.0).reshape(-1, C_OUT)           # ReLU + view
    x4 = jnp.dot(x3, fc_w.T, precision=hp) + fc_b          # (B, 1)
    return jax.nn.sigmoid(x4)


if __name__ == "__main__":
    key = jax.random.PRNGKey(0)
    k_emb, k_cw, k_cb, k_fw, k_fb, k_x = jax.random.split(key, 6)

    B = 2
    embed_tbl = jax.random.normal(k_emb, (VOCAB, EMBED), dtype=jnp.float32)
    conv_w = jax.random.normal(k_cw, (C_OUT, EMBED, KSIZE), dtype=jnp.float32) * (1.0 / (EMBED * KSIZE) ** 0.5)
    conv_b = jax.random.normal(k_cb, (C_OUT,), dtype=jnp.float32) * 0.01
    fc_w = jax.random.normal(k_fw, (1, C_OUT), dtype=jnp.float32) * (1.0 / C_OUT ** 0.5)
    fc_b = jnp.zeros((1,), dtype=jnp.float32)

    x_ids = jax.random.randint(k_x, (B, SEQ_LEN), 0, VOCAB, dtype=jnp.int32)

    out = cnn_forward(x_ids, embed_tbl, conv_w, conv_b, fc_w, fc_b)
    out = jax.block_until_ready(out)

    ref = _reference(x_ids, embed_tbl, conv_w, conv_b, fc_w, fc_b)
    assert out.shape == (B, 1)
    assert jnp.allclose(out, ref, atol=1e-4, rtol=1e-4), (out, ref)

    # TODO(synk): the PyTorch forward's debug print() calls are intentionally omitted.
    print("KERNEL_OK")
</pallas_src>

<mosaic_0001>
module attributes {stable_mosaic.version = 11 : i64} {
  func.func @cnn_kernel(%arg0: i32, %arg1: memref<8x15xi32, #tpu.memory_space<vmem>>, %arg2: memref<3x128x128xf32, #tpu.memory_space<vmem>>, %arg3: memref<1x128xf32, #tpu.memory_space<vmem>>, %arg4: memref<1x128xf32, #tpu.memory_space<vmem>>, %arg5: memref<1x1xf32, #tpu.memory_space<vmem>>, %arg6: memref<1x8xf32, #tpu.memory_space<vmem>>, %arg7: memref<15x8x128xi32, #tpu.memory_space<vmem>>) attributes {dimension_semantics = [#tpu.dimension_semantics<parallel>], iteration_bounds = array<i64: 1>, scalar_prefetch = 0 : i64, scratch_operands = 1 : i64, tpu.core_type = #tpu.core_type<tc>, window_params = [{transform_indices = @transform_0, window_bounds = array<i64: 8, 15>}, {pipeline_mode = #tpu.pipeline_mode<synchronous>, transform_indices = @transform_1, window_bounds = array<i64: 3, 128, 128>}, {pipeline_mode = #tpu.pipeline_mode<synchronous>, transform_indices = @transform_2, window_bounds = array<i64: 1, 128>}, {pipeline_mode = #tpu.pipeline_mode<synchronous>, transform_indices = @transform_3, window_bounds = array<i64: 1, 128>}, {pipeline_mode = #tpu.pipeline_mode<synchronous>, transform_indices = @transform_4, window_bounds = array<i64: 1, 1>}, {transform_indices = @transform_5, window_bounds = array<i64: 1, 8>}]} {
    %c0 = arith.constant 0 : index
    %c0_0 = arith.constant 0 : index
    %0 = vector.load %arg1[%c0, %c0_0] : memref<8x15xi32, #tpu.memory_space<vmem>>, vector<8x15xi32>
    %1 = tpu.iota {dimensions = array<i32: 1>} : vector<8x128xi32>
    %2 = vector.extract_strided_slice %0 {offsets = [0, 0], sizes = [8, 1], strides = [1, 1]} : vector<8x15xi32> to vector<8x1xi32>
    %3 = vector.broadcast %2 : vector<8x1xi32> to vector<8x128xi32>
    %4 = arith.subi %1, %3 : vector<8x128xi32>
    %c0_1 = arith.constant 0 : index
    %c0_2 = arith.constant 0 : index
    %c0_3 = arith.constant 0 : index
    %5 = vector.load %arg7[%c0_1, %c0_2, %c0_3] : memref<15x8x128xi32, #tpu.memory_space<vmem>>, vector<1x8x128xi32>
    %6 = vector.shape_cast %5 : vector<1x8x128xi32> to vector<8x128xi32>
    %7 = vector.shape_cast %4 : vector<8x128xi32> to vector<1x8x128xi32>
    tpu.vector_store %arg7[%c0_1, %c0_2, %c0_3], %7 {strides = array<i32>} : memref<15x8x128xi32, #tpu.memory_space<vmem>>, vector<1x8x128xi32>,
    %8 = vector.extract_strided_slice %0 {offsets = [0, 1], sizes = [8, 1], strides = [1, 1]} : vector<8x15xi32> to vector<8x1xi32>
    %9 = vector.broadcast %8 : vector<8x1xi32> to vector<8x128xi32>
    %10 = arith.subi %1, %9 : vector<8x128xi32>
    %c1 = arith.constant 1 : index
    %c0_4 = arith.constant 0 : index
    %c0_5 = arith.constant 0 : index
    %11 = vector.load %arg7[%c1, %c0_4, %c0_5] : memref<15x8x128xi32, #tpu.memory_space<vmem>>, vector<1x8x128xi32>
    %12 = vector.shape_cast %11 : vector<1x8x128xi32> to vector<8x128xi32>
    %13 = vector.shape_cast %10 : vector<8x128xi32> to vector<1x8x128xi32>
    tpu.vector_store %arg7[%c1, %c0_4, %c0_5], %13 {strides = array<i32>} : memref<15x8x128xi32, #tpu.memory_space<vmem>>, vector<1x8x128xi32>,
    %14 = vector.extract_strided_slice %0 {offsets = [0, 2], sizes = [8, 1], strides = [1, 1]} : vector<8x15xi32> to vector<8x1xi32>
    %15 = vector.broadcast %14 : vector<8x1xi32> to vector<8x128xi32>
    %16 = arith.subi %1, %15 : vector<8x128xi32>
    %c2 = arith.constant 2 : index
    %c0_6 = arith.constant 0 : index
    %c0_7 = arith.constant 0 : index
    %17 = vector.load %arg7[%c2, %c0_6, %c0_7] : memref<15x8x128xi32, #tpu.memory_space<vmem>>, vector<1x8x128xi32>
    %18 = vector.shape_cast %17 : vector<1x8x128xi32> to vector<8x128xi32>
    %19 = vector.shape_cast %16 : vector<8x128xi32> to vector<1x8x128xi32>
    tpu.vector_store %arg7[%c2, %c0_6, %c0_7], %19 {strides = array<i32>} : memref<15x8x128xi32, #tpu.memory_space<vmem>>, vector<1x8x128xi32>,
    %20 = vector.extract_strided_slice %0 {offsets = [0, 3], sizes = [8, 1], strides = [1, 1]} : vector<8x15xi32> to vector<8x1xi32>
    %21 = vector.broadcast %20 : vector<8x1xi32> to vector<8x128xi32>
    %22 = arith.subi %1, %21 : vector<8x128xi32>
    %c3 = arith.constant 3 : index
    %c0_8 = arith.constant 0 : index
    %c0_9 = arith.constant 0 : index
    %23 = vector.load %arg7[%c3, %c0_8, %c0_9] : memref<15x8x128xi32, #tpu.memory_space<vmem>>, vector<1x8x128xi32>
    %24 = vector.shape_cast %23 : vector<1x8x128xi32> to vector<8x128xi32>
    %25 = vector.shape_cast %22 : vector<8x128xi32> to vector<1x8x128xi32>
    tpu.vector_store %arg7[%c3, %c0_8, %c0_9], %25 {strides = array<i32>} : memref<15x8x128xi32, #tpu.memory_space<vmem>>, vector<1x8x128xi32>,
    %26 = vector.extract_strided_slice %0 {offsets = [0, 4], sizes = [8, 1], strides = [1, 1]} : vector<8x15xi32> to vector<8x1xi32>
    %27 = vector.broadcast %26 : vector<8x1xi32> to vector<8x128xi32>
    %28 = arith.subi %1, %27 : vector<8x128xi32>
    %c4 = arith.constant 4 : index
    %c0_10 = arith.constant 0 : index
    %c0_11 = arith.constant 0 : index
    %29 = vector.load %arg7[%c4, %c0_10, %c0_11] : memref<15x8x128xi32, #tpu.memory_space<vmem>>, vector<1x8x128xi32>
    %30 = vector.shape_cast %29 : vector<1x8x128xi32> to vector<8x128xi32>
    %31 = vector.shape_cast %28 : vector<8x128xi32> to vector<1x8x128xi32>
    tpu.vector_store %arg7[%c4, %c0_10, %c0_11], %31 {strides = array<i32>} : memref<15x8x128xi32, #tpu.memory_space<vmem>>, vector<1x8x128xi32>,
    %32 = vector.extract_strided_slice %0 {offsets = [0, 5], sizes = [8, 1], strides = [1, 1]} : vector<8x15xi32> to vector<8x1xi32>
    %33 = vector.broadcast %32 : vector<8x1xi32> to vector<8x128xi32>
    %34 = arith.subi %1, %33 : vector<8x128xi32>
    %c5 = arith.constant 5 : index
    %c0_12 = arith.constant 0 : index
    %c0_13 = arith.constant 0 : index
    %35 = vector.load %arg7[%c5, %c0_12, %c0_13] : memref<15x8x128xi32, #tpu.memory_space<vmem>>, vector<1x8x128xi32>
    %36 = vector.shape_cast %35 : vector<1x8x128xi32> to vector<8x128xi32>
    %37 = vector.shape_cast %34 : vector<8x128xi32> to vector<1x8x128xi32>
    tpu.vector_store %arg7[%c5, %c0_12, %c0_13], %37 {strides = array<i32>} : memref<15x8x128xi32, #tpu.memory_space<vmem>>, vector<1x8x128xi32>,
    %38 = vector.extract_strided_slice %0 {offsets = [0, 6], sizes = [8, 1], strides = [1, 1]} : vector<8x15xi32> to vector<8x1xi32>
    %39 = vector.broadcast %38 : vector<8x1xi32> to vector<8x128xi32>
    %40 = arith.subi %1, %39 : vector<8x128xi32>
    %c6 = arith.constant 6 : index
    %c0_14 = arith.constant 0 : index
    %c0_15 = arith.constant 0 : index
    %41 = vector.load %arg7[%c6, %c0_14, %c0_15] : memref<15x8x128xi32, #tpu.memory_space<vmem>>, vector<1x8x128xi32>
    %42 = vector.shape_cast %41 : vector<1x8x128xi32> to vector<8x128xi32>
    %43 = vector.shape_cast %40 : vector<8x128xi32> to vector<1x8x128xi32>
    tpu.vector_store %arg7[%c6, %c0_14, %c0_15], %43 {strides = array<i32>} : memref<15x8x128xi32, #tpu.memory_space<vmem>>, vector<1x8x128xi32>,
    %44 = vector.extract_strided_slice %0 {offsets = [0, 7], sizes = [8, 1], strides = [1, 1]} : vector<8x15xi32> to vector<8x1xi32>
    %45 = vector.broadcast %44 : vector<8x1xi32> to vector<8x128xi32>
    %46 = arith.subi %1, %45 : vector<8x128xi32>
    %c7 = arith.constant 7 : index
    %c0_16 = arith.constant 0 : index
    %c0_17 = arith.constant 0 : index
    %47 = vector.load %arg7[%c7, %c0_16, %c0_17] : memref<15x8x128xi32, #tpu.memory_space<vmem>>, vector<1x8x128xi32>
    %48 = vector.shape_cast %47 : vector<1x8x128xi32> to vector<8x128xi32>
    %49 = vector.shape_cast %46 : vector<8x128xi32> to vector<1x8x128xi32>
    tpu.vector_store %arg7[%c7, %c0_16, %c0_17], %49 {strides = array<i32>} : memref<15x8x128xi32, #tpu.memory_space<vmem>>, vector<1x8x128xi32>,
    %50 = vector.extract_strided_slice %0 {offsets = [0, 8], sizes = [8, 1], strides = [1, 1]} : vector<8x15xi32> to vector<8x1xi32>
    %51 = vector.broadcast %50 : vector<8x1xi32> to vector<8x128xi32>
    %52 = arith.subi %1, %51 : vector<8x128xi32>
    %c8 = arith.constant 8 : index
    %c0_18 = arith.constant 0 : index
    %c0_19 = arith.constant 0 : index
    %53 = vector.load %arg7[%c8, %c0_18, %c0_19] : memref<15x8x128xi32, #tpu.memory_space<vmem>>, vector<1x8x128xi32>
    %54 = vector.shape_cast %53 : vector<1x8x128xi32> to vector<8x128xi32>
    %55 = vector.shape_cast %52 : vector<8x128xi32> to vector<1x8x128xi32>
    tpu.vector_store %arg7[%c8, %c0_18, %c0_19], %55 {strides = array<i32>} : memref<15x8x128xi32, #tpu.memory_space<vmem>>, vector<1x8x128xi32>,
    %56 = vector.extract_strided_slice %0 {offsets = [0, 9], sizes = [8, 1], strides = [1, 1]} : vector<8x15xi32> to vector<8x1xi32>
    %57 = vector.broadcast %56 : vector<8x1xi32> to vector<8x128xi32>
    %58 = arith.subi %1, %57 : vector<8x128xi32>
    %c9 = arith.constant 9 : index
    %c0_20 = arith.constant 0 : index
    %c0_21 = arith.constant 0 : index
    %59 = vector.load %arg7[%c9, %c0_20, %c0_21] : memref<15x8x128xi32, #tpu.memory_space<vmem>>, vector<1x8x128xi32>
    %60 = vector.shape_cast %59 : vector<1x8x128xi32> to vector<8x128xi32>
    %61 = vector.shape_cast %58 : vector<8x128xi32> to vector<1x8x128xi32>
    tpu.vector_store %arg7[%c9, %c0_20, %c0_21], %61 {strides = array<i32>} : memref<15x8x128xi32, #tpu.memory_space<vmem>>, vector<1x8x128xi32>,
    %62 = vector.extract_strided_slice %0 {offsets = [0, 10], sizes = [8, 1], strides = [1, 1]} : vector<8x15xi32> to vector<8x1xi32>
    %63 = vector.broadcast %62 : vector<8x1xi32> to vector<8x128xi32>
    %64 = arith.subi %1, %63 : vector<8x128xi32>
    %c10 = arith.constant 10 : index
    %c0_22 = arith.constant 0 : index
    %c0_23 = arith.constant 0 : index
    %65 = vector.load %arg7[%c10, %c0_22, %c0_23] : memref<15x8x128xi32, #tpu.memory_space<vmem>>, vector<1x8x128xi32>
    %66 = vector.shape_cast %65 : vector<1x8x128xi32> to vector<8x128xi32>
    %67 = vector.shape_cast %64 : vector<8x128xi32> to vector<1x8x128xi32>
    tpu.vector_store %arg7[%c10, %c0_22, %c0_23], %67 {strides = array<i32>} : memref<15x8x128xi32, #tpu.memory_space<vmem>>, vector<1x8x128xi32>,
    %68 = vector.extract_strided_slice %0 {offsets = [0, 11], sizes = [8, 1], strides = [1, 1]} : vector<8x15xi32> to vector<8x1xi32>
    %69 = vector.broadcast %68 : vector<8x1xi32> to vector<8x128xi32>
    %70 = arith.subi %1, %69 : vector<8x128xi32>
    %c11 = arith.constant 11 : index
    %c0_24 = arith.constant 0 : index
    %c0_25 = arith.constant 0 : index
    %71 = vector.load %arg7[%c11, %c0_24, %c0_25] : memref<15x8x128xi32, #tpu.memory_space<vmem>>, vector<1x8x128xi32>
    %72 = vector.shape_cast %71 : vector<1x8x128xi32> to vector<8x128xi32>
    %73 = vector.shape_cast %70 : vector<8x128xi32> to vector<1x8x128xi32>
    tpu.vector_store %arg7[%c11, %c0_24, %c0_25], %73 {strides = array<i32>} : memref<15x8x128xi32, #tpu.memory_space<vmem>>, vector<1x8x128xi32>,
    %74 = vector.extract_strided_slice %0 {offsets = [0, 12], sizes = [8, 1], strides = [1, 1]} : vector<8x15xi32> to vector<8x1xi32>
    %75 = vector.broadcast %74 : vector<8x1xi32> to vector<8x128xi32>
    %76 = arith.subi %1, %75 : vector<8x128xi32>
    %c12 = arith.constant 12 : index
    %c0_26 = arith.constant 0 : index
    %c0_27 = arith.constant 0 : index
    %77 = vector.load %arg7[%c12, %c0_26, %c0_27] : memref<15x8x128xi32, #tpu.memory_space<vmem>>, vector<1x8x128xi32>
    %78 = vector.shape_cast %77 : vector<1x8x128xi32> to vector<8x128xi32>
    %79 = vector.shape_cast %76 : vector<8x128xi32> to vector<1x8x128xi32>
    tpu.vector_store %arg7[%c12, %c0_26, %c0_27], %79 {strides = array<i32>} : memref<15x8x128xi32, #tpu.memory_space<vmem>>, vector<1x8x128xi32>,
    %80 = vector.extract_strided_slice %0 {offsets = [0, 13], sizes = [8, 1], strides = [1, 1]} : vector<8x15xi32> to vector<8x1xi32>
    %81 = vector.broadcast %80 : vector<8x1xi32> to vector<8x128xi32>
    %82 = arith.subi %1, %81 : vector<8x128xi32>
    %c13 = arith.constant 13 : index
    %c0_28 = arith.constant 0 : index
    %c0_29 = arith.constant 0 : index
    %83 = vector.load %arg7[%c13, %c0_28, %c0_29] : memref<15x8x128xi32, #tpu.memory_space<vmem>>, vector<1x8x128xi32>
    %84 = vector.shape_cast %83 : vector<1x8x128xi32> to vector<8x128xi32>
    %85 = vector.shape_cast %82 : vector<8x128xi32> to vector<1x8x128xi32>
    tpu.vector_store %arg7[%c13, %c0_28, %c0_29], %85 {strides = array<i32>} : memref<15x8x128xi32, #tpu.memory_space<vmem>>, vector<1x8x128xi32>,
    %86 = vector.extract_strided_slice %0 {offsets = [0, 14], sizes = [8, 1], strides = [1, 1]} : vector<8x15xi32> to vector<8x1xi32>
    %87 = vector.broadcast %86 : vector<8x1xi32> to vector<8x128xi32>
    %88 = arith.subi %1, %87 : vector<8x128xi32>
    %c14 = arith.constant 14 : index
    %c0_30 = arith.constant 0 : index
    %c0_31 = arith.constant 0 : index
    %89 = vector.load %arg7[%c14, %c0_30, %c0_31] : memref<15x8x128xi32, #tpu.memory_space<vmem>>, vector<1x8x128xi32>
    %90 = vector.shape_cast %89 : vector<1x8x128xi32> to vector<8x128xi32>
    %91 = vector.shape_cast %88 : vector<8x128xi32> to vector<1x8x128xi32>
    tpu.vector_store %arg7[%c14, %c0_30, %c0_31], %91 {strides = array<i32>} : memref<15x8x128xi32, #tpu.memory_space<vmem>>, vector<1x8x128xi32>,
    %c0_32 = arith.constant 0 : index
    %c0_33 = arith.constant 0 : index
    %c0_34 = arith.constant 0 : index
    %92 = vector.load %arg7[%c0_32, %c0_33, %c0_34] : memref<15x8x128xi32, #tpu.memory_space<vmem>>, vector<1x8x128xi32>
    %93 = vector.shape_cast %92 : vector<1x8x128xi32> to vector<8x128xi32>
    %c1_35 = arith.constant 1 : index
    %c0_36 = arith.constant 0 : index
    %c0_37 = arith.constant 0 : index
    %94 = vector.load %arg7[%c1_35, %c0_36, %c0_37] : memref<15x8x128xi32, #tpu.memory_space<vmem>>, vector<1x8x128xi32>
    %95 = vector.shape_cast %94 : vector<1x8x128xi32> to vector<8x128xi32>
    %c2_38 = arith.constant 2 : index
    %c0_39 = arith.constant 0 : index
    %c0_40 = arith.constant 0 : index
    %96 = vector.load %arg7[%c2_38, %c0_39, %c0_40] : memref<15x8x128xi32, #tpu.memory_space<vmem>>, vector<1x8x128xi32>
    %97 = vector.shape_cast %96 : vector<1x8x128xi32> to vector<8x128xi32>
    %c3_41 = arith.constant 3 : index
    %c0_42 = arith.constant 0 : index
    %c0_43 = arith.constant 0 : index
    %98 = vector.load %arg7[%c3_41, %c0_42, %c0_43] : memref<15x8x128xi32, #tpu.memory_space<vmem>>, vector<1x8x128xi32>
    %99 = vector.shape_cast %98 : vector<1x8x128xi32> to vector<8x128xi32>
    %c4_44 = arith.constant 4 : index
    %c0_45 = arith.constant 0 : index
    %c0_46 = arith.constant 0 : index
    %100 = vector.load %arg7[%c4_44, %c0_45, %c0_46] : memref<15x8x128xi32, #tpu.memory_space<vmem>>, vector<1x8x128xi32>
    %101 = vector.shape_cast %100 : vector<1x8x128xi32> to vector<8x128xi32>
    %c5_47 = arith.constant 5 : index
    %c0_48 = arith.constant 0 : index
    %c0_49 = arith.constant 0 : index
    %102 = vector.load %arg7[%c5_47, %c0_48, %c0_49] : memref<15x8x128xi32, #tpu.memory_space<vmem>>, vector<1x8x128xi32>
    %103 = vector.shape_cast %102 : vector<1x8x128xi32> to vector<8x128xi32>
    %c6_50 = arith.constant 6 : index
    %c0_51 = arith.constant 0 : index
    %c0_52 = arith.constant 0 : index
    %104 = vector.load %arg7[%c6_50, %c0_51, %c0_52] : memref<15x8x128xi32, #tpu.memory_space<vmem>>, vector<1x8x128xi32>
    %105 = vector.shape_cast %104 : vector<1x8x128xi32> to vector<8x128xi32>
    %c0_i32 = arith.constant 0 : i32
    %106 = vector.broadcast %c0_i32 : i32 to vector<8x128xi32>
    %107 = arith.cmpi eq, %93, %106 : vector<8x128xi32>
    %c50_i32 = arith.constant 50 : i32
    %108 = vector.broadcast %c50_i32 : i32 to vector<8x128xi32>
    %109 = arith.cmpi eq, %95, %108 : vector<8x128xi32>
    %110 = arith.ori %107, %109 : vector<8x128xi1>
    %c100_i32 = arith.constant 100 : i32
    %111 = vector.broadcast %c100_i32 : i32 to vector<8x128xi32>
    %112 = arith.cmpi eq, %97, %111 : vector<8x128xi32>
    %113 = arith.ori %110, %112 : vector<8x128xi1>
    %114 = arith.extui %113 : vector<8x128xi1> to vector<8x128xi32>
    %115 = arith.sitofp %114 : vector<8x128xi32> to vector<8x128xf32>
    %c0_53 = arith.constant 0 : index
    %c0_54 = arith.constant 0 : index
    %c0_55 = arith.constant 0 : index
    %116 = vector.load %arg2[%c0_53, %c0_54, %c0_55] : memref<3x128x128xf32, #tpu.memory_space<vmem>>, vector<1x128x128xf32>
    %117 = vector.shape_cast %116 : vector<1x128x128xf32> to vector<128x128xf32>
    %cst = arith.constant dense<0.000000e+00> : vector<8x128xf32>
    %118 = tpu.matmul %115, %117, %cst {dimension_numbers = #tpu.dot_dimension_numbers<[1], [0], [0], [1], [0, 0, 1, 1], [], []>} : vector<8x128xf32>, vector<128x128xf32>, vector<8x128xf32> -> vector<8x128xf32>
    %c-28_i32 = arith.constant -28 : i32
    %119 = vector.broadcast %c-28_i32 : i32 to vector<8x128xi32>
    %120 = arith.cmpi eq, %97, %119 : vector<8x128xi32>
    %c22_i32 = arith.constant 22 : i32
    %121 = vector.broadcast %c22_i32 : i32 to vector<8x128xi32>
    %122 = arith.cmpi eq, %99, %121 : vector<8x128xi32>
    %123 = arith.ori %120, %122 : vector<8x128xi1>
    %c72_i32 = arith.constant 72 : i32
    %124 = vector.broadcast %c72_i32 : i32 to vector<8x128xi32>
    %125 = arith.cmpi eq, %101, %124 : vector<8x128xi32>
    %126 = arith.ori %123, %125 : vector<8x128xi1>
    %c122_i32 = arith.constant 122 : i32
    %127 = vector.broadcast %c122_i32 : i32 to vector<8x128xi32>
    %128 = arith.cmpi eq, %103, %127 : vector<8x128xi32>
    %129 = arith.ori %126, %128 : vector<8x128xi1>
    %130 = arith.extui %129 : vector<8x128xi1> to vector<8x128xi32>
    %131 = arith.sitofp %130 : vector<8x128xi32> to vector<8x128xf32>
    %c1_56 = arith.constant 1 : index
    %c0_57 = arith.constant 0 : index
    %c0_58 = arith.constant 0 : index
    %132 = vector.load %arg2[%c1_56, %c0_57, %c0_58] : memref<3x128x128xf32, #tpu.memory_space<vmem>>, vector<1x128x128xf32>
    %133 = vector.shape_cast %132 : vector<1x128x128xf32> to vector<128x128xf32>
    %cst_59 = arith.constant dense<0.000000e+00> : vector<8x128xf32>
    %134 = tpu.matmul %131, %133, %cst_59 {dimension_numbers = #tpu.dot_dimension_numbers<[1], [0], [0], [1], [0, 0, 1, 1], [], []>} : vector<8x128xf32>, vector<128x128xf32>, vector<8x128xf32> -> vector<8x128xf32>
    %135 = arith.addf %118, %134 : vector<8x128xf32>
    %c-6_i32 = arith.constant -6 : i32
    %136 = vector.broadcast %c-6_i32 : i32 to vector<8x128xi32>
    %137 = arith.cmpi eq, %103, %136 : vector<8x128xi32>
    %c44_i32 = arith.constant 44 : i32
    %138 = vector.broadcast %c44_i32 : i32 to vector<8x128xi32>
    %139 = arith.cmpi eq, %105, %138 : vector<8x128xi32>
    %140 = arith.ori %137, %139 : vector<8x128xi1>
    %141 = arith.extui %140 : vector<8x128xi1> to vector<8x128xi32>
    %142 = arith.sitofp %141 : vector<8x128xi32> to vector<8x128xf32>
    %c2_60 = arith.constant 2 : index
    %c0_61 = arith.constant 0 : index
    %c0_62 = arith.constant 0 : index
    %143 = vector.load %arg2[%c2_60, %c0_61, %c0_62] : memref<3x128x128xf32, #tpu.memory_space<vmem>>, vector<1x128x128xf32>
    %144 = vector.shape_cast %143 : vector<1x128x128xf32> to vector<128x128xf32>
    %cst_63 = arith.constant dense<0.000000e+00> : vector<8x128xf32>
    %145 = tpu.matmul %142, %144, %cst_63 {dimension_numbers = #tpu.dot_dimension_numbers<[1], [0], [0], [1], [0, 0, 1, 1], [], []>} : vector<8x128xf32>, vector<128x128xf32>, vector<8x128xf32> -> vector<8x128xf32>
    %146 = arith.addf %135, %145 : vector<8x128xf32>
    %c1_64 = arith.constant 1 : index
    %c0_65 = arith.constant 0 : index
    %c0_66 = arith.constant 0 : index
    %147 = vector.load %arg7[%c1_64, %c0_65, %c0_66] : memref<15x8x128xi32, #tpu.memory_space<vmem>>, vector<1x8x128xi32>
    %148 = vector.shape_cast %147 : vector<1x8x128xi32> to vector<8x128xi32>
    %c2_67 = arith.constant 2 : index
    %c0_68 = arith.constant 0 : index
    %c0_69 = arith.constant 0 : index
    %149 = vector.load %arg7[%c2_67, %c0_68, %c0_69] : memref<15x8x128xi32, #tpu.memory_space<vmem>>, vector<1x8x128xi32>
    %150 = vector.shape_cast %149 : vector<1x8x128xi32> to vector<8x128xi32>
    %c3_70 = arith.constant 3 : index
    %c0_71 = arith.constant 0 : index
    %c0_72 = arith.constant 0 : index
    %151 = vector.load %arg7[%c3_70, %c0_71, %c0_72] : memref<15x8x128xi32, #tpu.memory_space<vmem>>, vector<1x8x128xi32>
    %152 = vector.shape_cast %151 : vector<1x8x128xi32> to vector<8x128xi32>
    %c4_73 = arith.constant 4 : index
    %c0_74 = arith.constant 0 : index
    %c0_75 = arith.constant 0 : index
    %153 = vector.load %arg7[%c4_73, %c0_74, %c0_75] : memref<15x8x128xi32, #tpu.memory_space<vmem>>, vector<1x8x128xi32>
    %154 = vector.shape_cast %153 : vector<1x8x128xi32> to vector<8x128xi32>
    %c5_76 = arith.constant 5 : index
    %c0_77 = arith.constant 0 : index
    %c0_78 = arith.constant 0 : index
    %155 = vector.load %arg7[%c5_76, %c0_77, %c0_78] : memref<15x8x128xi32, #tpu.memory_space<vmem>>, vector<1x8x128xi32>
    %156 = vector.shape_cast %155 : vector<1x8x128xi32> to vector<8x128xi32>
    %c6_79 = arith.constant 6 : index
    %c0_80 = arith.constant 0 : index
    %c0_81 = arith.constant 0 : index
    %157 = vector.load %arg7[%c6_79, %c0_80, %c0_81] : memref<15x8x128xi32, #tpu.memory_space<vmem>>, vector<1x8x128xi32>
    %158 = vector.shape_cast %157 : vector<1x8x128xi32> to vector<8x128xi32>
    %c7_82 = arith.constant 7 : index
    %c0_83 = arith.constant 0 : index
    %c0_84 = arith.constant 0 : index
    %159 = vector.load %arg7[%c7_82, %c0_83, %c0_84] : memref<15x8x128xi32, #tpu.memory_space<vmem>>, vector<1x8x128xi32>
    %160 = vector.shape_cast %159 : vector<1x8x128xi32> to vector<8x128xi32>
    %c0_i32_85 = arith.constant 0 : i32
    %161 = vector.broadcast %c0_i32_85 : i32 to vector<8x128xi32>
    %162 = arith.cmpi eq, %148, %161 : vector<8x128xi32>
    %c50_i32_86 = arith.constant 50 : i32
    %163 = vector.broadcast %c50_i32_86 : i32 to vector<8x128xi32>
    %164 = arith.cmpi eq, %150, %163 : vector<8x128xi32>
    %165 = arith.ori %162, %164 : vector<8x128xi1>
    %c100_i32_87 = arith.constant 100 : i32
    %166 = vector.broadcast %c100_i32_87 : i32 to vector<8x128xi32>
    %167 = arith.cmpi eq, %152, %166 : vector<8x128xi32>
    %168 = arith.ori %165, %167 : vector<8x128xi1>
    %169 = arith.extui %168 : vector<8x128xi1> to vector<8x128xi32>
    %170 = arith.sitofp %169 : vector<8x128xi32> to vector<8x128xf32>
    %c0_88 = arith.constant 0 : index
    %c0_89 = arith.constant 0 : index
    %c0_90 = arith.constant 0 : index
    %171 = vector.load %arg2[%c0_88, %c0_89, %c0_90] : memref<3x128x128xf32, #tpu.memory_space<vmem>>, vector<1x128x128xf32>
    %172 = vector.shape_cast %171 : vector<1x128x128xf32> to vector<128x128xf32>
    %cst_91 = arith.constant dense<0.000000e+00> : vector<8x128xf32>
    %173 = tpu.matmul %170, %172, %cst_91 {dimension_numbers = #tpu.dot_dimension_numbers<[1], [0], [0], [1], [0, 0, 1, 1], [], []>} : vector<8x128xf32>, vector<128x128xf32>, vector<8x128xf32> -> vector<8x128xf32>
    %c-28_i32_92 = arith.constant -28 : i32
    %174 = vector.broadcast %c-28_i32_92 : i32 to vector<8x128xi32>
    %175 = arith.cmpi eq, %152, %174 : vector<8x128xi32>
    %c22_i32_93 = arith.constant 22 : i32
    %176 = vector.broadcast %c22_i32_93 : i32 to vector<8x128xi32>
    %177 = arith.cmpi eq, %154, %176 : vector<8x128xi32>
    %178 = arith.ori %175, %177 : vector<8x128xi1>
    %c72_i32_94 = arith.constant 72 : i32
    %179 = vector.broadcast %c72_i32_94 : i32 to vector<8x128xi32>
    %180 = arith.cmpi eq, %156, %179 : vector<8x128xi32>
    %181 = arith.ori %178, %180 : vector<8x128xi1>
    %c122_i32_95 = arith.constant 122 : i32
    %182 = vector.broadcast %c122_i32_95 : i32 to vector<8x128xi32>
    %183 = arith.cmpi eq, %158, %182 : vector<8x128xi32>
    %184 = arith.ori %181, %183 : vector<8x128xi1>
    %185 = arith.extui %184 : vector<8x128xi1> to vector<8x128xi32>
    %186 = arith.sitofp %185 : vector<8x128xi32> to vector<8x128xf32>
    %c1_96 = arith.constant 1 : index
    %c0_97 = arith.constant 0 : index
    %c0_98 = arith.constant 0 : index
    %187 = vector.load %arg2[%c1_96, %c0_97, %c0_98] : memref<3x128x128xf32, #tpu.memory_space<vmem>>, vector<1x128x128xf32>
    %188 = vector.shape_cast %187 : vector<1x128x128xf32> to vector<128x128xf32>
    %cst_99 = arith.constant dense<0.000000e+00> : vector<8x128xf32>
    %189 = tpu.matmul %186, %188, %cst_99 {dimension_numbers = #tpu.dot_dimension_numbers<[1], [0], [0], [1], [0, 0, 1, 1], [], []>} : vector<8x128xf32>, vector<128x128xf32>, vector<8x128xf32> -> vector<8x128xf32>
    %190 = arith.addf %173, %189 : vector<8x128xf32>
    %c-6_i32_100 = arith.constant -6 : i32
    %191 = vector.broadcast %c-6_i32_100 : i32 to vector<8x128xi32>
    %192 = arith.cmpi eq, %158, %191 : vector<8x128xi32>
    %c44_i32_101 = arith.constant 44 : i32
    %193 = vector.broadcast %c44_i32_101 : i32 to vector<8x128xi32>
    %194 = arith.cmpi eq, %160, %193 : vector<8x128xi32>
    %195 = arith.ori %192, %194 : vector<8x128xi1>
    %196 = arith.extui %195 : vector<8x128xi1> to vector<8x128xi32>
    %197 = arith.sitofp %196 : vector<8x128xi32> to vector<8x128xf32>
    %c2_102 = arith.constant 2 : index
    %c0_103 = arith.constant 0 : index
    %c0_104 = arith.constant 0 : index
    %198 = vector.load %arg2[%c2_102, %c0_103, %c0_104] : memref<3x128x128xf32, #tpu.memory_space<vmem>>, vector<1x128x128xf32>
    %199 = vector.shape_cast %198 : vector<1x128x128xf32> to vector<128x128xf32>
    %cst_105 = arith.constant dense<0.000000e+00> : vector<8x128xf32>
    %200 = tpu.matmul %197, %199, %cst_105 {dimension_numbers = #tpu.dot_dimension_numbers<[1], [0], [0], [1], [0, 0, 1, 1], [], []>} : vector<8x128xf32>, vector<128x128xf32>, vector<8x128xf32> -> vector<8x128xf32>
    %201 = arith.addf %190, %200 : vector<8x128xf32>
    %202 = arith.maximumf %146, %201 : vector<8x128xf32>
    %c2_106 = arith.constant 2 : index
    %c0_107 = arith.constant 0 : index
    %c0_108 = arith.constant 0 : index
    %203 = vector.load %arg7[%c2_106, %c0_107, %c0_108] : memref<15x8x128xi32, #tpu.memory_space<vmem>>, vector<1x8x128xi32>
    %204 = vector.shape_cast %203 : vector<1x8x128xi32> to vector<8x128xi32>
    %c3_109 = arith.constant 3 : index
    %c0_110 = arith.constant 0 : index
    %c0_111 = arith.constant 0 : index
    %205 = vector.load %arg7[%c3_109, %c0_110, %c0_111] : memref<15x8x128xi32, #tpu.memory_space<vmem>>, vector<1x8x128xi32>
    %206 = vector.shape_cast %205 : vector<1x8x128xi32> to vector<8x128xi32>
    %c4_112 = arith.constant 4 : index
    %c0_113 = arith.constant 0 : index
    %c0_114 = arith.constant 0 : index
    %207 = vector.load %arg7[%c4_112, %c0_113, %c0_114] : memref<15x8x128xi32, #tpu.memory_space<vmem>>, vector<1x8x128xi32>
    %208 = vector.shape_cast %207 : vector<1x8x128xi32> to vector<8x128xi32>
    %c5_115 = arith.constant 5 : index
    %c0_116 = arith.constant 0 : index
    %c0_117 = arith.constant 0 : index
    %209 = vector.load %arg7[%c5_115, %c0_116, %c0_117] : memref<15x8x128xi32, #tpu.memory_space<vmem>>, vector<1x8x128xi32>
    %210 = vector.shape_cast %209 : vector<1x8x128xi32> to vector<8x128xi32>
    %c6_118 = arith.constant 6 : index
    %c0_119 = arith.constant 0 : index
    %c0_120 = arith.constant 0 : index
    %211 = vector.load %arg7[%c6_118, %c0_119, %c0_120] : memref<15x8x128xi32, #tpu.memory_space<vmem>>, vector<1x8x128xi32>
    %212 = vector.shape_cast %211 : vector<1x8x128xi32> to vector<8x128xi32>
    %c7_121 = arith.constant 7 : index
    %c0_122 = arith.constant 0 : index
    %c0_123 = arith.constant 0 : index
    %213 = vector.load %arg7[%c7_121, %c0_122, %c0_123] : memref<15x8x128xi32, #tpu.memory_space<vmem>>, vector<1x8x128xi32>
    %214 = vector.shape_cast %213 : vector<1x8x128xi32> to vector<8x128xi32>
    %c8_124 = arith.constant 8 : index
    %c0_125 = arith.constant 0 : index
    %c0_126 = arith.constant 0 : index
    %215 = vector.load %arg7[%c8_124, %c0_125, %c0_126] : memref<15x8x128xi32, #tpu.memory_space<vmem>>, vector<1x8x128xi32>
    %216 = vector.shape_cast %215 : vector<1x8x128xi32> to vector<8x128xi32>
    %c0_i32_127 = arith.constant 0 : i32
    %217 = vector.broadcast %c0_i32_127 : i32 to vector<8x128xi32>
    %218 = arith.cmpi eq, %204, %217 : vector<8x128xi32>
    %c50_i32_128 = arith.constant 50 : i32
    %219 = vector.broadcast %c50_i32_128 : i32 to vector<8x128xi32>
    %220 = arith.cmpi eq, %206, %219 : vector<8x128xi32>
    %221 = arith.ori %218, %220 : vector<8x128xi1>
    %c100_i32_129 = arith.constant 100 : i32
    %222 = vector.broadcast %c100_i32_129 : i32 to vector<8x128xi32>
    %223 = arith.cmpi eq, %208, %222 : vector<8x128xi32>
    %224 = arith.ori %221, %223 : vector<8x128xi1>
    %225 = arith.extui %224 : vector<8x128xi1> to vector<8x128xi32>
    %226 = arith.sitofp %225 : vector<8x128xi32> to vector<8x128xf32>
    %c0_130 = arith.constant 0 : index
    %c0_131 = arith.constant 0 : index
    %c0_132 = arith.constant 0 : index
    %227 = vector.load %arg2[%c0_130, %c0_131, %c0_132] : memref<3x128x128xf32, #tpu.memory_space<vmem>>, vector<1x128x128xf32>
    %228 = vector.shape_cast %227 : vector<1x128x128xf32> to vector<128x128xf32>
    %cst_133 = arith.constant dense<0.000000e+00> : vector<8x128xf32>
    %229 = tpu.matmul %226, %228, %cst_133 {dimension_numbers = #tpu.dot_dimension_numbers<[1], [0], [0], [1], [0, 0, 1, 1], [], []>} : vector<8x128xf32>, vector<128x128xf32>, vector<8x128xf32> -> vector<8x128xf32>
    %c-28_i32_134 = arith.constant -28 : i32
    %230 = vector.broadcast %c-28_i32_134 : i32 to vector<8x128xi32>
    %231 = arith.cmpi eq, %208, %230 : vector<8x128xi32>
    %c22_i32_135 = arith.constant 22 : i32
    %232 = vector.broadcast %c22_i32_135 : i32 to vector<8x128xi32>
    %233 = arith.cmpi eq, %210, %232 : vector<8x128xi32>
    %234 = arith.ori %231, %233 : vector<8x128xi1>
    %c72_i32_136 = arith.constant 72 : i32
    %235 = vector.broadcast %c72_i32_136 : i32 to vector<8x128xi32>
    %236 = arith.cmpi eq, %212, %235 : vector<8x128xi32>
    %237 = arith.ori %234, %236 : vector<8x128xi1>
    %c122_i32_137 = arith.constant 122 : i32
    %238 = vector.broadcast %c122_i32_137 : i32 to vector<8x128xi32>
    %239 = arith.cmpi eq, %214, %238 : vector<8x128xi32>
    %240 = arith.ori %237, %239 : vector<8x128xi1>
    %241 = arith.extui %240 : vector<8x128xi1> to vector<8x128xi32>
    %242 = arith.sitofp %241 : vector<8x128xi32> to vector<8x128xf32>
    %c1_138 = arith.constant 1 : index
    %c0_139 = arith.constant 0 : index
    %c0_140 = arith.constant 0 : index
    %243 = vector.load %arg2[%c1_138, %c0_139, %c0_140] : memref<3x128x128xf32, #tpu.memory_space<vmem>>, vector<1x128x128xf32>
    %244 = vector.shape_cast %243 : vector<1x128x128xf32> to vector<128x128xf32>
    %cst_141 = arith.constant dense<0.000000e+00> : vector<8x128xf32>
    %245 = tpu.matmul %242, %244, %cst_141 {dimension_numbers = #tpu.dot_dimension_numbers<[1], [0], [0], [1], [0, 0, 1, 1], [], []>} : vector<8x128xf32>, vector<128x128xf32>, vector<8x128xf32> -> vector<8x128xf32>
    %246 = arith.addf %229, %245 : vector<8x128xf32>
    %c-6_i32_142 = arith.constant -6 : i32
    %247 = vector.broadcast %c-6_i32_142 : i32 to vector<8x128xi32>
    %248 = arith.cmpi eq, %214, %247 : vector<8x128xi32>
    %c44_i32_143 = arith.constant 44 : i32
    %249 = vector.broadcast %c44_i32_143 : i32 to vector<8x128xi32>
    %250 = arith.cmpi eq, %216, %249 : vector<8x128xi32>
    %251 = arith.ori %248, %250 : vector<8x128xi1>
    %252 = arith.extui %251 : vector<8x128xi1> to vector<8x128xi32>
    %253 = arith.sitofp %252 : vector<8x128xi32> to vector<8x128xf32>
    %c2_144 = arith.constant 2 : index
    %c0_145 = arith.constant 0 : index
    %c0_146 = arith.constant 0 : index
    %254 = vector.load %arg2[%c2_144, %c0_145, %c0_146] : memref<3x128x128xf32, #tpu.memory_space<vmem>>, vector<1x128x128xf32>
    %255 = vector.shape_cast %254 : vector<1x128x128xf32> to vector<128x128xf32>
    %cst_147 = arith.constant dense<0.000000e+00> : vector<8x128xf32>
    %256 = tpu.matmul %253, %255, %cst_147 {dimension_numbers = #tpu.dot_dimension_numbers<[1], [0], [0], [1], [0, 0, 1, 1], [], []>} : vector<8x128xf32>, vector<128x128xf32>, vector<8x128xf32> -> vector<8x128xf32>
    %257 = arith.addf %246, %256 : vector<8x128xf32>
    %258 = arith.maximumf %202, %257 : vector<8x128xf32>
    %c3_148 = arith.constant 3 : index
    %c0_149 = arith.constant 0 : index
    %c0_150 = arith.constant 0 : index
    %259 = vector.load %arg7[%c3_148, %c0_149, %c0_150] : memref<15x8x128xi32, #tpu.memory_space<vmem>>, vector<1x8x128xi32>
    %260 = vector.shape_cast %259 : vector<1x8x128xi32> to vector<8x128xi32>
    %c4_151 = arith.constant 4 : index
    %c0_152 = arith.constant 0 : index
    %c0_153 = arith.constant 0 : index
    %261 = vector.load %arg7[%c4_151, %c0_152, %c0_153] : memref<15x8x128xi32, #tpu.memory_space<vmem>>, vector<1x8x128xi32>
    %262 = vector.shape_cast %261 : vector<1x8x128xi32> to vector<8x128xi32>
    %c5_154 = arith.constant 5 : index
    %c0_155 = arith.constant 0 : index
    %c0_156 = arith.constant 0 : index
    %263 = vector.load %arg7[%c5_154, %c0_155, %c0_156] : memref<15x8x128xi32, #tpu.memory_space<vmem>>, vector<1x8x128xi32>
    %264 = vector.shape_cast %263 : vector<1x8x128xi32> to vector<8x128xi32>
    %c6_157 = arith.constant 6 : index
    %c0_158 = arith.constant 0 : index
    %c0_159 = arith.constant 0 : index
    %265 = vector.load %arg7[%c6_157, %c0_158, %c0_159] : memref<15x8x128xi32, #tpu.memory_space<vmem>>, vector<1x8x128xi32>
    %266 = vector.shape_cast %265 : vector<1x8x128xi32> to vector<8x128xi32>
    %c7_160 = arith.constant 7 : index
    %c0_161 = arith.constant 0 : index
    %c0_162 = arith.constant 0 : index
    %267 = vector.load %arg7[%c7_160, %c0_161, %c0_162] : memref<15x8x128xi32, #tpu.memory_space<vmem>>, vector<1x8x128xi32>
    %268 = vector.shape_cast %267 : vector<1x8x128xi32> to vector<8x128xi32>
    %c8_163 = arith.constant 8 : index
    %c0_164 = arith.constant 0 : index
    %c0_165 = arith.constant 0 : index
    %269 = vector.load %arg7[%c8_163, %c0_164, %c0_165] : memref<15x8x128xi32, #tpu.memory_space<vmem>>, vector<1x8x128xi32>
    %270 = vector.shape_cast %269 : vector<1x8x128xi32> to vector<8x128xi32>
    %c9_166 = arith.constant 9 : index
    %c0_167 = arith.constant 0 : index
    %c0_168 = arith.constant 0 : index
    %271 = vector.load %arg7[%c9_166, %c0_167, %c0_168] : memref<15x8x128xi32, #tpu.memory_space<vmem>>, vector<1x8x128xi32>
    %272 = vector.shape_cast %271 : vector<1x8x128xi32> to vector<8x128xi32>
    %c0_i32_169 = arith.constant 0 : i32
    %273 = vector.broadcast %c0_i32_169 : i32 to vector<8x128xi32>
    %274 = arith.cmpi eq, %260, %273 : vector<8x128xi32>
    %c50_i32_170 = arith.constant 50 : i32
    %275 = vector.broadcast %c50_i32_170 : i32 to vector<8x128xi32>
    %276 = arith.cmpi eq, %262, %275 : vector<8x128xi32>
    %277 = arith.ori %274, %276 : vector<8x128xi1>
    %c100_i32_171 = arith.constant 100 : i32
    %278 = vector.broadcast %c100_i32_171 : i32 to vector<8x128xi32>
    %279 = arith.cmpi eq, %264, %278 : vector<8x128xi32>
    %280 = arith.ori %277, %279 : vector<8x128xi1>
    %281 = arith.extui %280 : vector<8x128xi1> to vector<8x128xi32>
    %282 = arith.sitofp %281 : vector<8x128xi32> to vector<8x128xf32>
    %c0_172 = arith.constant 0 : index
    %c0_173 = arith.constant 0 : index
    %c0_174 = arith.constant 0 : index
    %283 = vector.load %arg2[%c0_172, %c0_173, %c0_174] : memref<3x128x128xf32, #tpu.memory_space<vmem>>, vector<1x128x128xf32>
    %284 = vector.shape_cast %283 : vector<1x128x128xf32> to vector<128x128xf32>
    %cst_175 = arith.constant dense<0.000000e+00> : vector<8x128xf32>
    %285 = tpu.matmul %282, %284, %cst_175 {dimension_numbers = #tpu.dot_dimension_numbers<[1], [0], [0], [1], [0, 0, 1, 1], [], []>} : vector<8x128xf32>, vector<128x128xf32>, vector<8x128xf32> -> vector<8x128xf32>
    %c-28_i32_176 = arith.constant -28 : i32
    %286 = vector.broadcast %c-28_i32_176 : i32 to vector<8x128xi32>
    %287 = arith.cmpi eq, %264, %286 : vector<8x128xi32>
    %c22_i32_177 = arith.constant 22 : i32
    %288 = vector.broadcast %c22_i32_177 : i32 to vector<8x128xi32>
    %289 = arith.cmpi eq, %266, %288 : vector<8x128xi32>
    %290 = arith.ori %287, %289 : vector<8x128xi1>
    %c72_i32_178 = arith.constant 72 : i32
    %291 = vector.broadcast %c72_i32_178 : i32 to vector<8x128xi32>
    %292 = arith.cmpi eq, %268, %291 : vector<8x128xi32>
    %293 = arith.ori %290, %292 : vector<8x128xi1>
    %c122_i32_179 = arith.constant 122 : i32
    %294 = vector.broadcast %c122_i32_179 : i32 to vector<8x128xi32>
    %295 = arith.cmpi eq, %270, %294 : vector<8x128xi32>
    %296 = arith.ori %293, %295 : vector<8x128xi1>
    %297 = arith.extui %296 : vector<8x128xi1> to vector<8x128xi32>
    %298 = arith.sitofp %297 : vector<8x128xi32> to vector<8x128xf32>
    %c1_180 = arith.constant 1 : index
    %c0_181 = arith.constant 0 : index
    %c0_182 = arith.constant 0 : index
    %299 = vector.load %arg2[%c1_180, %c0_181, %c0_182] : memref<3x128x128xf32, #tpu.memory_space<vmem>>, vector<1x128x128xf32>
    %300 = vector.shape_cast %299 : vector<1x128x128xf32> to vector<128x128xf32>
    %cst_183 = arith.constant dense<0.000000e+00> : vector<8x128xf32>
    %301 = tpu.matmul %298, %300, %cst_183 {dimension_numbers = #tpu.dot_dimension_numbers<[1], [0], [0], [1], [0, 0, 1, 1], [], []>} : vector<8x128xf32>, vector<128x128xf32>, vector<8x128xf32> -> vector<8x128xf32>
    %302 = arith.addf %285, %301 : vector<8x128xf32>
    %c-6_i32_184 = arith.constant -6 : i32
    %303 = vector.broadcast %c-6_i32_184 : i32 to vector<8x128xi32>
    %304 = arith.cmpi eq, %270, %303 : vector<8x128xi32>
    %c44_i32_185 = arith.constant 44 : i32
    %305 = vector.broadcast %c44_i32_185 : i32 to vector<8x128xi32>
    %306 = arith.cmpi eq, %272, %305 : vector<8x128xi32>
    %307 = arith.ori %304, %306 : vector<8x128xi1>
    %308 = arith.extui %307 : vector<8x128xi1> to vector<8x128xi32>
    %309 = arith.sitofp %308 : vector<8x128xi32> to vector<8x128xf32>
    %c2_186 = arith.constant 2 : index
    %c0_187 = arith.constant 0 : index
    %c0_188 = arith.constant 0 : index
    %310 = vector.load %arg2[%c2_186, %c0_187, %c0_188] : memref<3x128x128xf32, #tpu.memory_space<vmem>>, vector<1x128x128xf32>
    %311 = vector.shape_cast %310 : vector<1x128x128xf32> to vector<128x128xf32>
    %cst_189 = arith.constant dense<0.000000e+00> : vector<8x128xf32>
    %312 = tpu.matmul %309, %311, %cst_189 {dimension_numbers = #tpu.dot_dimension_numbers<[1], [0], [0], [1], [0, 0, 1, 1], [], []>} : vector<8x128xf32>, vector<128x128xf32>, vector<8x128xf32> -> vector<8x128xf32>
    %313 = arith.addf %302, %312 : vector<8x128xf32>
    %314 = arith.maximumf %258, %313 : vector<8x128xf32>
    %c4_190 = arith.constant 4 : index
    %c0_191 = arith.constant 0 : index
    %c0_192 = arith.constant 0 : index
    %315 = vector.load %arg7[%c4_190, %c0_191, %c0_192] : memref<15x8x128xi32, #tpu.memory_space<vmem>>, vector<1x8x128xi32>
    %316 = vector.shape_cast %315 : vector<1x8x128xi32> to vector<8x128xi32>
    %c5_193 = arith.constant 5 : index
    %c0_194 = arith.constant 0 : index
    %c0_195 = arith.constant 0 : index
    %317 = vector.load %arg7[%c5_193, %c0_194, %c0_195] : memref<15x8x128xi32, #tpu.memory_space<vmem>>, vector<1x8x128xi32>
    %318 = vector.shape_cast %317 : vector<1x8x128xi32> to vector<8x128xi32>
    %c6_196 = arith.constant 6 : index
    %c0_197 = arith.constant 0 : index
    %c0_198 = arith.constant 0 : index
    %319 = vector.load %arg7[%c6_196, %c0_197, %c0_198] : memref<15x8x128xi32, #tpu.memory_space<vmem>>, vector<1x8x128xi32>
    %320 = vector.shape_cast %319 : vector<1x8x128xi32> to vector<8x128xi32>
    %c7_199 = arith.constant 7 : index
    %c0_200 = arith.constant 0 : index
    %c0_201 = arith.constant 0 : index
    %321 = vector.load %arg7[%c7_199, %c0_200, %c0_201] : memref<15x8x128xi32, #tpu.memory_space<vmem>>, vector<1x8x128xi32>
    %322 = vector.shape_cast %321 : vector<1x8x128xi32> to vector<8x128xi32>
    %c8_202 = arith.constant 8 : index
    %c0_203 = arith.constant 0 : index
    %c0_204 = arith.constant 0 : index
    %323 = vector.load %arg7[%c8_202, %c0_203, %c0_204] : memref<15x8x128xi32, #tpu.memory_space<vmem>>, vector<1x8x128xi32>
    %324 = vector.shape_cast %323 : vector<1x8x128xi32> to vector<8x128xi32>
    %c9_205 = arith.constant 9 : index
    %c0_206 = arith.constant 0 : index
    %c0_207 = arith.constant 0 : index
    %325 = vector.load %arg7[%c9_205, %c0_206, %c0_207] : memref<15x8x128xi32, #tpu.memory_space<vmem>>, vector<1x8x128xi32>
    %326 = vector.shape_cast %325 : vector<1x8x128xi32> to vector<8x128xi32>
    %c10_208 = arith.constant 10 : index
    %c0_209 = arith.constant 0 : index
    %c0_210 = arith.constant 0 : index
    %327 = vector.load %arg7[%c10_208, %c0_209, %c0_210] : memref<15x8x128xi32, #tpu.memory_space<vmem>>, vector<1x8x128xi32>
    %328 = vector.shape_cast %327 : vector<1x8x128xi32> to vector<8x128xi32>
    %c0_i32_211 = arith.constant 0 : i32
    %329 = vector.broadcast %c0_i32_211 : i32 to vector<8x128xi32>
    %330 = arith.cmpi eq, %316, %329 : vector<8x128xi32>
    %c50_i32_212 = arith.constant 50 : i32
    %331 = vector.broadcast %c50_i32_212 : i32 to vector<8x128xi32>
    %332 = arith.cmpi eq, %318, %331 : vector<8x128xi32>
    %333 = arith.ori %330, %332 : vector<8x128xi1>
    %c100_i32_213 = arith.constant 100 : i32
    %334 = vector.broadcast %c100_i32_213 : i32 to vector<8x128xi32>
    %335 = arith.cmpi eq, %320, %334 : vector<8x128xi32>
    %336 = arith.ori %333, %335 : vector<8x128xi1>
    %337 = arith.extui %336 : vector<8x128xi1> to vector<8x128xi32>
    %338 = arith.sitofp %337 : vector<8x128xi32> to vector<8x128xf32>
    %c0_214 = arith.constant 0 : index
    %c0_215 = arith.constant 0 : index
    %c0_216 = arith.constant 0 : index
    %339 = vector.load %arg2[%c0_214, %c0_215, %c0_216] : memref<3x128x128xf32, #tpu.memory_space<vmem>>, vector<1x128x128xf32>
    %340 = vector.shape_cast %339 : vector<1x128x128xf32> to vector<128x128xf32>
    %cst_217 = arith.constant dense<0.000000e+00> : vector<8x128xf32>
    %341 = tpu.matmul %338, %340, %cst_217 {dimension_numbers = #tpu.dot_dimension_numbers<[1], [0], [0], [1], [0, 0, 1, 1], [], []>} : vector<8x128xf32>, vector<128x128xf32>, vector<8x128xf32> -> vector<8x128xf32>
    %c-28_i32_218 = arith.constant -28 : i32
    %342 = vector.broadcast %c-28_i32_218 : i32 to vector<8x128xi32>
    %343 = arith.cmpi eq, %320, %342 : vector<8x128xi32>
    %c22_i32_219 = arith.constant 22 : i32
    %344 = vector.broadcast %c22_i32_219 : i32 to vector<8x128xi32>
    %345 = arith.cmpi eq, %322, %344 : vector<8x128xi32>
    %346 = arith.ori %343, %345 : vector<8x128xi1>
    %c72_i32_220 = arith.constant 72 : i32
    %347 = vector.broadcast %c72_i32_220 : i32 to vector<8x128xi32>
    %348 = arith.cmpi eq, %324, %347 : vector<8x128xi32>
    %349 = arith.ori %346, %348 : vector<8x128xi1>
    %c122_i32_221 = arith.constant 122 : i32
    %350 = vector.broadcast %c122_i32_221 : i32 to vector<8x128xi32>
    %351 = arith.cmpi eq, %326, %350 : vector<8x128xi32>
    %352 = arith.ori %349, %351 : vector<8x128xi1>
    %353 = arith.extui %352 : vector<8x128xi1> to vector<8x128xi32>
    %354 = arith.sitofp %353 : vector<8x128xi32> to vector<8x128xf32>
    %c1_222 = arith.constant 1 : index
    %c0_223 = arith.constant 0 : index
    %c0_224 = arith.constant 0 : index
    %355 = vector.load %arg2[%c1_222, %c0_223, %c0_224] : memref<3x128x128xf32, #tpu.memory_space<vmem>>, vector<1x128x128xf32>
    %356 = vector.shape_cast %355 : vector<1x128x128xf32> to vector<128x128xf32>
    %cst_225 = arith.constant dense<0.000000e+00> : vector<8x128xf32>
    %357 = tpu.matmul %354, %356, %cst_225 {dimension_numbers = #tpu.dot_dimension_numbers<[1], [0], [0], [1], [0, 0, 1, 1], [], []>} : vector<8x128xf32>, vector<128x128xf32>, vector<8x128xf32> -> vector<8x128xf32>
    %358 = arith.addf %341, %357 : vector<8x128xf32>
    %c-6_i32_226 = arith.constant -6 : i32
    %359 = vector.broadcast %c-6_i32_226 : i32 to vector<8x128xi32>
    %360 = arith.cmpi eq, %326, %359 : vector<8x128xi32>
    %c44_i32_227 = arith.constant 44 : i32
    %361 = vector.broadcast %c44_i32_227 : i32 to vector<8x128xi32>
    %362 = arith.cmpi eq, %328, %361 : vector<8x128xi32>
    %363 = arith.ori %360, %362 : vector<8x128xi1>
    %364 = arith.extui %363 : vector<8x128xi1> to vector<8x128xi32>
    %365 = arith.sitofp %364 : vector<8x128xi32> to vector<8x128xf32>
    %c2_228 = arith.constant 2 : index
    %c0_229 = arith.constant 0 : index
    %c0_230 = arith.constant 0 : index
    %366 = vector.load %arg2[%c2_228, %c0_229, %c0_230] : memref<3x128x128xf32, #tpu.memory_space<vmem>>, vector<1x128x128xf32>
    %367 = vector.shape_cast %366 : vector<1x128x128xf32> to vector<128x128xf32>
    %cst_231 = arith.constant dense<0.000000e+00> : vector<8x128xf32>
    %368 = tpu.matmul %365, %367, %cst_231 {dimension_numbers = #tpu.dot_dimension_numbers<[1], [0], [0], [1], [0, 0, 1, 1], [], []>} : vector<8x128xf32>, vector<128x128xf32>, vector<8x128xf32> -> vector<8x128xf32>
    %369 = arith.addf %358, %368 : vector<8x128xf32>
    %370 = arith.maximumf %314, %369 : vector<8x128xf32>
    %c5_232 = arith.constant 5 : index
    %c0_233 = arith.constant 0 : index
    %c0_234 = arith.constant 0 : index
    %371 = vector.load %arg7[%c5_232, %c0_233, %c0_234] : memref<15x8x128xi32, #tpu.memory_space<vmem>>, vector<1x8x128xi32>
    %372 = vector.shape_cast %371 : vector<1x8x128xi32> to vector<8x128xi32>
    %c6_235 = arith.constant 6 : index
    %c0_236 = arith.constant 0 : index
    %c0_237 = arith.constant 0 : index
    %373 = vector.load %arg7[%c6_235, %c0_236, %c0_237] : memref<15x8x128xi32, #tpu.memory_space<vmem>>, vector<1x8x128xi32>
    %374 = vector.shape_cast %373 : vector<1x8x128xi32> to vector<8x128xi32>
    %c7_238 = arith.constant 7 : index
    %c0_239 = arith.constant 0 : index
    %c0_240 = arith.constant 0 : index
    %375 = vector.load %arg7[%c7_238, %c0_239, %c0_240] : memref<15x8x128xi32, #tpu.memory_space<vmem>>, vector<1x8x128xi32>
    %376 = vector.shape_cast %375 : vector<1x8x128xi32> to vector<8x128xi32>
    %c8_241 = arith.constant 8 : index
    %c0_242 = arith.constant 0 : index
    %c0_243 = arith.constant 0 : index
    %377 = vector.load %arg7[%c8_241, %c0_242, %c0_243] : memref<15x8x128xi32, #tpu.memory_space<vmem>>, vector<1x8x128xi32>
    %378 = vector.shape_cast %377 : vector<1x8x128xi32> to vector<8x128xi32>
    %c9_244 = arith.constant 9 : index
    %c0_245 = arith.constant 0 : index
    %c0_246 = arith.constant 0 : index
    %379 = vector.load %arg7[%c9_244, %c0_245, %c0_246] : memref<15x8x128xi32, #tpu.memory_space<vmem>>, vector<1x8x128xi32>
    %380 = vector.shape_cast %379 : vector<1x8x128xi32> to vector<8x128xi32>
    %c10_247 = arith.constant 10 : index
    %c0_248 = arith.constant 0 : index
    %c0_249 = arith.constant 0 : index
    %381 = vector.load %arg7[%c10_247, %c0_248, %c0_249] : memref<15x8x128xi32, #tpu.memory_space<vmem>>, vector<1x8x128xi32>
    %382 = vector.shape_cast %381 : vector<1x8x128xi32> to vector<8x128xi32>
    %c11_250 = arith.constant 11 : index
    %c0_251 = arith.constant 0 : index
    %c0_252 = arith.constant 0 : index
    %383 = vector.load %arg7[%c11_250, %c0_251, %c0_252] : memref<15x8x128xi32, #tpu.memory_space<vmem>>, vector<1x8x128xi32>
    %384 = vector.shape_cast %383 : vector<1x8x128xi32> to vector<8x128xi32>
    %c0_i32_253 = arith.constant 0 : i32
    %385 = vector.broadcast %c0_i32_253 : i32 to vector<8x128xi32>
    %386 = arith.cmpi eq, %372, %385 : vector<8x128xi32>
    %c50_i32_254 = arith.constant 50 : i32
    %387 = vector.broadcast %c50_i32_254 : i32 to vector<8x128xi32>
    %388 = arith.cmpi eq, %374, %387 : vector<8x128xi32>
    %389 = arith.ori %386, %388 : vector<8x128xi1>
    %c100_i32_255 = arith.constant 100 : i32
    %390 = vector.broadcast %c100_i32_255 : i32 to vector<8x128xi32>
    %391 = arith.cmpi eq, %376, %390 : vector<8x128xi32>
    %392 = arith.ori %389, %391 : vector<8x128xi1>
    %393 = arith.extui %392 : vector<8x128xi1> to vector<8x128xi32>
    %394 = arith.sitofp %393 : vector<8x128xi32> to vector<8x128xf32>
    %c0_256 = arith.constant 0 : index
    %c0_257 = arith.constant 0 : index
    %c0_258 = arith.constant 0 : index
    %395 = vector.load %arg2[%c0_256, %c0_257, %c0_258] : memref<3x128x128xf32, #tpu.memory_space<vmem>>, vector<1x128x128xf32>
    %396 = vector.shape_cast %395 : vector<1x128x128xf32> to vector<128x128xf32>
    %cst_259 = arith.constant dense<0.000000e+00> : vector<8x128xf32>
    %397 = tpu.matmul %394, %396, %cst_259 {dimension_numbers = #tpu.dot_dimension_numbers<[1], [0], [0], [1], [0, 0, 1, 1], [], []>} : vector<8x128xf32>, vector<128x128xf32>, vector<8x128xf32> -> vector<8x128xf32>
    %c-28_i32_260 = arith.constant -28 : i32
    %398 = vector.broadcast %c-28_i32_260 : i32 to vector<8x128xi32>
    %399 = arith.cmpi eq, %376, %398 : vector<8x128xi32>
    %c22_i32_261 = arith.constant 22 : i32
    %400 = vector.broadcast %c22_i32_261 : i32 to vector<8x128xi32>
    %401 = arith.cmpi eq, %378, %400 : vector<8x128xi32>
    %402 = arith.ori %399, %401 : vector<8x128xi1>
    %c72_i32_262 = arith.constant 72 : i32
    %403 = vector.broadcast %c72_i32_262 : i32 to vector<8x128xi32>
    %404 = arith.cmpi eq, %380, %403 : vector<8x128xi32>
    %405 = arith.ori %402, %404 : vector<8x128xi1>
    %c122_i32_263 = arith.constant 122 : i32
    %406 = vector.broadcast %c122_i32_263 : i32 to vector<8x128xi32>
    %407 = arith.cmpi eq, %382, %406 : vector<8x128xi32>
    %408 = arith.ori %405, %407 : vector<8x128xi1>
    %409 = arith.extui %408 : vector<8x128xi1> to vector<8x128xi32>
    %410 = arith.sitofp %409 : vector<8x128xi32> to vector<8x128xf32>
    %c1_264 = arith.constant 1 : index
    %c0_265 = arith.constant 0 : index
    %c0_266 = arith.constant 0 : index
    %411 = vector.load %arg2[%c1_264, %c0_265, %c0_266] : memref<3x128x128xf32, #tpu.memory_space<vmem>>, vector<1x128x128xf32>
    %412 = vector.shape_cast %411 : vector<1x128x128xf32> to vector<128x128xf32>
    %cst_267 = arith.constant dense<0.000000e+00> : vector<8x128xf32>
    %413 = tpu.matmul %410, %412, %cst_267 {dimension_numbers = #tpu.dot_dimension_numbers<[1], [0], [0], [1], [0, 0, 1, 1], [], []>} : vector<8x128xf32>, vector<128x128xf32>, vector<8x128xf32> -> vector<8x128xf32>
    %414 = arith.addf %397, %413 : vector<8x128xf32>
    %c-6_i32_268 = arith.constant -6 : i32
    %415 = vector.broadcast %c-6_i32_268 : i32 to vector<8x128xi32>
    %416 = arith.cmpi eq, %382, %415 : vector<8x128xi32>
    %c44_i32_269 = arith.constant 44 : i32
    %417 = vector.broadcast %c44_i32_269 : i32 to vector<8x128xi32>
    %418 = arith.cmpi eq, %384, %417 : vector<8x128xi32>
    %419 = arith.ori %416, %418 : vector<8x128xi1>
    %420 = arith.extui %419 : vector<8x128xi1> to vector<8x128xi32>
    %421 = arith.sitofp %420 : vector<8x128xi32> to vector<8x128xf32>
    %c2_270 = arith.constant 2 : index
    %c0_271 = arith.constant 0 : index
    %c0_272 = arith.constant 0 : index
    %422 = vector.load %arg2[%c2_270, %c0_271, %c0_272] : memref<3x128x128xf32, #tpu.memory_space<vmem>>, vector<1x128x128xf32>
    %423 = vector.shape_cast %422 : vector<1x128x128xf32> to vector<128x128xf32>
    %cst_273 = arith.constant dense<0.000000e+00> : vector<8x128xf32>
    %424 = tpu.matmul %421, %423, %cst_273 {dimension_numbers = #tpu.dot_dimension_numbers<[1], [0], [0], [1], [0, 0, 1, 1], [], []>} : vector<8x128xf32>, vector<128x128xf32>, vector<8x128xf32> -> vector<8x128xf32>
    %425 = arith.addf %414, %424 : vector<8x128xf32>
    %426 = arith.maximumf %370, %425 : vector<8x128xf32>
    %c6_274 = arith.constant 6 : index
    %c0_275 = arith.constant 0 : index
    %c0_276 = arith.constant 0 : index
    %427 = vector.load %arg7[%c6_274, %c0_275, %c0_276] : memref<15x8x128xi32, #tpu.memory_space<vmem>>, vector<1x8x128xi32>
    %428 = vector.shape_cast %427 : vector<1x8x128xi32> to vector<8x128xi32>
    %c7_277 = arith.constant 7 : index
    %c0_278 = arith.constant 0 : index
    %c0_279 = arith.constant 0 : index
    %429 = vector.load %arg7[%c7_277, %c0_278, %c0_279] : memref<15x8x128xi32, #tpu.memory_space<vmem>>, vector<1x8x128xi32>
    %430 = vector.shape_cast %429 : vector<1x8x128xi32> to vector<8x128xi32>
    %c8_280 = arith.constant 8 : index
    %c0_281 = arith.constant 0 : index
    %c0_282 = arith.constant 0 : index
    %431 = vector.load %arg7[%c8_280, %c0_281, %c0_282] : memref<15x8x128xi32, #tpu.memory_space<vmem>>, vector<1x8x128xi32>
    %432 = vector.shape_cast %431 : vector<1x8x128xi32> to vector<8x128xi32>
    %c9_283 = arith.constant 9 : index
    %c0_284 = arith.constant 0 : index
    %c0_285 = arith.constant 0 : index
    %433 = vector.load %arg7[%c9_283, %c0_284, %c0_285] : memref<15x8x128xi32, #tpu.memory_space<vmem>>, vector<1x8x128xi32>
    %434 = vector.shape_cast %433 : vector<1x8x128xi32> to vector<8x128xi32>
    %c10_286 = arith.constant 10 : index
    %c0_287 = arith.constant 0 : index
    %c0_288 = arith.constant 0 : index
    %435 = vector.load %arg7[%c10_286, %c0_287, %c0_288] : memref<15x8x128xi32, #tpu.memory_space<vmem>>, vector<1x8x128xi32>
    %436 = vector.shape_cast %435 : vector<1x8x128xi32> to vector<8x128xi32>
    %c11_289 = arith.constant 11 : index
    %c0_290 = arith.constant 0 : index
    %c0_291 = arith.constant 0 : index
    %437 = vector.load %arg7[%c11_289, %c0_290, %c0_291] : memref<15x8x128xi32, #tpu.memory_space<vmem>>, vector<1x8x128xi32>
    %438 = vector.shape_cast %437 : vector<1x8x128xi32> to vector<8x128xi32>
    %c12_292 = arith.constant 12 : index
    %c0_293 = arith.constant 0 : index
    %c0_294 = arith.constant 0 : index
    %439 = vector.load %arg7[%c12_292, %c0_293, %c0_294] : memref<15x8x128xi32, #tpu.memory_space<vmem>>, vector<1x8x128xi32>
    %440 = vector.shape_cast %439 : vector<1x8x128xi32> to vector<8x128xi32>
    %c0_i32_295 = arith.constant 0 : i32
    %441 = vector.broadcast %c0_i32_295 : i32 to vector<8x128xi32>
    %442 = arith.cmpi eq, %428, %441 : vector<8x128xi32>
    %c50_i32_296 = arith.constant 50 : i32
    %443 = vector.broadcast %c50_i32_296 : i32 to vector<8x128xi32>
    %444 = arith.cmpi eq, %430, %443 : vector<8x128xi32>
    %445 = arith.ori %442, %444 : vector<8x128xi1>
    %c100_i32_297 = arith.constant 100 : i32
    %446 = vector.broadcast %c100_i32_297 : i32 to vector<8x128xi32>
    %447 = arith.cmpi eq, %432, %446 : vector<8x128xi32>
    %448 = arith.ori %445, %447 : vector<8x128xi1>
    %449 = arith.extui %448 : vector<8x128xi1> to vector<8x128xi32>
    %450 = arith.sitofp %449 : vector<8x128xi32> to vector<8x128xf32>
    %c0_298 = arith.constant 0 : index
    %c0_299 = arith.constant 0 : index
    %c0_300 = arith.constant 0 : index
    %451 = vector.load %arg2[%c0_298, %c0_299, %c0_300] : memref<3x128x128xf32, #tpu.memory_space<vmem>>, vector<1x128x128xf32>
    %452 = vector.shape_cast %451 : vector<1x128x128xf32> to vector<128x128xf32>
    %cst_301 = arith.constant dense<0.000000e+00> : vector<8x128xf32>
    %453 = tpu.matmul %450, %452, %cst_301 {dimension_numbers = #tpu.dot_dimension_numbers<[1], [0], [0], [1], [0, 0, 1, 1], [], []>} : vector<8x128xf32>, vector<128x128xf32>, vector<8x128xf32> -> vector<8x128xf32>
    %c-28_i32_302 = arith.constant -28 : i32
    %454 = vector.broadcast %c-28_i32_302 : i32 to vector<8x128xi32>
    %455 = arith.cmpi eq, %432, %454 : vector<8x128xi32>
    %c22_i32_303 = arith.constant 22 : i32
    %456 = vector.broadcast %c22_i32_303 : i32 to vector<8x128xi32>
    %457 = arith.cmpi eq, %434, %456 : vector<8x128xi32>
    %458 = arith.ori %455, %457 : vector<8x128xi1>
    %c72_i32_304 = arith.constant 72 : i32
    %459 = vector.broadcast %c72_i32_304 : i32 to vector<8x128xi32>
    %460 = arith.cmpi eq, %436, %459 : vector<8x128xi32>
    %461 = arith.ori %458, %460 : vector<8x128xi1>
    %c122_i32_305 = arith.constant 122 : i32
    %462 = vector.broadcast %c122_i32_305 : i32 to vector<8x128xi32>
    %463 = arith.cmpi eq, %438, %462 : vector<8x128xi32>
    %464 = arith.ori %461, %463 : vector<8x128xi1>
    %465 = arith.extui %464 : vector<8x128xi1> to vector<8x128xi32>
    %466 = arith.sitofp %465 : vector<8x128xi32> to vector<8x128xf32>
    %c1_306 = arith.constant 1 : index
    %c0_307 = arith.constant 0 : index
    %c0_308 = arith.constant 0 : index
    %467 = vector.load %arg2[%c1_306, %c0_307, %c0_308] : memref<3x128x128xf32, #tpu.memory_space<vmem>>, vector<1x128x128xf32>
    %468 = vector.shape_cast %467 : vector<1x128x128xf32> to vector<128x128xf32>
    %cst_309 = arith.constant dense<0.000000e+00> : vector<8x128xf32>
    %469 = tpu.matmul %466, %468, %cst_309 {dimension_numbers = #tpu.dot_dimension_numbers<[1], [0], [0], [1], [0, 0, 1, 1], [], []>} : vector<8x128xf32>, vector<128x128xf32>, vector<8x128xf32> -> vector<8x128xf32>
    %470 = arith.addf %453, %469 : vector<8x128xf32>
    %c-6_i32_310 = arith.constant -6 : i32
    %471 = vector.broadcast %c-6_i32_310 : i32 to vector<8x128xi32>
    %472 = arith.cmpi eq, %438, %471 : vector<8x128xi32>
    %c44_i32_311 = arith.constant 44 : i32
    %473 = vector.broadcast %c44_i32_311 : i32 to vector<8x128xi32>
    %474 = arith.cmpi eq, %440, %473 : vector<8x128xi32>
    %475 = arith.ori %472, %474 : vector<8x128xi1>
    %476 = arith.extui %475 : vector<8x128xi1> to vector<8x128xi32>
    %477 = arith.sitofp %476 : vector<8x128xi32> to vector<8x128xf32>
    %c2_312 = arith.constant 2 : index
    %c0_313 = arith.constant 0 : index
    %c0_314 = arith.constant 0 : index
    %478 = vector.load %arg2[%c2_312, %c0_313, %c0_314] : memref<3x128x128xf32, #tpu.memory_space<vmem>>, vector<1x128x128xf32>
    %479 = vector.shape_cast %478 : vector<1x128x128xf32> to vector<128x128xf32>
    %cst_315 = arith.constant dense<0.000000e+00> : vector<8x128xf32>
    %480 = tpu.matmul %477, %479, %cst_315 {dimension_numbers = #tpu.dot_dimension_numbers<[1], [0], [0], [1], [0, 0, 1, 1], [], []>} : vector<8x128xf32>, vector<128x128xf32>, vector<8x128xf32> -> vector<8x128xf32>
    %481 = arith.addf %470, %480 : vector<8x128xf32>
    %482 = arith.maximumf %426, %481 : vector<8x128xf32>
    %c7_316 = arith.constant 7 : index
    %c0_317 = arith.constant 0 : index
    %c0_318 = arith.constant 0 : index
    %483 = vector.load %arg7[%c7_316, %c0_317, %c0_318] : memref<15x8x128xi32, #tpu.memory_space<vmem>>, vector<1x8x128xi32>
    %484 = vector.shape_cast %483 : vector<1x8x128xi32> to vector<8x128xi32>
    %c8_319 = arith.constant 8 : index
    %c0_320 = arith.constant 0 : index
    %c0_321 = arith.constant 0 : index
    %485 = vector.load %arg7[%c8_319, %c0_320, %c0_321] : memref<15x8x128xi32, #tpu.memory_space<vmem>>, vector<1x8x128xi32>
    %486 = vector.shape_cast %485 : vector<1x8x128xi32> to vector<8x128xi32>
    %c9_322 = arith.constant 9 : index
    %c0_323 = arith.constant 0 : index
    %c0_324 = arith.constant 0 : index
    %487 = vector.load %arg7[%c9_322, %c0_323, %c0_324] : memref<15x8x128xi32, #tpu.memory_space<vmem>>, vector<1x8x128xi32>
    %488 = vector.shape_cast %487 : vector<1x8x128xi32> to vector<8x128xi32>
    %c10_325 = arith.constant 10 : index
    %c0_326 = arith.constant 0 : index
    %c0_327 = arith.constant 0 : index
    %489 = vector.load %arg7[%c10_325, %c0_326, %c0_327] : memref<15x8x128xi32, #tpu.memory_space<vmem>>, vector<1x8x128xi32>
    %490 = vector.shape_cast %489 : vector<1x8x128xi32> to vector<8x128xi32>
    %c11_328 = arith.constant 11 : index
    %c0_329 = arith.constant 0 : index
    %c0_330 = arith.constant 0 : index
    %491 = vector.load %arg7[%c11_328, %c0_329, %c0_330] : memref<15x8x128xi32, #tpu.memory_space<vmem>>, vector<1x8x128xi32>
    %492 = vector.shape_cast %491 : vector<1x8x128xi32> to vector<8x128xi32>
    %c12_331 = arith.constant 12 : index
    %c0_332 = arith.constant 0 : index
    %c0_333 = arith.constant 0 : index
    %493 = vector.load %arg7[%c12_331, %c0_332, %c0_333] : memref<15x8x128xi32, #tpu.memory_space<vmem>>, vector<1x8x128xi32>
    %494 = vector.shape_cast %493 : vector<1x8x128xi32> to vector<8x128xi32>
    %c13_334 = arith.constant 13 : index
    %c0_335 = arith.constant 0 : index
    %c0_336 = arith.constant 0 : index
    %495 = vector.load %arg7[%c13_334, %c0_335, %c0_336] : memref<15x8x128xi32, #tpu.memory_space<vmem>>, vector<1x8x128xi32>
    %496 = vector.shape_cast %495 : vector<1x8x128xi32> to vector<8x128xi32>
    %c0_i32_337 = arith.constant 0 : i32
    %497 = vector.broadcast %c0_i32_337 : i32 to vector<8x128xi32>
    %498 = arith.cmpi eq, %484, %497 : vector<8x128xi32>
    %c50_i32_338 = arith.constant 50 : i32
    %499 = vector.broadcast %c50_i32_338 : i32 to vector<8x128xi32>
    %500 = arith.cmpi eq, %486, %499 : vector<8x128xi32>
    %501 = arith.ori %498, %500 : vector<8x128xi1>
    %c100_i32_339 = arith.constant 100 : i32
    %502 = vector.broadcast %c100_i32_339 : i32 to vector<8x128xi32>
    %503 = arith.cmpi eq, %488, %502 : vector<8x128xi32>
    %504 = arith.ori %501, %503 : vector<8x128xi1>
    %505 = arith.extui %504 : vector<8x128xi1> to vector<8x128xi32>
    %506 = arith.sitofp %505 : vector<8x128xi32> to vector<8x128xf32>
    %c0_340 = arith.constant 0 : index
    %c0_341 = arith.constant 0 : index
    %c0_342 = arith.constant 0 : index
    %507 = vector.load %arg2[%c0_340, %c0_341, %c0_342] : memref<3x128x128xf32, #tpu.memory_space<vmem>>, vector<1x128x128xf32>
    %508 = vector.shape_cast %507 : vector<1x128x128xf32> to vector<128x128xf32>
    %cst_343 = arith.constant dense<0.000000e+00> : vector<8x128xf32>
    %509 = tpu.matmul %506, %508, %cst_343 {dimension_numbers = #tpu.dot_dimension_numbers<[1], [0], [0], [1], [0, 0, 1, 1], [], []>} : vector<8x128xf32>, vector<128x128xf32>, vector<8x128xf32> -> vector<8x128xf32>
    %c-28_i32_344 = arith.constant -28 : i32
    %510 = vector.broadcast %c-28_i32_344 : i32 to vector<8x128xi32>
    %511 = arith.cmpi eq, %488, %510 : vector<8x128xi32>
    %c22_i32_345 = arith.constant 22 : i32
    %512 = vector.broadcast %c22_i32_345 : i32 to vector<8x128xi32>
    %513 = arith.cmpi eq, %490, %512 : vector<8x128xi32>
    %514 = arith.ori %511, %513 : vector<8x128xi1>
    %c72_i32_346 = arith.constant 72 : i32
    %515 = vector.broadcast %c72_i32_346 : i32 to vector<8x128xi32>
    %516 = arith.cmpi eq, %492, %515 : vector<8x128xi32>
    %517 = arith.ori %514, %516 : vector<8x128xi1>
    %c122_i32_347 = arith.constant 122 : i32
    %518 = vector.broadcast %c122_i32_347 : i32 to vector<8x128xi32>
    %519 = arith.cmpi eq, %494, %518 : vector<8x128xi32>
    %520 = arith.ori %517, %519 : vector<8x128xi1>
    %521 = arith.extui %520 : vector<8x128xi1> to vector<8x128xi32>
    %522 = arith.sitofp %521 : vector<8x128xi32> to vector<8x128xf32>
    %c1_348 = arith.constant 1 : index
    %c0_349 = arith.constant 0 : index
    %c0_350 = arith.constant 0 : index
    %523 = vector.load %arg2[%c1_348, %c0_349, %c0_350] : memref<3x128x128xf32, #tpu.memory_space<vmem>>, vector<1x128x128xf32>
    %524 = vector.shape_cast %523 : vector<1x128x128xf32> to vector<128x128xf32>
    %cst_351 = arith.constant dense<0.000000e+00> : vector<8x128xf32>
    %525 = tpu.matmul %522, %524, %cst_351 {dimension_numbers = #tpu.dot_dimension_numbers<[1], [0], [0], [1], [0, 0, 1, 1], [], []>} : vector<8x128xf32>, vector<128x128xf32>, vector<8x128xf32> -> vector<8x128xf32>
    %526 = arith.addf %509, %525 : vector<8x128xf32>
    %c-6_i32_352 = arith.constant -6 : i32
    %527 = vector.broadcast %c-6_i32_352 : i32 to vector<8x128xi32>
    %528 = arith.cmpi eq, %494, %527 : vector<8x128xi32>
    %c44_i32_353 = arith.constant 44 : i32
    %529 = vector.broadcast %c44_i32_353 : i32 to vector<8x128xi32>
    %530 = arith.cmpi eq, %496, %529 : vector<8x128xi32>
    %531 = arith.ori %528, %530 : vector<8x128xi1>
    %532 = arith.extui %531 : vector<8x128xi1> to vector<8x128xi32>
    %533 = arith.sitofp %532 : vector<8x128xi32> to vector<8x128xf32>
    %c2_354 = arith.constant 2 : index
    %c0_355 = arith.constant 0 : index
    %c0_356 = arith.constant 0 : index
    %534 = vector.load %arg2[%c2_354, %c0_355, %c0_356] : memref<3x128x128xf32, #tpu.memory_space<vmem>>, vector<1x128x128xf32>
    %535 = vector.shape_cast %534 : vector<1x128x128xf32> to vector<128x128xf32>
    %cst_357 = arith.constant dense<0.000000e+00> : vector<8x128xf32>
    %536 = tpu.matmul %533, %535, %cst_357 {dimension_numbers = #tpu.dot_dimension_numbers<[1], [0], [0], [1], [0, 0, 1, 1], [], []>} : vector<8x128xf32>, vector<128x128xf32>, vector<8x128xf32> -> vector<8x128xf32>
    %537 = arith.addf %526, %536 : vector<8x128xf32>
    %538 = arith.maximumf %482, %537 : vector<8x128xf32>
    %c8_358 = arith.constant 8 : index
    %c0_359 = arith.constant 0 : index
    %c0_360 = arith.constant 0 : index
    %539 = vector.load %arg7[%c8_358, %c0_359, %c0_360] : memref<15x8x128xi32, #tpu.memory_space<vmem>>, vector<1x8x128xi32>
    %540 = vector.shape_cast %539 : vector<1x8x128xi32> to vector<8x128xi32>
    %c9_361 = arith.constant 9 : index
    %c0_362 = arith.constant 0 : index
    %c0_363 = arith.constant 0 : index
    %541 = vector.load %arg7[%c9_361, %c0_362, %c0_363] : memref<15x8x128xi32, #tpu.memory_space<vmem>>, vector<1x8x128xi32>
    %542 = vector.shape_cast %541 : vector<1x8x128xi32> to vector<8x128xi32>
    %c10_364 = arith.constant 10 : index
    %c0_365 = arith.constant 0 : index
    %c0_366 = arith.constant 0 : index
    %543 = vector.load %arg7[%c10_364, %c0_365, %c0_366] : memref<15x8x128xi32, #tpu.memory_space<vmem>>, vector<1x8x128xi32>
    %544 = vector.shape_cast %543 : vector<1x8x128xi32> to vector<8x128xi32>
    %c11_367 = arith.constant 11 : index
    %c0_368 = arith.constant 0 : index
    %c0_369 = arith.constant 0 : index
    %545 = vector.load %arg7[%c11_367, %c0_368, %c0_369] : memref<15x8x128xi32, #tpu.memory_space<vmem>>, vector<1x8x128xi32>
    %546 = vector.shape_cast %545 : vector<1x8x128xi32> to vector<8x128xi32>
    %c12_370 = arith.constant 12 : index
    %c0_371 = arith.constant 0 : index
    %c0_372 = arith.constant 0 : index
    %547 = vector.load %arg7[%c12_370, %c0_371, %c0_372] : memref<15x8x128xi32, #tpu.memory_space<vmem>>, vector<1x8x128xi32>
    %548 = vector.shape_cast %547 : vector<1x8x128xi32> to vector<8x128xi32>
    %c13_373 = arith.constant 13 : index
    %c0_374 = arith.constant 0 : index
    %c0_375 = arith.constant 0 : index
    %549 = vector.load %arg7[%c13_373, %c0_374, %c0_375] : memref<15x8x128xi32, #tpu.memory_space<vmem>>, vector<1x8x128xi32>
    %550 = vector.shape_cast %549 : vector<1x8x128xi32> to vector<8x128xi32>
    %c14_376 = arith.constant 14 : index
    %c0_377 = arith.constant 0 : index
    %c0_378 = arith.constant 0 : index
    %551 = vector.load %arg7[%c14_376, %c0_377, %c0_378] : memref<15x8x128xi32, #tpu.memory_space<vmem>>, vector<1x8x128xi32>
    %552 = vector.shape_cast %551 : vector<1x8x128xi32> to vector<8x128xi32>
    %c0_i32_379 = arith.constant 0 : i32
    %553 = vector.broadcast %c0_i32_379 : i32 to vector<8x128xi32>
    %554 = arith.cmpi eq, %540, %553 : vector<8x128xi32>
    %c50_i32_380 = arith.constant 50 : i32
    %555 = vector.broadcast %c50_i32_380 : i32 to vector<8x128xi32>
    %556 = arith.cmpi eq, %542, %555 : vector<8x128xi32>
    %557 = arith.ori %554, %556 : vector<8x128xi1>
    %c100_i32_381 = arith.constant 100 : i32
    %558 = vector.broadcast %c100_i32_381 : i32 to vector<8x128xi32>
    %559 = arith.cmpi eq, %544, %558 : vector<8x128xi32>
    %560 = arith.ori %557, %559 : vector<8x128xi1>
    %561 = arith.extui %560 : vector<8x128xi1> to vector<8x128xi32>
    %562 = arith.sitofp %561 : vector<8x128xi32> to vector<8x128xf32>
    %c0_382 = arith.constant 0 : index
    %c0_383 = arith.constant 0 : index
    %c0_384 = arith.constant 0 : index
    %563 = vector.load %arg2[%c0_382, %c0_383, %c0_384] : memref<3x128x128xf32, #tpu.memory_space<vmem>>, vector<1x128x128xf32>
    %564 = vector.shape_cast %563 : vector<1x128x128xf32> to vector<128x128xf32>
    %cst_385 = arith.constant dense<0.000000e+00> : vector<8x128xf32>
    %565 = tpu.matmul %562, %564, %cst_385 {dimension_numbers = #tpu.dot_dimension_numbers<[1], [0], [0], [1], [0, 0, 1, 1], [], []>} : vector<8x128xf32>, vector<128x128xf32>, vector<8x128xf32> -> vector<8x128xf32>
    %c-28_i32_386 = arith.constant -28 : i32
    %566 = vector.broadcast %c-28_i32_386 : i32 to vector<8x128xi32>
    %567 = arith.cmpi eq, %544, %566 : vector<8x128xi32>
    %c22_i32_387 = arith.constant 22 : i32
    %568 = vector.broadcast %c22_i32_387 : i32 to vector<8x128xi32>
    %569 = arith.cmpi eq, %546, %568 : vector<8x128xi32>
    %570 = arith.ori %567, %569 : vector<8x128xi1>
    %c72_i32_388 = arith.constant 72 : i32
    %571 = vector.broadcast %c72_i32_388 : i32 to vector<8x128xi32>
    %572 = arith.cmpi eq, %548, %571 : vector<8x128xi32>
    %573 = arith.ori %570, %572 : vector<8x128xi1>
    %c122_i32_389 = arith.constant 122 : i32
    %574 = vector.broadcast %c122_i32_389 : i32 to vector<8x128xi32>
    %575 = arith.cmpi eq, %550, %574 : vector<8x128xi32>
    %576 = arith.ori %573, %575 : vector<8x128xi1>
    %577 = arith.extui %576 : vector<8x128xi1> to vector<8x128xi32>
    %578 = arith.sitofp %577 : vector<8x128xi32> to vector<8x128xf32>
    %c1_390 = arith.constant 1 : index
    %c0_391 = arith.constant 0 : index
    %c0_392 = arith.constant 0 : index
    %579 = vector.load %arg2[%c1_390, %c0_391, %c0_392] : memref<3x128x128xf32, #tpu.memory_space<vmem>>, vector<1x128x128xf32>
    %580 = vector.shape_cast %579 : vector<1x128x128xf32> to vector<128x128xf32>
    %cst_393 = arith.constant dense<0.000000e+00> : vector<8x128xf32>
    %581 = tpu.matmul %578, %580, %cst_393 {dimension_numbers = #tpu.dot_dimension_numbers<[1], [0], [0], [1], [0, 0, 1, 1], [], []>} : vector<8x128xf32>, vector<128x128xf32>, vector<8x128xf32> -> vector<8x128xf32>
    %582 = arith.addf %565, %581 : vector<8x128xf32>
    %c-6_i32_394 = arith.constant -6 : i32
    %583 = vector.broadcast %c-6_i32_394 : i32 to vector<8x128xi32>
    %584 = arith.cmpi eq, %550, %583 : vector<8x128xi32>
    %c44_i32_395 = arith.constant 44 : i32
    %585 = vector.broadcast %c44_i32_395 : i32 to vector<8x128xi32>
    %586 = arith.cmpi eq, %552, %585 : vector<8x128xi32>
    %587 = arith.ori %584, %586 : vector<8x128xi1>
    %588 = arith.extui %587 : vector<8x128xi1> to vector<8x128xi32>
    %589 = arith.sitofp %588 : vector<8x128xi32> to vector<8x128xf32>
    %c2_396 = arith.constant 2 : index
    %c0_397 = arith.constant 0 : index
    %c0_398 = arith.constant 0 : index
    %590 = vector.load %arg2[%c2_396, %c0_397, %c0_398] : memref<3x128x128xf32, #tpu.memory_space<vmem>>, vector<1x128x128xf32>
    %591 = vector.shape_cast %590 : vector<1x128x128xf32> to vector<128x128xf32>
    %cst_399 = arith.constant dense<0.000000e+00> : vector<8x128xf32>
    %592 = tpu.matmul %589, %591, %cst_399 {dimension_numbers = #tpu.dot_dimension_numbers<[1], [0], [0], [1], [0, 0, 1, 1], [], []>} : vector<8x128xf32>, vector<128x128xf32>, vector<8x128xf32> -> vector<8x128xf32>
    %593 = arith.addf %582, %592 : vector<8x128xf32>
    %594 = arith.maximumf %538, %593 : vector<8x128xf32>
    %c0_400 = arith.constant 0 : index
    %c0_401 = arith.constant 0 : index
    %595 = vector.load %arg3[%c0_400, %c0_401] : memref<1x128xf32, #tpu.memory_space<vmem>>, vector<1x128xf32>
    %596 = vector.broadcast %595 : vector<1x128xf32> to vector<8x128xf32>
    %597 = arith.addf %594, %596 : vector<8x128xf32>
    %cst_402 = arith.constant 0.000000e+00 : f32
    %598 = vector.broadcast %cst_402 : f32 to vector<8x128xf32>
    %599 = arith.maximumf %597, %598 : vector<8x128xf32>
    %c0_403 = arith.constant 0 : index
    %c0_404 = arith.constant 0 : index
    %600 = vector.load %arg4[%c0_403, %c0_404] : memref<1x128xf32, #tpu.memory_space<vmem>>, vector<1x128xf32>
    %cst_405 = arith.constant dense<0.000000e+00> : vector<1x8xf32>
    %601 = tpu.matmul %600, %599, %cst_405 {dimension_numbers = #tpu.dot_dimension_numbers<[1], [1], [0], [0], [0, 0, 1, 0], [], []>} : vector<1x128xf32>, vector<8x128xf32>, vector<1x8xf32> -> vector<1x8xf32>
    %c0_406 = arith.constant 0 : index
    %c0_407 = arith.constant 0 : index
    %602 = vector.load %arg5[%c0_406, %c0_407] : memref<1x1xf32, #tpu.memory_space<vmem>>, vector<1x1xf32>
    %603 = vector.broadcast %602 : vector<1x1xf32> to vector<1x8xf32>
    %604 = arith.addf %601, %603 : vector<1x8xf32>
    %605 = arith.negf %604 : vector<1x8xf32>
    %606 = math.exp %605 : vector<1x8xf32>
    %cst_408 = arith.constant 1.000000e+00 : f32
    %607 = vector.broadcast %cst_408 : f32 to vector<1x8xf32>
    %608 = arith.addf %607, %606 : vector<1x8xf32>
    %609 = arith.divf %607, %608 : vector<1x8xf32>
    %c0_409 = arith.constant 0 : index
    %c0_410 = arith.constant 0 : index
    %610 = vector.load %arg6[%c0_409, %c0_410] : memref<1x8xf32, #tpu.memory_space<vmem>>, vector<1x8xf32>
    tpu.vector_store %arg6[%c0_409, %c0_410], %609 {strides = array<i32>} : memref<1x8xf32, #tpu.memory_space<vmem>>, vector<1x8xf32>,
    return
  }
  func.func @transform_0(%arg0: i32) -> (i32, i32) {
    %c0_i32 = arith.constant 0 : i32
    %c0_i32_0 = arith.constant 0 : i32
    return %arg0, %c0_i32 : i32, i32
  }
  func.func @transform_1(%arg0: i32) -> (i32, i32, i32) {
    %c0_i32 = arith.constant 0 : i32
    %c0_i32_0 = arith.constant 0 : i32
    %c0_i32_1 = arith.constant 0 : i32
    %c0_i32_2 = arith.constant 0 : i32
    return %c0_i32, %c0_i32_0, %c0_i32_1 : i32, i32, i32
  }
  func.func @transform_2(%arg0: i32) -> (i32, i32) {
    %c0_i32 = arith.constant 0 : i32
    %c0_i32_0 = arith.constant 0 : i32
    %c0_i32_1 = arith.constant 0 : i32
    return %c0_i32, %c0_i32_0 : i32, i32
  }
  func.func @transform_3(%arg0: i32) -> (i32, i32) {
    %c0_i32 = arith.constant 0 : i32
    %c0_i32_0 = arith.constant 0 : i32
    %c0_i32_1 = arith.constant 0 : i32
    return %c0_i32, %c0_i32_0 : i32, i32
  }
  func.func @transform_4(%arg0: i32) -> (i32, i32) {
    %c0_i32 = arith.constant 0 : i32
    %c0_i32_0 = arith.constant 0 : i32
    %c0_i32_1 = arith.constant 0 : i32
    return %c0_i32, %c0_i32_0 : i32, i32
  }
  func.func @transform_5(%arg0: i32) -> (i32, i32) {
    %c0_i32 = arith.constant 0 : i32
    %c0_i32_0 = arith.constant 0 : i32
    return %c0_i32, %arg0 : i32, i32
  }
}

</mosaic_0001>

<llo_original>
// kernel: tpu_custom_call.1
$region0: #{tpu_custom_call.1}
  #allocation0 [shape = 'u32[]', space=smem, size = 0x4, offset = 0x4, fixed_abs, tag = 'smem constant byte address 0x4 - core index']
  #allocation1 [shape = 'u32[144,128]{1,0:T(1,128)}', space=vmem, size = 0x12000, scoped, tag = 'internal scratch']
  #allocation2 [shape = 's32[15,8,128]{2,1,0:T(8,128)}', space=vmem, size = 0xf000, scoped, tag = 'scratch operand']
  #allocation3 [shape = 'f32[1,1]{1,0:T(1,128)S(1)}', space=vmem, size = 0x200, scoped, tag = 'scoped memory for tpu_custom_call.1']
  %s0 = inlined_call_operand.hbm [shape: s32[8,15], index: 0, kind: input, shape index: {}]
  %s1 = inlined_call_operand.hbm [shape: f32[3,128,128], index: 1, kind: input, shape index: {}]
  %s2 = inlined_call_operand.vmem [shape: f32[1,128], index: 2, kind: input, shape index: {}]
  %s3 = inlined_call_operand.vmem [shape: f32[1,128], index: 3, kind: input, shape index: {}]
  %s4 = inlined_call_operand.<no memory space> [shape: f32[1,1], index: 4, kind: input, shape index: {}]
  %s5 = inlined_call_operand.hbm [shape: f32[1,8], index: 5, kind: output, shape index: {}]
  %s6 = sld [smem:[#allocation0]]
  $region38: #{tpu_custom_call.1} parent=0
    _
  %s8 = ssub.s32 1, %s6
  %s9 = scalar_select 0, %s8, %s6
  %v10 = vstv %s4
  %11 = vst [vmem:[#allocation3] sm:$0x1] %v10
  $region1: #{tpu_custom_call.1} parent=0
    #allocation4 [shape = 'u8[4096]{0}', space=vmem, size = 0x1000, scoped, tag = 'input window, operand 0, single buffered']
    #allocation5 [shape = 's32[1]{0}', space=sflag, size = 0x4, scoped, tag = 'scoped memory for tpu_custom_call.1']
    #allocation6 [shape = 's32[1]{0}', space=sflag, size = 0x4, scoped, tag = 'scoped memory for tpu_custom_call.1']
    #allocation7 [shape = 'u8[196608]{0}', space=vmem, size = 0x30000, scoped, tag = 'input window, operand 1, single buffered']
    #allocation8 [shape = 's32[1]{0}', space=sflag, size = 0x4, scoped, tag = 'scoped memory for tpu_custom_call.1']
    #allocation9 [shape = 'u8[512]{0}', space=vmem, size = 0x400, scoped, tag = 'output window, operand 0, single buffered']
    %12 = vsyncpa [#allocation5], 0
    %13 = vsyncpa [#allocation8], 0
    %14 = vsyncpa [#allocation6], 0
    // Predicated region
    $region2: #{tpu_custom_call.1} parent=1 // pred_check
      _
    $region3: #{tpu_custom_call.1} parent=1 // pred_check_branch
      %16 = sbr.rel (0) target = $region5
    $region4: #{tpu_custom_call.1} parent=1 // pred_region
      %s18 = ssub.s32 128, 128
      %19 = vsyncadd [#allocation5], %s18
      %s21 = sshll.u32 [#allocation4], 4
      %s22 = int_to_ptr.vmem [resolvable:$true] %s21
      %24 = dma.hbm_to_vmem [thread:$0]  %s0, 128, %s22, [#allocation5]
    $region5: #{tpu_custom_call.1} parent=1 // pred_fallthru
      _
    // Predicated region
    $region6: #{tpu_custom_call.1} parent=1 // pred_check
      _
    $region7: #{tpu_custom_call.1} parent=1 // pred_check_branch
      %26 = sbr.rel (0) target = $region9
    $region8: #{tpu_custom_call.1} parent=1 // pred_region
      %s28 = ssub.s32 6144, 6144
      %29 = vsyncadd [#allocation8], %s28
      %s30 = sshll.u32 [#allocation7], 4
      %s31 = int_to_ptr.vmem [resolvable:$true] %s30
      %36 = dma.hbm_to_vmem [thread:$0]  %s1, 6144, %s31, [#allocation8], 128, 128, 8
    $region9: #{tpu_custom_call.1} parent=1 // pred_fallthru
      _
    // Predicated region
    $region10: #{tpu_custom_call.1} parent=1 // pred_check
      _
    $region11: #{tpu_custom_call.1} parent=1 // pred_check_branch
      %38 = sbr.rel (0) target = $region13
    $region12: #{tpu_custom_call.1} parent=1 // pred_region
      _
    $region13: #{tpu_custom_call.1} parent=1 // pred_fallthru
      _
    // Predicated region
    $region14: #{tpu_custom_call.1} parent=1 // pred_check
      _
    $region15: #{tpu_custom_call.1} parent=1 // pred_check_branch
      %40 = sbr.rel (0) target = $region17
    $region16: #{tpu_custom_call.1} parent=1 // pred_region
      _
    $region17: #{tpu_custom_call.1} parent=1 // pred_fallthru
      _
    // Predicated region
    $region18: #{tpu_custom_call.1} parent=1 // pred_check
      _
    $region19: #{tpu_custom_call.1} parent=1 // pred_check_branch
      %42 = sbr.rel (0) target = $region21
    $region20: #{tpu_custom_call.1} parent=1 // pred_region
      _
    $region21: #{tpu_custom_call.1} parent=1 // pred_fallthru
      _
    // Predicated region
    $region22: #{tpu_custom_call.1} parent=1 // pred_check
      _
    $region23: #{tpu_custom_call.1} parent=1 // pred_check_branch
      %44 = sbr.rel (0) target = $region25
    $region24: #{tpu_custom_call.1} parent=1 // pred_region
      %45 = dma.done [#allocation5], 128
    $region25: #{tpu_custom_call.1} parent=1 // pred_fallthru
      _
    // Predicated region
    $region26: #{tpu_custom_call.1} parent=1 // pred_check
      _
    $region27: #{tpu_custom_call.1} parent=1 // pred_check_branch
      %47 = sbr.rel (0) target = $region29
    $region28: #{tpu_custom_call.1} parent=1 // pred_region
      %48 = dma.done [#allocation8], 6144
    $region29: #{tpu_custom_call.1} parent=1 // pred_fallthru
      _
    %v49 = vld [vmem:[#allocation4] sm:$0xff]
    %v50 = vlaneseq
    %v51 = vand.u32 %v50, 127
    %52 = vset.pattern.permute.xlu0 0
    %53 = vperm.xlu0 %52, %v49
    %v54 = vpop.permute.xlu0 %53
    %v55 = vsub.s32 %v51, %v54
    %56 = vst [vmem:[#allocation2] sm:$0xff] %v55
    %57 = vset.pattern.permute.xlu0 1
    %58 = vperm.xlu0 %57, %v49
    %v59 = vpop.permute.xlu0 %58
    %v60 = vsub.s32 %v51, %v59
    %s61 = scalar_lea.vmem [#allocation2], 8
    %62 = vst [vmem:[%s61] sm:$0xff] %v60
    %63 = vset.pattern.permute.xlu0 2
    %64 = vperm.xlu0 %63, %v49
    %v65 = vpop.permute.xlu0 %64
    %v66 = vsub.s32 %v51, %v65
    %s67 = scalar_lea.vmem [#allocation2], 16
    %68 = vst [vmem:[%s67] sm:$0xff] %v66
    %69 = vset.pattern.permute.xlu0 3
    %70 = vperm.xlu0 %69, %v49
    %v71 = vpop.permute.xlu0 %70
    %v72 = vsub.s32 %v51, %v71
    %s73 = scalar_lea.vmem [#allocation2], 24
    %74 = vst [vmem:[%s73] sm:$0xff] %v72
    %75 = vset.pattern.permute.xlu0 4
    %76 = vperm.xlu0 %75, %v49
    %v77 = vpop.permute.xlu0 %76
    %v78 = vsub.s32 %v51, %v77
    %s79 = scalar_lea.vmem [#allocation2], 32
    %80 = vst [vmem:[%s79] sm:$0xff] %v78
    %81 = vset.pattern.permute.xlu0 5
    %82 = vperm.xlu0 %81, %v49
    %v83 = vpop.permute.xlu0 %82
    %v84 = vsub.s32 %v51, %v83
    %s85 = scalar_lea.vmem [#allocation2], 40
    %86 = vst [vmem:[%s85] sm:$0xff] %v84
    %87 = vset.pattern.permute.xlu0 6
    %88 = vperm.xlu0 %87, %v49
    %v89 = vpop.permute.xlu0 %88
    %v90 = vsub.s32 %v51, %v89
    %s91 = scalar_lea.vmem [#allocation2], 48
    %92 = vst [vmem:[%s91] sm:$0xff] %v90
    %93 = vset.pattern.permute.xlu0 7
    %94 = vperm.xlu0 %93, %v49
    %v95 = vpop.permute.xlu0 %94
    %v96 = vsub.s32 %v51, %v95
    %s97 = scalar_lea.vmem [#allocation2], 56
    %98 = vst [vmem:[%s97] sm:$0xff] %v96
    %99 = vset.pattern.permute.xlu0 8
    %100 = vperm.xlu0 %99, %v49
    %v101 = vpop.permute.xlu0 %100
    %v102 = vsub.s32 %v51, %v101
    %s103 = scalar_lea.vmem [#allocation2], 64
    %104 = vst [vmem:[%s103] sm:$0xff] %v102
    %105 = vset.pattern.permute.xlu0 9
    %106 = vperm.xlu0 %105, %v49
    %v107 = vpop.permute.xlu0 %106
    %v108 = vsub.s32 %v51, %v107
    %s109 = scalar_lea.vmem [#allocation2], 72
    %110 = vst [vmem:[%s109] sm:$0xff] %v108
    %111 = vset.pattern.permute.xlu0 10
    %112 = vperm.xlu0 %111, %v49
    %v113 = vpop.permute.xlu0 %112
    %v114 = vsub.s32 %v51, %v113
    %s115 = scalar_lea.vmem [#allocation2], 80
    %116 = vst [vmem:[%s115] sm:$0xff] %v114
    %117 = vset.pattern.permute.xlu0 11
    %118 = vperm.xlu0 %117, %v49
    %v119 = vpop.permute.xlu0 %118
    %v120 = vsub.s32 %v51, %v119
    %s121 = scalar_lea.vmem [#allocation2], 88
    %122 = vst [vmem:[%s121] sm:$0xff] %v120
    %123 = vset.pattern.permute.xlu0 12
    %124 = vperm.xlu0 %123, %v49
    %v125 = vpop.permute.xlu0 %124
    %v126 = vsub.s32 %v51, %v125
    %s127 = scalar_lea.vmem [#allocation2], 96
    %128 = vst [vmem:[%s127] sm:$0xff] %v126
    %129 = vset.pattern.permute.xlu0 13
    %130 = vperm.xlu0 %129, %v49
    %v131 = vpop.permute.xlu0 %130
    %v132 = vsub.s32 %v51, %v131
    %s133 = scalar_lea.vmem [#allocation2], 104
    %134 = vst [vmem:[%s133] sm:$0xff] %v132
    %135 = vset.pattern.permute.xlu0 14
    %136 = vperm.xlu0 %135, %v49
    %v137 = vpop.permute.xlu0 %136
    %v138 = vsub.s32 %v51, %v137
    %s139 = scalar_lea.vmem [#allocation2], 112
    %140 = vst [vmem:[%s139] sm:$0xff] %v138
    %v141 = vld [vmem:[#allocation2] sm:$0xff]
    %v142 = vld [vmem:[%s61] sm:$0xff]
    %v143 = vld [vmem:[%s67] sm:$0xff]
    %v144 = vld [vmem:[%s73] sm:$0xff]
    %v145 = vld [vmem:[%s79] sm:$0xff]
    %v146 = vld [vmem:[%s85] sm:$0xff]
    %v147 = vld [vmem:[%s91] sm:$0xff]
    %vm148 = vcmp.eq.s32.totalorder %v141, 0
    %vm149 = vcmp.eq.s32.totalorder %v142, 50
    %vm150 = vmor %vm148, %vm149
    %vm151 = vcmp.eq.s32.totalorder %v143, 100
    %vm152 = vmor %vm150, %vm151
    %v153 = vsel %vm152, 1, 0
    %v154 = vcvt.s32.f32 %v153
    %v155 = vld [vmem:[#allocation7] sm:$0xff]
    %v156 = vld [vmem:[#allocation7 + $0x8] sm:$0xff]
    %v157 = vld [vmem:[#allocation7 + $0x10] sm:$0xff]
    %v158 = vld [vmem:[#allocation7 + $0x18] sm:$0xff]
    %v159 = vld [vmem:[#allocation7 + $0x20] sm:$0xff]
    %v160 = vld [vmem:[#allocation7 + $0x28] sm:$0xff]
    %v161 = vld [vmem:[#allocation7 + $0x30] sm:$0xff]
    %v162 = vld [vmem:[#allocation7 + $0x38] sm:$0xff]
    %v163 = vld [vmem:[#allocation7 + $0x40] sm:$0xff]
    %v164 = vld [vmem:[#allocation7 + $0x48] sm:$0xff]
    %v165 = vld [vmem:[#allocation7 + $0x50] sm:$0xff]
    %v166 = vld [vmem:[#allocation7 + $0x58] sm:$0xff]
    %v167 = vld [vmem:[#allocation7 + $0x60] sm:$0xff]
    %v168 = vld [vmem:[#allocation7 + $0x68] sm:$0xff]
    %v169 = vld [vmem:[#allocation7 + $0x70] sm:$0xff]
    %v170 = vld [vmem:[#allocation7 + $0x78] sm:$0xff]
    %vm171 = vcmp.eq.s32.totalorder %v143, 4294967268
    %vm172 = vcmp.eq.s32.totalorder %v144, 22
    %vm173 = vmor %vm171, %vm172
    %vm174 = vcmp.eq.s32.totalorder %v145, 72
    %vm175 = vmor %vm173, %vm174
    %vm176 = vcmp.eq.s32.totalorder %v146, 122
    %vm177 = vmor %vm175, %vm176
    %v178 = vsel %vm177, 1, 0
    %v179 = vcvt.s32.f32 %v178
    %s180 = scalar_lea.vmem [#allocation7], 128
    %v181 = vld [vmem:[%s180] sm:$0xff]
    %v182 = vld [vmem:[%s180 + $0x8] sm:$0xff]
    %v183 = vld [vmem:[%s180 + $0x10] sm:$0xff]
    %v184 = vld [vmem:[%s180 + $0x18] sm:$0xff]
    %v185 = vld [vmem:[%s180 + $0x20] sm:$0xff]
    %v186 = vld [vmem:[%s180 + $0x28] sm:$0xff]
    %v187 = vld [vmem:[%s180 + $0x30] sm:$0xff]
    %v188 = vld [vmem:[%s180 + $0x38] sm:$0xff]
    %v189 = vld [vmem:[%s180 + $0x40] sm:$0xff]
    %v190 = vld [vmem:[%s180 + $0x48] sm:$0xff]
    %v191 = vld [vmem:[%s180 + $0x50] sm:$0xff]
    %v192 = vld [vmem:[%s180 + $0x58] sm:$0xff]
    %v193 = vld [vmem:[%s180 + $0x60] sm:$0xff]
    %v194 = vld [vmem:[%s180 + $0x68] sm:$0xff]
    %v195 = vld [vmem:[%s180 + $0x70] sm:$0xff]
    %v196 = vld [vmem:[%s180 + $0x78] sm:$0xff]
    %197 = vmatprep.subr.mxu0 0.0
    %198 = vmatpush1.msra.mxu0 %v181
    %199 = vmatprep.subr.mxu0 0.0
    %200 = vmatpush1.msra.mxu0 %v182
    %201 = vmatprep.subr.mxu0 0.0
    %202 = vmatpush1.msra.mxu0 %v183
    %203 = vmatprep.subr.mxu0 0.0
    %204 = vmatpush1.msra.mxu0 %v184
    %205 = vmatprep.subr.mxu0 0.0
    %206 = vmatpush1.msra.mxu0 %v185
    %207 = vmatprep.subr.mxu0 0.0
    %208 = vmatpush1.msra.mxu0 %v186
    %209 = vmatprep.subr.mxu0 0.0
    %210 = vmatpush1.msra.mxu0 %v187
    %211 = vmatprep.subr.mxu0 0.0
    %212 = vmatpush1.msra.mxu0 %v188
    %213 = vmatprep.subr.mxu0 0.0
    %214 = vmatpush1.msra.mxu0 %v189
    %215 = vmatprep.subr.mxu0 0.0
    %216 = vmatpush1.msra.mxu0 %v190
    %217 = vmatprep.subr.mxu0 0.0
    %218 = vmatpush1.msra.mxu0 %v191
    %219 = vmatprep.subr.mxu0 0.0
    %220 = vmatpush1.msra.mxu0 %v192
    %221 = vmatprep.subr.mxu0 0.0
    %222 = vmatpush1.msra.mxu0 %v193
    %223 = vmatprep.subr.mxu0 0.0
    %224 = vmatpush1.msra.mxu0 %v194
    %225 = vmatprep.subr.mxu0 0.0
    %226 = vmatpush1.msra.mxu0 %v195
    %227 = vmatprep.subr.mxu0 0.0
    %228 = vmatpush1.msra.mxu0 %v196
    %229 = vmatprep.subr.mxu0 0.0
    %230 = vmatpush1.msra.mxu0 0.0
    %231 = vmatprep.subr.mxu0 0.0
    %232 = vmatpush1.msra.mxu0 0.0
    %233 = vmatprep.subr.mxu0 0.0
    %234 = vmatpush1.msra.mxu0 0.0
    %235 = vmatprep.subr.mxu0 0.0
    %236 = vmatpush1.msra.mxu0 0.0
    %237 = vmatprep.subr.mxu0 0.0
    %238 = vmatpush1.msra.mxu0 0.0
    %239 = vmatprep.subr.mxu0 0.0
    %240 = vmatpush1.msra.mxu0 0.0
    %241 = vmatprep.subr.mxu0 0.0
    %242 = vmatpush1.msra.mxu0 0.0
    %243 = vmatprep.subr.mxu0 0.0
    %244 = vmatpush1.msra.mxu0 0.0
    %245 = vmatprep.subr.mxu0 0.0
    %246 = vmatpush1.msra.mxu0 0.0
    %247 = vmatprep.subr.mxu0 0.0
    %248 = vmatpush1.msra.mxu0 0.0
    %249 = vmatprep.subr.mxu0 0.0
    %250 = vmatpush1.msra.mxu0 0.0
    %251 = vmatprep.subr.mxu0 0.0
    %252 = vmatpush1.msra.mxu0 0.0
    %253 = vmatprep.subr.mxu0 0.0
    %254 = vmatpush1.msra.mxu0 0.0
    %255 = vmatprep.subr.mxu0 0.0
    %256 = vmatpush1.msra.mxu0 0.0
    %257 = vmatprep.subr.mxu0 0.0
    %258 = vmatpush1.msra.mxu0 0.0
    %259 = vmatprep.subr.mxu0 0.0
    %260 = vmatpush1.msra.mxu0 0.0
    %261 = vmatprep.mubr.f32.mxu0 0.0
    %262 = vmatmul.mubr.f32.gmra.mrb[0].mxu0 %v179
    %v263 = vpop.f32.mrb[0].mxu0
    %v264 = vadd.f32 0.0, %v263
    %v265 = vpop.f32.mrb[0].mxu0
    %266 = vdwg.mxu0
    %267 = vmatprep.subr.mxu0 0.0
    %268 = vmatpush1.msra.mxu0 %v155
    %269 = vmatprep.subr.mxu0 0.0
    %270 = vmatpush1.msra.mxu0 %v156
    %271 = vmatprep.subr.mxu0 0.0
    %272 = vmatpush1.msra.mxu0 %v157
    %273 = vmatprep.subr.mxu0 0.0
    %274 = vmatpush1.msra.mxu0 %v158
    %275 = vmatprep.subr.mxu0 0.0
    %276 = vmatpush1.msra.mxu0 %v159
    %277 = vmatprep.subr.mxu0 0.0
    %278 = vmatpush1.msra.mxu0 %v160
    %279 = vmatprep.subr.mxu0 0.0
    %280 = vmatpush1.msra.mxu0 %v161
    %281 = vmatprep.subr.mxu0 0.0
    %282 = vmatpush1.msra.mxu0 %v162
    %283 = vmatprep.subr.mxu0 0.0
    %284 = vmatpush1.msra.mxu0 %v163
    %285 = vmatprep.subr.mxu0 0.0
    %286 = vmatpush1.msra.mxu0 %v164
    %287 = vmatprep.subr.mxu0 0.0
    %288 = vmatpush1.msra.mxu0 %v165
    %289 = vmatprep.subr.mxu0 0.0
    %290 = vmatpush1.msra.mxu0 %v166
    %291 = vmatprep.subr.mxu0 0.0
    %292 = vmatpush1.msra.mxu0 %v167
    %293 = vmatprep.subr.mxu0 0.0
    %294 = vmatpush1.msra.mxu0 %v168
    %295 = vmatprep.subr.mxu0 0.0
    %296 = vmatpush1.msra.mxu0 %v169
    %297 = vmatprep.subr.mxu0 0.0
    %298 = vmatpush1.msra.mxu0 %v170
    %299 = vmatprep.subr.mxu0 0.0
    %300 = vmatpush1.msra.mxu0 0.0
    %301 = vmatprep.subr.mxu0 0.0
    %302 = vmatpush1.msra.mxu0 0.0
    %303 = vmatprep.subr.mxu0 0.0
    %304 = vmatpush1.msra.mxu0 0.0
    %305 = vmatprep.subr.mxu0 0.0
    %306 = vmatpush1.msra.mxu0 0.0
    %307 = vmatprep.subr.mxu0 0.0
    %308 = vmatpush1.msra.mxu0 0.0
    %309 = vmatprep.subr.mxu0 0.0
    %310 = vmatpush1.msra.mxu0 0.0
    %311 = vmatprep.subr.mxu0 0.0
    %312 = vmatpush1.msra.mxu0 0.0
    %313 = vmatprep.subr.mxu0 0.0
    %314 = vmatpush1.msra.mxu0 0.0
    %315 = vmatprep.subr.mxu0 0.0
    %316 = vmatpush1.msra.mxu0 0.0
    %317 = vmatprep.subr.mxu0 0.0
    %318 = vmatpush1.msra.mxu0 0.0
    %319 = vmatprep.subr.mxu0 0.0
    %320 = vmatpush1.msra.mxu0 0.0
    %321 = vmatprep.subr.mxu0 0.0
    %322 = vmatpush1.msra.mxu0 0.0
    %323 = vmatprep.subr.mxu0 0.0
    %324 = vmatpush1.msra.mxu0 0.0
    %325 = vmatprep.subr.mxu0 0.0
    %326 = vmatpush1.msra.mxu0 0.0
    %327 = vmatprep.subr.mxu0 0.0
    %328 = vmatpush1.msra.mxu0 0.0
    %329 = vmatprep.subr.mxu0 0.0
    %330 = vmatpush1.msra.mxu0 0.0
    %331 = vmatprep.mubr.f32.mxu0 0.0
    %332 = vmatmul.mubr.f32.gmra.mrb[0].mxu0 %v154
    %v333 = vpop.f32.mrb[0].mxu0
    %v334 = vadd.f32 %v264, %v333
    %v335 = vpop.f32.mrb[0].mxu0
    %336 = vdwg.mxu0
    %vm337 = vcmp.eq.s32.totalorder %v146, 4294967290
    %vm338 = vcmp.eq.s32.totalorder %v147, 44
    %vm339 = vmor %vm337, %vm338
    %v340 = vsel %vm339, 1, 0
    %v341 = vcvt.s32.f32 %v340
    %s342 = scalar_lea.vmem [#allocation7], 256
    %v343 = vld [vmem:[%s342] sm:$0xff]
    %v344 = vld [vmem:[%s342 + $0x8] sm:$0xff]
    %v345 = vld [vmem:[%s342 + $0x10] sm:$0xff]
    %v346 = vld [vmem:[%s342 + $0x18] sm:$0xff]
    %v347 = vld [vmem:[%s342 + $0x20] sm:$0xff]
    %v348 = vld [vmem:[%s342 + $0x28] sm:$0xff]
    %v349 = vld [vmem:[%s342 + $0x30] sm:$0xff]
    %v350 = vld [vmem:[%s342 + $0x38] sm:$0xff]
    %v351 = vld [vmem:[%s342 + $0x40] sm:$0xff]
    %v352 = vld [vmem:[%s342 + $0x48] sm:$0xff]
    %v353 = vld [vmem:[%s342 + $0x50] sm:$0xff]
    %v354 = vld [vmem:[%s342 + $0x58] sm:$0xff]
    %v355 = vld [vmem:[%s342 + $0x60] sm:$0xff]
    %v356 = vld [vmem:[%s342 + $0x68] sm:$0xff]
    %v357 = vld [vmem:[%s342 + $0x70] sm:$0xff]
    %v358 = vld [vmem:[%s342 + $0x78] sm:$0xff]
    %359 = vmatprep.subr.mxu0 0.0
    %360 = vmatpush1.msra.mxu0 %v343
    %361 = vmatprep.subr.mxu0 0.0
    %362 = vmatpush1.msra.mxu0 %v344
    %363 = vmatprep.subr.mxu0 0.0
    %364 = vmatpush1.msra.mxu0 %v345
    %365 = vmatprep.subr.mxu0 0.0
    %366 = vmatpush1.msra.mxu0 %v346
    %367 = vmatprep.subr.mxu0 0.0
    %368 = vmatpush1.msra.mxu0 %v347
    %369 = vmatprep.subr.mxu0 0.0
    %370 = vmatpush1.msra.mxu0 %v348
    %371 = vmatprep.subr.mxu0 0.0
    %372 = vmatpush1.msra.mxu0 %v349
    %373 = vmatprep.subr.mxu0 0.0
    %374 = vmatpush1.msra.mxu0 %v350
    %375 = vmatprep.subr.mxu0 0.0
    %376 = vmatpush1.msra.mxu0 %v351
    %377 = vmatprep.subr.mxu0 0.0
    %378 = vmatpush1.msra.mxu0 %v352
    %379 = vmatprep.subr.mxu0 0.0
    %380 = vmatpush1.msra.mxu0 %v353
    %381 = vmatprep.subr.mxu0 0.0
    %382 = vmatpush1.msra.mxu0 %v354
    %383 = vmatprep.subr.mxu0 0.0
    %384 = vmatpush1.msra.mxu0 %v355
    %385 = vmatprep.subr.mxu0 0.0
    %386 = vmatpush1.msra.mxu0 %v356
    %387 = vmatprep.subr.mxu0 0.0
    %388 = vmatpush1.msra.mxu0 %v357
    %389 = vmatprep.subr.mxu0 0.0
    %390 = vmatpush1.msra.mxu0 %v358
    %391 = vmatprep.subr.mxu0 0.0
    %392 = vmatpush1.msra.mxu0 0.0
    %393 = vmatprep.subr.mxu0 0.0
    %394 = vmatpush1.msra.mxu0 0.0
    %395 = vmatprep.subr.mxu0 0.0
    %396 = vmatpush1.msra.mxu0 0.0
    %397 = vmatprep.subr.mxu0 0.0
    %398 = vmatpush1.msra.mxu0 0.0
    %399 = vmatprep.subr.mxu0 0.0
    %400 = vmatpush1.msra.mxu0 0.0
    %401 = vmatprep.subr.mxu0 0.0
    %402 = vmatpush1.msra.mxu0 0.0
    %403 = vmatprep.subr.mxu0 0.0
    %404 = vmatpush1.msra.mxu0 0.0
    %405 = vmatprep.subr.mxu0 0.0
    %406 = vmatpush1.msra.mxu0 0.0
    %407 = vmatprep.subr.mxu0 0.0
    %408 = vmatpush1.msra.mxu0 0.0
    %409 = vmatprep.subr.mxu0 0.0
    %410 = vmatpush1.msra.mxu0 0.0
    %411 = vmatprep.subr.mxu0 0.0
    %412 = vmatpush1.msra.mxu0 0.0
    %413 = vmatprep.subr.mxu0 0.0
    %414 = vmatpush1.msra.mxu0 0.0
    %415 = vmatprep.subr.mxu0 0.0
    %416 = vmatpush1.msra.mxu0 0.0
    %417 = vmatprep.subr.mxu0 0.0
    %418 = vmatpush1.msra.mxu0 0.0
    %419 = vmatprep.subr.mxu0 0.0
    %420 = vmatpush1.msra.mxu0 0.0
    %421 = vmatprep.subr.mxu0 0.0
    %422 = vmatpush1.msra.mxu0 0.0
    %423 = vmatprep.mubr.f32.mxu0 0.0
    %424 = vmatmul.mubr.f32.gmra.mrb[0].mxu0 %v341
    %v425 = vpop.f32.mrb[0].mxu0
    %v426 = vadd.f32 0.0, %v425
    %v427 = vpop.f32.mrb[0].mxu0
    %428 = vdwg.mxu0
    %v429 = vadd.f32 %v334, %v426
    %v430 = vld [vmem:[%s97] sm:$0xff]
    %vm431 = vcmp.eq.s32.totalorder %v142, 0
    %vm432 = vcmp.eq.s32.totalorder %v143, 50
    %vm433 = vmor %vm431, %vm432
    %vm434 = vcmp.eq.s32.totalorder %v144, 100
    %vm435 = vmor %vm433, %vm434
    %v436 = vsel %vm435, 1, 0
    %v437 = vcvt.s32.f32 %v436
    %vm438 = vcmp.eq.s32.totalorder %v144, 4294967268
    %vm439 = vcmp.eq.s32.totalorder %v145, 22
    %vm440 = vmor %vm438, %vm439
    %vm441 = vcmp.eq.s32.totalorder %v146, 72
    %vm442 = vmor %vm440, %vm441
    %vm443 = vcmp.eq.s32.totalorder %v147, 122
    %vm444 = vmor %vm442, %vm443
    %v445 = vsel %vm444, 1, 0
    %v446 = vcvt.s32.f32 %v445
    %447 = vmatprep.subr.mxu0 0.0
    %448 = vmatpush1.msra.mxu0 %v181
    %449 = vmatprep.subr.mxu0 0.0
    %450 = vmatpush1.msra.mxu0 %v182
    %451 = vmatprep.subr.mxu0 0.0
    %452 = vmatpush1.msra.mxu0 %v183
    %453 = vmatprep.subr.mxu0 0.0
    %454 = vmatpush1.msra.mxu0 %v184
    %455 = vmatprep.subr.mxu0 0.0
    %456 = vmatpush1.msra.mxu0 %v185
    %457 = vmatprep.subr.mxu0 0.0
    %458 = vmatpush1.msra.mxu0 %v186
    %459 = vmatprep.subr.mxu0 0.0
    %460 = vmatpush1.msra.mxu0 %v187
    %461 = vmatprep.subr.mxu0 0.0
    %462 = vmatpush1.msra.mxu0 %v188
    %463 = vmatprep.subr.mxu0 0.0
    %464 = vmatpush1.msra.mxu0 %v189
    %465 = vmatprep.subr.mxu0 0.0
    %466 = vmatpush1.msra.mxu0 %v190
    %467 = vmatprep.subr.mxu0 0.0
    %468 = vmatpush1.msra.mxu0 %v191
    %469 = vmatprep.subr.mxu0 0.0
    %470 = vmatpush1.msra.mxu0 %v192
    %471 = vmatprep.subr.mxu0 0.0
    %472 = vmatpush1.msra.mxu0 %v193
    %473 = vmatprep.subr.mxu0 0.0
    %474 = vmatpush1.msra.mxu0 %v194
    %475 = vmatprep.subr.mxu0 0.0
    %476 = vmatpush1.msra.mxu0 %v195
    %477 = vmatprep.subr.mxu0 0.0
    %478 = vmatpush1.msra.mxu0 %v196
    %479 = vmatprep.subr.mxu0 0.0
    %480 = vmatpush1.msra.mxu0 0.0
    %481 = vmatprep.subr.mxu0 0.0
    %482 = vmatpush1.msra.mxu0 0.0
    %483 = vmatprep.subr.mxu0 0.0
    %484 = vmatpush1.msra.mxu0 0.0
    %485 = vmatprep.subr.mxu0 0.0
    %486 = vmatpush1.msra.mxu0 0.0
    %487 = vmatprep.subr.mxu0 0.0
    %488 = vmatpush1.msra.mxu0 0.0
    %489 = vmatprep.subr.mxu0 0.0
    %490 = vmatpush1.msra.mxu0 0.0
    %491 = vmatprep.subr.mxu0 0.0
    %492 = vmatpush1.msra.mxu0 0.0
    %493 = vmatprep.subr.mxu0 0.0
    %494 = vmatpush1.msra.mxu0 0.0
    %495 = vmatprep.subr.mxu0 0.0
    %496 = vmatpush1.msra.mxu0 0.0
    %497 = vmatprep.subr.mxu0 0.0
    %498 = vmatpush1.msra.mxu0 0.0
    %499 = vmatprep.subr.mxu0 0.0
    %500 = vmatpush1.msra.mxu0 0.0
    %501 = vmatprep.subr.mxu0 0.0
    %502 = vmatpush1.msra.mxu0 0.0
    %503 = vmatprep.subr.mxu0 0.0
    %504 = vmatpush1.msra.mxu0 0.0
    %505 = vmatprep.subr.mxu0 0.0
    %506 = vmatpush1.msra.mxu0 0.0
    %507 = vmatprep.subr.mxu0 0.0
    %508 = vmatpush1.msra.mxu0 0.0
    %509 = vmatprep.subr.mxu0 0.0
    %510 = vmatpush1.msra.mxu0 0.0
    %511 = vmatprep.mubr.f32.mxu0 0.0
    %512 = vmatmul.mubr.f32.gmra.mrb[0].mxu0 %v446
    %v513 = vpop.f32.mrb[0].mxu0
    %v514 = vadd.f32 0.0, %v513
    %v515 = vpop.f32.mrb[0].mxu0
    %516 = vdwg.mxu0
    %517 = vmatprep.subr.mxu0 0.0
    %518 = vmatpush1.msra.mxu0 %v155
    %519 = vmatprep.subr.mxu0 0.0
    %520 = vmatpush1.msra.mxu0 %v156
    %521 = vmatprep.subr.mxu0 0.0
    %522 = vmatpush1.msra.mxu0 %v157
    %523 = vmatprep.subr.mxu0 0.0
    %524 = vmatpush1.msra.mxu0 %v158
    %525 = vmatprep.subr.mxu0 0.0
    %526 = vmatpush1.msra.mxu0 %v159
    %527 = vmatprep.subr.mxu0 0.0
    %528 = vmatpush1.msra.mxu0 %v160
    %529 = vmatprep.subr.mxu0 0.0
    %530 = vmatpush1.msra.mxu0 %v161
    %531 = vmatprep.subr.mxu0 0.0
    %532 = vmatpush1.msra.mxu0 %v162
    %533 = vmatprep.subr.mxu0 0.0
    %534 = vmatpush1.msra.mxu0 %v163
    %535 = vmatprep.subr.mxu0 0.0
    %536 = vmatpush1.msra.mxu0 %v164
    %537 = vmatprep.subr.mxu0 0.0
    %538 = vmatpush1.msra.mxu0 %v165
    %539 = vmatprep.subr.mxu0 0.0
    %540 = vmatpush1.msra.mxu0 %v166
    %541 = vmatprep.subr.mxu0 0.0
    %542 = vmatpush1.msra.mxu0 %v167
    %543 = vmatprep.subr.mxu0 0.0
    %544 = vmatpush1.msra.mxu0 %v168
    %545 = vmatprep.subr.mxu0 0.0
    %546 = vmatpush1.msra.mxu0 %v169
    %547 = vmatprep.subr.mxu0 0.0
    %548 = vmatpush1.msra.mxu0 %v170
    %549 = vmatprep.subr.mxu0 0.0
    %550 = vmatpush1.msra.mxu0 0.0
    %551 = vmatprep.subr.mxu0 0.0
    %552 = vmatpush1.msra.mxu0 0.0
    %553 = vmatprep.subr.mxu0 0.0
    %554 = vmatpush1.msra.mxu0 0.0
    %555 = vmatprep.subr.mxu0 0.0
    %556 = vmatpush1.msra.mxu0 0.0
    %557 = vmatprep.subr.mxu0 0.0
    %558 = vmatpush1.msra.mxu0 0.0
    %559 = vmatprep.subr.mxu0 0.0
    %560 = vmatpush1.msra.mxu0 0.0
    %561 = vmatprep.subr.mxu0 0.0
    %562 = vmatpush1.msra.mxu0 0.0
    %563 = vmatprep.subr.mxu0 0.0
    %564 = vmatpush1.msra.mxu0 0.0
    %565 = vmatprep.subr.mxu0 0.0
    %566 = vmatpush1.msra.mxu0 0.0
    %567 = vmatprep.subr.mxu0 0.0
    %568 = vmatpush1.msra.mxu0 0.0
    %569 = vmatprep.subr.mxu0 0.0
    %570 = vmatpush1.msra.mxu0 0.0
    %571 = vmatprep.subr.mxu0 0.0
    %572 = vmatpush1.msra.mxu0 0.0
    %573 = vmatprep.subr.mxu0 0.0
    %574 = vmatpush1.msra.mxu0 0.0
    %575 = vmatprep.subr.mxu0 0.0
    %576 = vmatpush1.msra.mxu0 0.0
    %577 = vmatprep.subr.mxu0 0.0
    %578 = vmatpush1.msra.mxu0 0.0
    %579 = vmatprep.subr.mxu0 0.0
    %580 = vmatpush1.msra.mxu0 0.0
    %581 = vmatprep.mubr.f32.mxu0 0.0
    %582 = vmatmul.mubr.f32.gmra.mrb[0].mxu0 %v437
    %v583 = vpop.f32.mrb[0].mxu0
    %v584 = vadd.f32 %v514, %v583
    %v585 = vpop.f32.mrb[0].mxu0
    %586 = vdwg.mxu0
    %vm587 = vcmp.eq.s32.totalorder %v147, 4294967290
    %vm588 = vcmp.eq.s32.totalorder %v430, 44
    %vm589 = vmor %vm587, %vm588
    %v590 = vsel %vm589, 1, 0
    %v591 = vcvt.s32.f32 %v590
    %592 = vmatprep.subr.mxu0 0.0
    %593 = vmatpush1.msra.mxu0 %v343
    %594 = vmatprep.subr.mxu0 0.0
    %595 = vmatpush1.msra.mxu0 %v344
    %596 = vmatprep.subr.mxu0 0.0
    %597 = vmatpush1.msra.mxu0 %v345
    %598 = vmatprep.subr.mxu0 0.0
    %599 = vmatpush1.msra.mxu0 %v346
    %600 = vmatprep.subr.mxu0 0.0
    %601 = vmatpush1.msra.mxu0 %v347
    %602 = vmatprep.subr.mxu0 0.0
    %603 = vmatpush1.msra.mxu0 %v348
    %604 = vmatprep.subr.mxu0 0.0
    %605 = vmatpush1.msra.mxu0 %v349
    %606 = vmatprep.subr.mxu0 0.0
    %607 = vmatpush1.msra.mxu0 %v350
    %608 = vmatprep.subr.mxu0 0.0
    %609 = vmatpush1.msra.mxu0 %v351
    %610 = vmatprep.subr.mxu0 0.0
    %611 = vmatpush1.msra.mxu0 %v352
    %612 = vmatprep.subr.mxu0 0.0
    %613 = vmatpush1.msra.mxu0 %v353
    %614 = vmatprep.subr.mxu0 0.0
    %615 = vmatpush1.msra.mxu0 %v354
    %616 = vmatprep.subr.mxu0 0.0
    %617 = vmatpush1.msra.mxu0 %v355
    %618 = vmatprep.subr.mxu0 0.0
    %619 = vmatpush1.msra.mxu0 %v356
    %620 = vmatprep.subr.mxu0 0.0
    %621 = vmatpush1.msra.mxu0 %v357
    %622 = vmatprep.subr.mxu0 0.0
    %623 = vmatpush1.msra.mxu0 %v358
    %624 = vmatprep.subr.mxu0 0.0
    %625 = vmatpush1.msra.mxu0 0.0
    %626 = vmatprep.subr.mxu0 0.0
    %627 = vmatpush1.msra.mxu0 0.0
    %628 = vmatprep.subr.mxu0 0.0
    %629 = vmatpush1.msra.mxu0 0.0
    %630 = vmatprep.subr.mxu0 0.0
    %631 = vmatpush1.msra.mxu0 0.0
    %632 = vmatprep.subr.mxu0 0.0
    %633 = vmatpush1.msra.mxu0 0.0
    %634 = vmatprep.subr.mxu0 0.0
    %635 = vmatpush1.msra.mxu0 0.0
    %636 = vmatprep.subr.mxu0 0.0
    %637 = vmatpush1.msra.mxu0 0.0
    %638 = vmatprep.subr.mxu0 0.0
    %639 = vmatpush1.msra.mxu0 0.0
    %640 = vmatprep.subr.mxu0 0.0
    %641 = vmatpush1.msra.mxu0 0.0
    %642 = vmatprep.subr.mxu0 0.0
    %643 = vmatpush1.msra.mxu0 0.0
    %644 = vmatprep.subr.mxu0 0.0
    %645 = vmatpush1.msra.mxu0 0.0
    %646 = vmatprep.subr.mxu0 0.0
    %647 = vmatpush1.msra.mxu0 0.0
    %648 = vmatprep.subr.mxu0 0.0
    %649 = vmatpush1.msra.mxu0 0.0
    %650 = vmatprep.subr.mxu0 0.0
    %651 = vmatpush1.msra.mxu0 0.0
    %652 = vmatprep.subr.mxu0 0.0
    %653 = vmatpush1.msra.mxu0 0.0
    %654 = vmatprep.subr.mxu0 0.0
    %655 = vmatpush1.msra.mxu0 0.0
    %656 = vmatprep.mubr.f32.mxu0 0.0
    %657 = vmatmul.mubr.f32.gmra.mrb[0].mxu0 %v591
    %v658 = vpop.f32.mrb[0].mxu0
    %v659 = vadd.f32 0.0, %v658
    %v660 = vpop.f32.mrb[0].mxu0
    %661 = vdwg.mxu0
    %v662 = vadd.f32 %v584, %v659
    %v663 = vmax.f32 %v429, %v662
    %v664 = vld [vmem:[%s103] sm:$0xff]
    %vm665 = vcmp.eq.s32.totalorder %v143, 0
    %vm666 = vcmp.eq.s32.totalorder %v144, 50
    %vm667 = vmor %vm665, %vm666
    %vm668 = vcmp.eq.s32.totalorder %v145, 100
    %vm669 = vmor %vm667, %vm668
    %v670 = vsel %vm669, 1, 0
    %v671 = vcvt.s32.f32 %v670
    %vm672 = vcmp.eq.s32.totalorder %v145, 4294967268
    %vm673 = vcmp.eq.s32.totalorder %v146, 22
    %vm674 = vmor %vm672, %vm673
    %vm675 = vcmp.eq.s32.totalorder %v147, 72
    %vm676 = vmor %vm674, %vm675
    %vm677 = vcmp.eq.s32.totalorder %v430, 122
    %vm678 = vmor %vm676, %vm677
    %v679 = vsel %vm678, 1, 0
    %v680 = vcvt.s32.f32 %v679
    %681 = vmatprep.subr.mxu0 0.0
    %682 = vmatpush1.msra.mxu0 %v181
    %683 = vmatprep.subr.mxu0 0.0
    %684 = vmatpush1.msra.mxu0 %v182
    %685 = vmatprep.subr.mxu0 0.0
    %686 = vmatpush1.msra.mxu0 %v183
    %687 = vmatprep.subr.mxu0 0.0
    %688 = vmatpush1.msra.mxu0 %v184
    %689 = vmatprep.subr.mxu0 0.0
    %690 = vmatpush1.msra.mxu0 %v185
    %691 = vmatprep.subr.mxu0 0.0
    %692 = vmatpush1.msra.mxu0 %v186
    %693 = vmatprep.subr.mxu0 0.0
    %694 = vmatpush1.msra.mxu0 %v187
    %695 = vmatprep.subr.mxu0 0.0
    %696 = vmatpush1.msra.mxu0 %v188
    %697 = vmatprep.subr.mxu0 0.0
    %698 = vmatpush1.msra.mxu0 %v189
    %699 = vmatprep.subr.mxu0 0.0
    %700 = vmatpush1.msra.mxu0 %v190
    %701 = vmatprep.subr.mxu0 0.0
    %702 = vmatpush1.msra.mxu0 %v191
    %703 = vmatprep.subr.mxu0 0.0
    %704 = vmatpush1.msra.mxu0 %v192
    %705 = vmatprep.subr.mxu0 0.0
    %706 = vmatpush1.msra.mxu0 %v193
    %707 = vmatprep.subr.mxu0 0.0
    %708 = vmatpush1.msra.mxu0 %v194
    %709 = vmatprep.subr.mxu0 0.0
    %710 = vmatpush1.msra.mxu0 %v195
    %711 = vmatprep.subr.mxu0 0.0
    %712 = vmatpush1.msra.mxu0 %v196
    %713 = vmatprep.subr.mxu0 0.0
    %714 = vmatpush1.msra.mxu0 0.0
    %715 = vmatprep.subr.mxu0 0.0
    %716 = vmatpush1.msra.mxu0 0.0
    %717 = vmatprep.subr.mxu0 0.0
    %718 = vmatpush1.msra.mxu0 0.0
    %719 = vmatprep.subr.mxu0 0.0
    %720 = vmatpush1.msra.mxu0 0.0
    %721 = vmatprep.subr.mxu0 0.0
    %722 = vmatpush1.msra.mxu0 0.0
    %723 = vmatprep.subr.mxu0 0.0
    %724 = vmatpush1.msra.mxu0 0.0
    %725 = vmatprep.subr.mxu0 0.0
    %726 = vmatpush1.msra.mxu0 0.0
    %727 = vmatprep.subr.mxu0 0.0
    %728 = vmatpush1.msra.mxu0 0.0
    %729 = vmatprep.subr.mxu0 0.0
    %730 = vmatpush1.msra.mxu0 0.0
    %731 = vmatprep.subr.mxu0 0.0
    %732 = vmatpush1.msra.mxu0 0.0
    %733 = vmatprep.subr.mxu0 0.0
    %734 = vmatpush1.msra.mxu0 0.0
    %735 = vmatprep.subr.mxu0 0.0
    %736 = vmatpush1.msra.mxu0 0.0
    %737 = vmatprep.subr.mxu0 0.0
    %738 = vmatpush1.msra.mxu0 0.0
    %739 = vmatprep.subr.mxu0 0.0
    %740 = vmatpush1.msra.mxu0 0.0
    %741 = vmatprep.subr.mxu0 0.0
    %742 = vmatpush1.msra.mxu0 0.0
    %743 = vmatprep.subr.mxu0 0.0
    %744 = vmatpush1.msra.mxu0 0.0
    %745 = vmatprep.mubr.f32.mxu0 0.0
    %746 = vmatmul.mubr.f32.gmra.mrb[0].mxu0 %v680
    %v747 = vpop.f32.mrb[0].mxu0
    %v748 = vadd.f32 0.0, %v747
    %v749 = vpop.f32.mrb[0].mxu0
    %750 = vdwg.mxu0
    %751 = vmatprep.subr.mxu0 0.0
    %752 = vmatpush1.msra.mxu0 %v155
    %753 = vmatprep.subr.mxu0 0.0
    %754 = vmatpush1.msra.mxu0 %v156
    %755 = vmatprep.subr.mxu0 0.0
    %756 = vmatpush1.msra.mxu0 %v157
    %757 = vmatprep.subr.mxu0 0.0
    %758 = vmatpush1.msra.mxu0 %v158
    %759 = vmatprep.subr.mxu0 0.0
    %760 = vmatpush1.msra.mxu0 %v159
    %761 = vmatprep.subr.mxu0 0.0
    %762 = vmatpush1.msra.mxu0 %v160
    %763 = vmatprep.subr.mxu0 0.0
    %764 = vmatpush1.msra.mxu0 %v161
    %765 = vmatprep.subr.mxu0 0.0
    %766 = vmatpush1.msra.mxu0 %v162
    %767 = vmatprep.subr.mxu0 0.0
    %768 = vmatpush1.msra.mxu0 %v163
    %769 = vmatprep.subr.mxu0 0.0
    %770 = vmatpush1.msra.mxu0 %v164
    %771 = vmatprep.subr.mxu0 0.0
    %772 = vmatpush1.msra.mxu0 %v165
    %773 = vmatprep.subr.mxu0 0.0
    %774 = vmatpush1.msra.mxu0 %v166
    %775 = vmatprep.subr.mxu0 0.0
    %776 = vmatpush1.msra.mxu0 %v167
    %777 = vmatprep.subr.mxu0 0.0
    %778 = vmatpush1.msra.mxu0 %v168
    %779 = vmatprep.subr.mxu0 0.0
    %780 = vmatpush1.msra.mxu0 %v169
    %781 = vmatprep.subr.mxu0 0.0
    %782 = vmatpush1.msra.mxu0 %v170
    %783 = vmatprep.subr.mxu0 0.0
    %784 = vmatpush1.msra.mxu0 0.0
    %785 = vmatprep.subr.mxu0 0.0
    %786 = vmatpush1.msra.mxu0 0.0
    %787 = vmatprep.subr.mxu0 0.0
    %788 = vmatpush1.msra.mxu0 0.0
    %789 = vmatprep.subr.mxu0 0.0
    %790 = vmatpush1.msra.mxu0 0.0
    %791 = vmatprep.subr.mxu0 0.0
    %792 = vmatpush1.msra.mxu0 0.0
    %793 = vmatprep.subr.mxu0 0.0
    %794 = vmatpush1.msra.mxu0 0.0
    %795 = vmatprep.subr.mxu0 0.0
    %796 = vmatpush1.msra.mxu0 0.0
    %797 = vmatprep.subr.mxu0 0.0
    %798 = vmatpush1.msra.mxu0 0.0
    %799 = vmatprep.subr.mxu0 0.0
    %800 = vmatpush1.msra.mxu0 0.0
    %801 = vmatprep.subr.mxu0 0.0
    %802 = vmatpush1.msra.mxu0 0.0
    %803 = vmatprep.subr.mxu0 0.0
    %804 = vmatpush1.msra.mxu0 0.0
    %805 = vmatprep.subr.mxu0 0.0
    %806 = vmatpush1.msra.mxu0 0.0
    %807 = vmatprep.subr.mxu0 0.0
    %808 = vmatpush1.msra.mxu0 0.0
    %809 = vmatprep.subr.mxu0 0.0
    %810 = vmatpush1.msra.mxu0 0.0
    %811 = vmatprep.subr.mxu0 0.0
    %812 = vmatpush1.msra.mxu0 0.0
    %813 = vmatprep.subr.mxu0 0.0
    %814 = vmatpush1.msra.mxu0 0.0
    %815 = vmatprep.mubr.f32.mxu0 0.0
    %816 = vmatmul.mubr.f32.gmra.mrb[0].mxu0 %v671
    %v817 = vpop.f32.mrb[0].mxu0
    %v818 = vadd.f32 %v748, %v817
    %v819 = vpop.f32.mrb[0].mxu0
    %820 = vdwg.mxu0
    %vm821 = vcmp.eq.s32.totalorder %v430, 4294967290
    %vm822 = vcmp.eq.s32.totalorder %v664, 44
    %vm823 = vmor %vm821, %vm822
    %v824 = vsel %vm823, 1, 0
    %v825 = vcvt.s32.f32 %v824
    %826 = vmatprep.subr.mxu0 0.0
    %827 = vmatpush1.msra.mxu0 %v343
    %828 = vmatprep.subr.mxu0 0.0
    %829 = vmatpush1.msra.mxu0 %v344
    %830 = vmatprep.subr.mxu0 0.0
    %831 = vmatpush1.msra.mxu0 %v345
    %832 = vmatprep.subr.mxu0 0.0
    %833 = vmatpush1.msra.mxu0 %v346
    %834 = vmatprep.subr.mxu0 0.0
    %835 = vmatpush1.msra.mxu0 %v347
    %836 = vmatprep.subr.mxu0 0.0
    %837 = vmatpush1.msra.mxu0 %v348
    %838 = vmatprep.subr.mxu0 0.0
    %839 = vmatpush1.msra.mxu0 %v349
    %840 = vmatprep.subr.mxu0 0.0
    %841 = vmatpush1.msra.mxu0 %v350
    %842 = vmatprep.subr.mxu0 0.0
    %843 = vmatpush1.msra.mxu0 %v351
    %844 = vmatprep.subr.mxu0 0.0
    %845 = vmatpush1.msra.mxu0 %v352
    %846 = vmatprep.subr.mxu0 0.0
    %847 = vmatpush1.msra.mxu0 %v353
    %848 = vmatprep.subr.mxu0 0.0
    %849 = vmatpush1.msra.mxu0 %v354
    %850 = vmatprep.subr.mxu0 0.0
    %851 = vmatpush1.msra.mxu0 %v355
    %852 = vmatprep.subr.mxu0 0.0
    %853 = vmatpush1.msra.mxu0 %v356
    %854 = vmatprep.subr.mxu0 0.0
    %855 = vmatpush1.msra.mxu0 %v357
    %856 = vmatprep.subr.mxu0 0.0
    %857 = vmatpush1.msra.mxu0 %v358
    %858 = vmatprep.subr.mxu0 0.0
    %859 = vmatpush1.msra.mxu0 0.0
    %860 = vmatprep.subr.mxu0 0.0
    %861 = vmatpush1.msra.mxu0 0.0
    %862 = vmatprep.subr.mxu0 0.0
    %863 = vmatpush1.msra.mxu0 0.0
    %864 = vmatprep.subr.mxu0 0.0
    %865 = vmatpush1.msra.mxu0 0.0
    %866 = vmatprep.subr.mxu0 0.0
    %867 = vmatpush1.msra.mxu0 0.0
    %868 = vmatprep.subr.mxu0 0.0
    %869 = vmatpush1.msra.mxu0 0.0
    %870 = vmatprep.subr.mxu0 0.0
    %871 = vmatpush1.msra.mxu0 0.0
    %872 = vmatprep.subr.mxu0 0.0
    %873 = vmatpush1.msra.mxu0 0.0
    %874 = vmatprep.subr.mxu0 0.0
    %875 = vmatpush1.msra.mxu0 0.0
    %876 = vmatprep.subr.mxu0 0.0
    %877 = vmatpush1.msra.mxu0 0.0
    %878 = vmatprep.subr.mxu0 0.0
    %879 = vmatpush1.msra.mxu0 0.0
    %880 = vmatprep.subr.mxu0 0.0
    %881 = vmatpush1.msra.mxu0 0.0
    %882 = vmatprep.subr.mxu0 0.0
    %883 = vmatpush1.msra.mxu0 0.0
    %884 = vmatprep.subr.mxu0 0.0
    %885 = vmatpush1.msra.mxu0 0.0
    %886 = vmatprep.subr.mxu0 0.0
    %887 = vmatpush1.msra.mxu0 0.0
    %888 = vmatprep.subr.mxu0 0.0
    %889 = vmatpush1.msra.mxu0 0.0
    %890 = vmatprep.mubr.f32.mxu0 0.0
    %891 = vmatmul.mubr.f32.gmra.mrb[0].mxu0 %v825
    %v892 = vpop.f32.mrb[0].mxu0
    %v893 = vadd.f32 0.0, %v892
    %v894 = vpop.f32.mrb[0].mxu0
    %895 = vdwg.mxu0
    %v896 = vadd.f32 %v818, %v893
    %v897 = vmax.f32 %v663, %v896
    %v898 = vld [vmem:[%s109] sm:$0xff]
    %vm899 = vcmp.eq.s32.totalorder %v144, 0
    %vm900 = vcmp.eq.s32.totalorder %v145, 50
    %vm901 = vmor %vm899, %vm900
    %vm902 = vcmp.eq.s32.totalorder %v146, 100
    %vm903 = vmor %vm901, %vm902
    %v904 = vsel %vm903, 1, 0
    %v905 = vcvt.s32.f32 %v904
    %vm906 = vcmp.eq.s32.totalorder %v146, 4294967268
    %vm907 = vcmp.eq.s32.totalorder %v147, 22
    %vm908 = vmor %vm906, %vm907
    %vm909 = vcmp.eq.s32.totalorder %v430, 72
    %vm910 = vmor %vm908, %vm909
    %vm911 = vcmp.eq.s32.totalorder %v664, 122
    %vm912 = vmor %vm910, %vm911
    %v913 = vsel %vm912, 1, 0
    %v914 = vcvt.s32.f32 %v913
    %915 = vmatprep.subr.mxu0 0.0
    %916 = vmatpush1.msra.mxu0 %v181
    %917 = vmatprep.subr.mxu0 0.0
    %918 = vmatpush1.msra.mxu0 %v182
    %919 = vmatprep.subr.mxu0 0.0
    %920 = vmatpush1.msra.mxu0 %v183
    %921 = vmatprep.subr.mxu0 0.0
    %922 = vmatpush1.msra.mxu0 %v184
    %923 = vmatprep.subr.mxu0 0.0
    %924 = vmatpush1.msra.mxu0 %v185
    %925 = vmatprep.subr.mxu0 0.0
    %926 = vmatpush1.msra.mxu0 %v186
    %927 = vmatprep.subr.mxu0 0.0
    %928 = vmatpush1.msra.mxu0 %v187
    %929 = vmatprep.subr.mxu0 0.0
    %930 = vmatpush1.msra.mxu0 %v188
    %931 = vmatprep.subr.mxu0 0.0
    %932 = vmatpush1.msra.mxu0 %v189
    %933 = vmatprep.subr.mxu0 0.0
    %934 = vmatpush1.msra.mxu0 %v190
    %935 = vmatprep.subr.mxu0 0.0
    %936 = vmatpush1.msra.mxu0 %v191
    %937 = vmatprep.subr.mxu0 0.0
    %938 = vmatpush1.msra.mxu0 %v192
    %939 = vmatprep.subr.mxu0 0.0
    %940 = vmatpush1.msra.mxu0 %v193
    %941 = vmatprep.subr.mxu0 0.0
    %942 = vmatpush1.msra.mxu0 %v194
    %943 = vmatprep.subr.mxu0 0.0
    %944 = vmatpush1.msra.mxu0 %v195
    %945 = vmatprep.subr.mxu0 0.0
    %946 = vmatpush1.msra.mxu0 %v196
    %947 = vmatprep.subr.mxu0 0.0
    %948 = vmatpush1.msra.mxu0 0.0
    %949 = vmatprep.subr.mxu0 0.0
    %950 = vmatpush1.msra.mxu0 0.0
    %951 = vmatprep.subr.mxu0 0.0
    %952 = vmatpush1.msra.mxu0 0.0
    %953 = vmatprep.subr.mxu0 0.0
    %954 = vmatpush1.msra.mxu0 0.0
    %955 = vmatprep.subr.mxu0 0.0
    %956 = vmatpush1.msra.mxu0 0.0
    %957 = vmatprep.subr.mxu0 0.0
    %958 = vmatpush1.msra.mxu0 0.0
    %959 = vmatprep.subr.mxu0 0.0
    %960 = vmatpush1.msra.mxu0 0.0
    %961 = vmatprep.subr.mxu0 0.0
    %962 = vmatpush1.msra.mxu0 0.0
    %963 = vmatprep.subr.mxu0 0.0
    %964 = vmatpush1.msra.mxu0 0.0
    %965 = vmatprep.subr.mxu0 0.0
    %966 = vmatpush1.msra.mxu0 0.0
    %967 = vmatprep.subr.mxu0 0.0
    %968 = vmatpush1.msra.mxu0 0.0
    %969 = vmatprep.subr.mxu0 0.0
    %970 = vmatpush1.msra.mxu0 0.0
    %971 = vmatprep.subr.mxu0 0.0
    %972 = vmatpush1.msra.mxu0 0.0
    %973 = vmatprep.subr.mxu0 0.0
    %974 = vmatpush1.msra.mxu0 0.0
    %975 = vmatprep.subr.mxu0 0.0
    %976 = vmatpush1.msra.mxu0 0.0
    %977 = vmatprep.subr.mxu0 0.0
    %978 = vmatpush1.msra.mxu0 0.0
    %979 = vmatprep.mubr.f32.mxu0 0.0
    %980 = vmatmul.mubr.f32.gmra.mrb[0].mxu0 %v914
    %v981 = vpop.f32.mrb[0].mxu0
    %v982 = vadd.f32 0.0, %v981
    %v983 = vpop.f32.mrb[0].mxu0
    %984 = vdwg.mxu0
    %985 = vmatprep.subr.mxu0 0.0
    %986 = vmatpush1.msra.mxu0 %v155
    %987 = vmatprep.subr.mxu0 0.0
    %988 = vmatpush1.msra.mxu0 %v156
    %989 = vmatprep.subr.mxu0 0.0
    %990 = vmatpush1.msra.mxu0 %v157
    %991 = vmatprep.subr.mxu0 0.0
    %992 = vmatpush1.msra.mxu0 %v158
    %993 = vmatprep.subr.mxu0 0.0
    %994 = vmatpush1.msra.mxu0 %v159
    %995 = vmatprep.subr.mxu0 0.0
    %996 = vmatpush1.msra.mxu0 %v160
    %997 = vmatprep.subr.mxu0 0.0
    %998 = vmatpush1.msra.mxu0 %v161
    %999 = vmatprep.subr.mxu0 0.0
    %1000 = vmatpush1.msra.mxu0 %v162
    %1001 = vmatprep.subr.mxu0 0.0
    %1002 = vmatpush1.msra.mxu0 %v163
    %1003 = vmatprep.subr.mxu0 0.0
    %1004 = vmatpush1.msra.mxu0 %v164
    %1005 = vmatprep.subr.mxu0 0.0
    %1006 = vmatpush1.msra.mxu0 %v165
    %1007 = vmatprep.subr.mxu0 0.0
    %1008 = vmatpush1.msra.mxu0 %v166
    %1009 = vmatprep.subr.mxu0 0.0
    %1010 = vmatpush1.msra.mxu0 %v167
    %1011 = vmatprep.subr.mxu0 0.0
    %1012 = vmatpush1.msra.mxu0 %v168
    %1013 = vmatprep.subr.mxu0 0.0
    %1014 = vmatpush1.msra.mxu0 %v169
    %1015 = vmatprep.subr.mxu0 0.0
    %1016 = vmatpush1.msra.mxu0 %v170
    %1017 = vmatprep.subr.mxu0 0.0
    %1018 = vmatpush1.msra.mxu0 0.0
    %1019 = vmatprep.subr.mxu0 0.0
    %1020 = vmatpush1.msra.mxu0 0.0
    %1021 = vmatprep.subr.mxu0 0.0
    %1022 = vmatpush1.msra.mxu0 0.0
    %1023 = vmatprep.subr.mxu0 0.0
    %1024 = vmatpush1.msra.mxu0 0.0
    %1025 = vmatprep.subr.mxu0 0.0
    %1026 = vmatpush1.msra.mxu0 0.0
    %1027 = vmatprep.subr.mxu0 0.0
    %1028 = vmatpush1.msra.mxu0 0.0
    %1029 = vmatprep.subr.mxu0 0.0
    %1030 = vmatpush1.msra.mxu0 0.0
    %1031 = vmatprep.subr.mxu0 0.0
    %1032 = vmatpush1.msra.mxu0 0.0
    %1033 = vmatprep.subr.mxu0 0.0
    %1034 = vmatpush1.msra.mxu0 0.0
    %1035 = vmatprep.subr.mxu0 0.0
    %1036 = vmatpush1.msra.mxu0 0.0
    %1037 = vmatprep.subr.mxu0 0.0
    %1038 = vmatpush1.msra.mxu0 0.0
    %1039 = vmatprep.subr.mxu0 0.0
    %1040 = vmatpush1.msra.mxu0 0.0
    %1041 = vmatprep.subr.mxu0 0.0
    %1042 = vmatpush1.msra.mxu0 0.0
    %1043 = vmatprep.subr.mxu0 0.0
    %1044 = vmatpush1.msra.mxu0 0.0
    %1045 = vmatprep.subr.mxu0 0.0
    %1046 = vmatpush1.msra.mxu0 0.0
    %1047 = vmatprep.subr.mxu0 0.0
    %1048 = vmatpush1.msra.mxu0 0.0
    %1049 = vmatprep.mubr.f32.mxu0 0.0
    %1050 = vmatmul.mubr.f32.gmra.mrb[0].mxu0 %v905
    %v1051 = vpop.f32.mrb[0].mxu0
    %v1052 = vadd.f32 %v982, %v1051
    %v1053 = vpop.f32.mrb[0].mxu0
    %1054 = vdwg.mxu0
    %vm1055 = vcmp.eq.s32.totalorder %v664, 4294967290
    %vm1056 = vcmp.eq.s32.totalorder %v898, 44
    %vm1057 = vmor %vm1055, %vm1056
    %v1058 = vsel %vm1057, 1, 0
    %v1059 = vcvt.s32.f32 %v1058
    %1060 = vmatprep.subr.mxu0 0.0
    %1061 = vmatpush1.msra.mxu0 %v343
    %1062 = vmatprep.subr.mxu0 0.0
    %1063 = vmatpush1.msra.mxu0 %v344
    %1064 = vmatprep.subr.mxu0 0.0
    %1065 = vmatpush1.msra.mxu0 %v345
    %1066 = vmatprep.subr.mxu0 0.0
    %1067 = vmatpush1.msra.mxu0 %v346
    %1068 = vmatprep.subr.mxu0 0.0
    %1069 = vmatpush1.msra.mxu0 %v347
    %1070 = vmatprep.subr.mxu0 0.0
    %1071 = vmatpush1.msra.mxu0 %v348
    %1072 = vmatprep.subr.mxu0 0.0
    %1073 = vmatpush1.msra.mxu0 %v349
    %1074 = vmatprep.subr.mxu0 0.0
    %1075 = vmatpush1.msra.mxu0 %v350
    %1076 = vmatprep.subr.mxu0 0.0
    %1077 = vmatpush1.msra.mxu0 %v351
    %1078 = vmatprep.subr.mxu0 0.0
    %1079 = vmatpush1.msra.mxu0 %v352
    %1080 = vmatprep.subr.mxu0 0.0
    %1081 = vmatpush1.msra.mxu0 %v353
    %1082 = vmatprep.subr.mxu0 0.0
    %1083 = vmatpush1.msra.mxu0 %v354
    %1084 = vmatprep.subr.mxu0 0.0
    %1085 = vmatpush1.msra.mxu0 %v355
    %1086 = vmatprep.subr.mxu0 0.0
    %1087 = vmatpush1.msra.mxu0 %v356
    %1088 = vmatprep.subr.mxu0 0.0
    %1089 = vmatpush1.msra.mxu0 %v357
    %1090 = vmatprep.subr.mxu0 0.0
    %1091 = vmatpush1.msra.mxu0 %v358
    %1092 = vmatprep.subr.mxu0 0.0
    %1093 = vmatpush1.msra.mxu0 0.0
    %1094 = vmatprep.subr.mxu0 0.0
    %1095 = vmatpush1.msra.mxu0 0.0
    %1096 = vmatprep.subr.mxu0 0.0
    %1097 = vmatpush1.msra.mxu0 0.0
    %1098 = vmatprep.subr.mxu0 0.0
    %1099 = vmatpush1.msra.mxu0 0.0
    %1100 = vmatprep.subr.mxu0 0.0
    %1101 = vmatpush1.msra.mxu0 0.0
    %1102 = vmatprep.subr.mxu0 0.0
    %1103 = vmatpush1.msra.mxu0 0.0
    %1104 = vmatprep.subr.mxu0 0.0
    %1105 = vmatpush1.msra.mxu0 0.0
    %1106 = vmatprep.subr.mxu0 0.0
    %1107 = vmatpush1.msra.mxu0 0.0
    %1108 = vmatprep.subr.mxu0 0.0
    %1109 = vmatpush1.msra.mxu0 0.0
    %1110 = vmatprep.subr.mxu0 0.0
    %1111 = vmatpush1.msra.mxu0 0.0
    %1112 = vmatprep.subr.mxu0 0.0
    %1113 = vmatpush1.msra.mxu0 0.0
    %1114 = vmatprep.subr.mxu0 0.0
    %1115 = vmatpush1.msra.mxu0 0.0
    %1116 = vmatprep.subr.mxu0 0.0
    %1117 = vmatpush1.msra.mxu0 0.0
    %1118 = vmatprep.subr.mxu0 0.0
    %1119 = vmatpush1.msra.mxu0 0.0
    %1120 = vmatprep.subr.mxu0 0.0
    %1121 = vmatpush1.msra.mxu0 0.0
    %1122 = vmatprep.subr.mxu0 0.0
    %1123 = vmatpush1.msra.mxu0 0.0
    %1124 = vmatprep.mubr.f32.mxu0 0.0
    %1125 = vmatmul.mubr.f32.gmra.mrb[0].mxu0 %v1059
    %v1126 = vpop.f32.mrb[0].mxu0
    %v1127 = vadd.f32 0.0, %v1126
    %v1128 = vpop.f32.mrb[0].mxu0
    %1129 = vdwg.mxu0
    %v1130 = vadd.f32 %v1052, %v1127
    %v1131 = vmax.f32 %v897, %v1130
    %v1132 = vld [vmem:[%s115] sm:$0xff]
    %vm1133 = vcmp.eq.s32.totalorder %v145, 0
    %vm1134 = vcmp.eq.s32.totalorder %v146, 50
    %vm1135 = vmor %vm1133, %vm1134
    %vm1136 = vcmp.eq.s32.totalorder %v147, 100
    %vm1137 = vmor %vm1135, %vm1136
    %v1138 = vsel %vm1137, 1, 0
    %v1139 = vcvt.s32.f32 %v1138
    %vm1140 = vcmp.eq.s32.totalorder %v147, 4294967268
    %vm1141 = vcmp.eq.s32.totalorder %v430, 22
    %vm1142 = vmor %vm1140, %vm1141
    %vm1143 = vcmp.eq.s32.totalorder %v664, 72
    %vm1144 = vmor %vm1142, %vm1143
    %vm1145 = vcmp.eq.s32.totalorder %v898, 122
    %vm1146 = vmor %vm1144, %vm1145
    %v1147 = vsel %vm1146, 1, 0
    %v1148 = vcvt.s32.f32 %v1147
    %1149 = vmatprep.subr.mxu0 0.0
    %1150 = vmatpush1.msra.mxu0 %v181
    %1151 = vmatprep.subr.mxu0 0.0
    %1152 = vmatpush1.msra.mxu0 %v182
    %1153 = vmatprep.subr.mxu0 0.0
    %1154 = vmatpush1.msra.mxu0 %v183
    %1155 = vmatprep.subr.mxu0 0.0
    %1156 = vmatpush1.msra.mxu0 %v184
    %1157 = vmatprep.subr.mxu0 0.0
    %1158 = vmatpush1.msra.mxu0 %v185
    %1159 = vmatprep.subr.mxu0 0.0
    %1160 = vmatpush1.msra.mxu0 %v186
    %1161 = vmatprep.subr.mxu0 0.0
    %1162 = vmatpush1.msra.mxu0 %v187
    %1163 = vmatprep.subr.mxu0 0.0
    %1164 = vmatpush1.msra.mxu0 %v188
    %1165 = vmatprep.subr.mxu0 0.0
    %1166 = vmatpush1.msra.mxu0 %v189
    %1167 = vmatprep.subr.mxu0 0.0
    %1168 = vmatpush1.msra.mxu0 %v190
    %1169 = vmatprep.subr.mxu0 0.0
    %1170 = vmatpush1.msra.mxu0 %v191
    %1171 = vmatprep.subr.mxu0 0.0
    %1172 = vmatpush1.msra.mxu0 %v192
    %1173 = vmatprep.subr.mxu0 0.0
    %1174 = vmatpush1.msra.mxu0 %v193
    %1175 = vmatprep.subr.mxu0 0.0
    %1176 = vmatpush1.msra.mxu0 %v194
    %1177 = vmatprep.subr.mxu0 0.0
    %1178 = vmatpush1.msra.mxu0 %v195
    %1179 = vmatprep.subr.mxu0 0.0
    %1180 = vmatpush1.msra.mxu0 %v196
    %1181 = vmatprep.subr.mxu0 0.0
    %1182 = vmatpush1.msra.mxu0 0.0
    %1183 = vmatprep.subr.mxu0 0.0
    %1184 = vmatpush1.msra.mxu0 0.0
    %1185 = vmatprep.subr.mxu0 0.0
    %1186 = vmatpush1.msra.mxu0 0.0
    %1187 = vmatprep.subr.mxu0 0.0
    %1188 = vmatpush1.msra.mxu0 0.0
    %1189 = vmatprep.subr.mxu0 0.0
    %1190 = vmatpush1.msra.mxu0 0.0
    %1191 = vmatprep.subr.mxu0 0.0
    %1192 = vmatpush1.msra.mxu0 0.0
    %1193 = vmatprep.subr.mxu0 0.0
    %1194 = vmatpush1.msra.mxu0 0.0
    %1195 = vmatprep.subr.mxu0 0.0
    %1196 = vmatpush1.msra.mxu0 0.0
    %1197 = vmatprep.subr.mxu0 0.0
    %1198 = vmatpush1.msra.mxu0 0.0
    %1199 = vmatprep.subr.mxu0 0.0
    %1200 = vmatpush1.msra.mxu0 0.0
    %1201 = vmatprep.subr.mxu0 0.0
    %1202 = vmatpush1.msra.mxu0 0.0
    %1203 = vmatprep.subr.mxu0 0.0
    %1204 = vmatpush1.msra.mxu0 0.0
    %1205 = vmatprep.subr.mxu0 0.0
    %1206 = vmatpush1.msra.mxu0 0.0
    %1207 = vmatprep.subr.mxu0 0.0
    %1208 = vmatpush1.msra.mxu0 0.0
    %1209 = vmatprep.subr.mxu0 0.0
    %1210 = vmatpush1.msra.mxu0 0.0
    %1211 = vmatprep.subr.mxu0 0.0
    %1212 = vmatpush1.msra.mxu0 0.0
    %1213 = vmatprep.mubr.f32.mxu0 0.0
    %1214 = vmatmul.mubr.f32.gmra.mrb[0].mxu0 %v1148
    %v1215 = vpop.f32.mrb[0].mxu0
    %v1216 = vadd.f32 0.0, %v1215
    %v1217 = vpop.f32.mrb[0].mxu0
    %1218 = vdwg.mxu0
    %1219 = vmatprep.subr.mxu0 0.0
    %1220 = vmatpush1.msra.mxu0 %v155
    %1221 = vmatprep.subr.mxu0 0.0
    %1222 = vmatpush1.msra.mxu0 %v156
    %1223 = vmatprep.subr.mxu0 0.0
    %1224 = vmatpush1.msra.mxu0 %v157
    %1225 = vmatprep.subr.mxu0 0.0
    %1226 = vmatpush1.msra.mxu0 %v158
    %1227 = vmatprep.subr.mxu0 0.0
    %1228 = vmatpush1.msra.mxu0 %v159
    %1229 = vmatprep.subr.mxu0 0.0
    %1230 = vmatpush1.msra.mxu0 %v160
    %1231 = vmatprep.subr.mxu0 0.0
    %1232 = vmatpush1.msra.mxu0 %v161
    %1233 = vmatprep.subr.mxu0 0.0
    %1234 = vmatpush1.msra.mxu0 %v162
    %1235 = vmatprep.subr.mxu0 0.0
    %1236 = vmatpush1.msra.mxu0 %v163
    %1237 = vmatprep.subr.mxu0 0.0
    %1238 = vmatpush1.msra.mxu0 %v164
    %1239 = vmatprep.subr.mxu0 0.0
    %1240 = vmatpush1.msra.mxu0 %v165
    %1241 = vmatprep.subr.mxu0 0.0
    %1242 = vmatpush1.msra.mxu0 %v166
    %1243 = vmatprep.subr.mxu0 0.0
    %1244 = vmatpush1.msra.mxu0 %v167
    %1245 = vmatprep.subr.mxu0 0.0
    %1246 = vmatpush1.msra.mxu0 %v168
    %1247 = vmatprep.subr.mxu0 0.0
    %1248 = vmatpush1.msra.mxu0 %v169
    %1249 = vmatprep.subr.mxu0 0.0
    %1250 = vmatpush1.msra.mxu0 %v170
    %1251 = vmatprep.subr.mxu0 0.0
    %1252 = vmatpush1.msra.mxu0 0.0
    %1253 = vmatprep.subr.mxu0 0.0
    %1254 = vmatpush1.msra.mxu0 0.0
    %1255 = vmatprep.subr.mxu0 0.0
    %1256 = vmatpush1.msra.mxu0 0.0
    %1257 = vmatprep.subr.mxu0 0.0
    %1258 = vmatpush1.msra.mxu0 0.0
    %1259 = vmatprep.subr.mxu0 0.0
    %1260 = vmatpush1.msra.mxu0 0.0
    %1261 = vmatprep.subr.mxu0 0.0
    %1262 = vmatpush1.msra.mxu0 0.0
    %1263 = vmatprep.subr.mxu0 0.0
    %1264 = vmatpush1.msra.mxu0 0.0
    %1265 = vmatprep.subr.mxu0 0.0
    %1266 = vmatpush1.msra.mxu0 0.0
    %1267 = vmatprep.subr.mxu0 0.0
    %1268 = vmatpush1.msra.mxu0 0.0
    %1269 = vmatprep.subr.mxu0 0.0
    %1270 = vmatpush1.msra.mxu0 0.0
    %1271 = vmatprep.subr.mxu0 0.0
    %1272 = vmatpush1.msra.mxu0 0.0
    %1273 = vmatprep.subr.mxu0 0.0
    %1274 = vmatpush1.msra.mxu0 0.0
    %1275 = vmatprep.subr.mxu0 0.0
    %1276 = vmatpush1.msra.mxu0 0.0
    %1277 = vmatprep.subr.mxu0 0.0
    %1278 = vmatpush1.msra.mxu0 0.0
    %1279 = vmatprep.subr.mxu0 0.0
    %1280 = vmatpush1.msra.mxu0 0.0
    %1281 = vmatprep.subr.mxu0 0.0
    %1282 = vmatpush1.msra.mxu0 0.0
    %1283 = vmatprep.mubr.f32.mxu0 0.0
    %1284 = vmatmul.mubr.f32.gmra.mrb[0].mxu0 %v1139
    %v1285 = vpop.f32.mrb[0].mxu0
    %v1286 = vadd.f32 %v1216, %v1285
    %v1287 = vpop.f32.mrb[0].mxu0
    %1288 = vdwg.mxu0
    %vm1289 = vcmp.eq.s32.totalorder %v898, 4294967290
    %vm1290 = vcmp.eq.s32.totalorder %v1132, 44
    %vm1291 = vmor %vm1289, %vm1290
    %v1292 = vsel %vm1291, 1, 0
    %v1293 = vcvt.s32.f32 %v1292
    %1294 = vmatprep.subr.mxu0 0.0
    %1295 = vmatpush1.msra.mxu0 %v343
    %1296 = vmatprep.subr.mxu0 0.0
    %1297 = vmatpush1.msra.mxu0 %v344
    %1298 = vmatprep.subr.mxu0 0.0
    %1299 = vmatpush1.msra.mxu0 %v345
    %1300 = vmatprep.subr.mxu0 0.0
    %1301 = vmatpush1.msra.mxu0 %v346
    %1302 = vmatprep.subr.mxu0 0.0
    %1303 = vmatpush1.msra.mxu0 %v347
    %1304 = vmatprep.subr.mxu0 0.0
    %1305 = vmatpush1.msra.mxu0 %v348
    %1306 = vmatprep.subr.mxu0 0.0
    %1307 = vmatpush1.msra.mxu0 %v349
    %1308 = vmatprep.subr.mxu0 0.0
    %1309 = vmatpush1.msra.mxu0 %v350
    %1310 = vmatprep.subr.mxu0 0.0
    %1311 = vmatpush1.msra.mxu0 %v351
    %1312 = vmatprep.subr.mxu0 0.0
    %1313 = vmatpush1.msra.mxu0 %v352
    %1314 = vmatprep.subr.mxu0 0.0
    %1315 = vmatpush1.msra.mxu0 %v353
    %1316 = vmatprep.subr.mxu0 0.0
    %1317 = vmatpush1.msra.mxu0 %v354
    %1318 = vmatprep.subr.mxu0 0.0
    %1319 = vmatpush1.msra.mxu0 %v355
    %1320 = vmatprep.subr.mxu0 0.0
    %1321 = vmatpush1.msra.mxu0 %v356
    %1322 = vmatprep.subr.mxu0 0.0
    %1323 = vmatpush1.msra.mxu0 %v357
    %1324 = vmatprep.subr.mxu0 0.0
    %1325 = vmatpush1.msra.mxu0 %v358
    %1326 = vmatprep.subr.mxu0 0.0
    %1327 = vmatpush1.msra.mxu0 0.0
    %1328 = vmatprep.subr.mxu0 0.0
    %1329 = vmatpush1.msra.mxu0 0.0
    %1330 = vmatprep.subr.mxu0 0.0
    %1331 = vmatpush1.msra.mxu0 0.0
    %1332 = vmatprep.subr.mxu0 0.0
    %1333 = vmatpush1.msra.mxu0 0.0
    %1334 = vmatprep.subr.mxu0 0.0
    %1335 = vmatpush1.msra.mxu0 0.0
    %1336 = vmatprep.subr.mxu0 0.0
    %1337 = vmatpush1.msra.mxu0 0.0
    %1338 = vmatprep.subr.mxu0 0.0
    %1339 = vmatpush1.msra.mxu0 0.0
    %1340 = vmatprep.subr.mxu0 0.0
    %1341 = vmatpush1.msra.mxu0 0.0
    %1342 = vmatprep.subr.mxu0 0.0
    %1343 = vmatpush1.msra.mxu0 0.0
    %1344 = vmatprep.subr.mxu0 0.0
    %1345 = vmatpush1.msra.mxu0 0.0
    %1346 = vmatprep.subr.mxu0 0.0
    %1347 = vmatpush1.msra.mxu0 0.0
    %1348 = vmatprep.subr.mxu0 0.0
    %1349 = vmatpush1.msra.mxu0 0.0
    %1350 = vmatprep.subr.mxu0 0.0
    %1351 = vmatpush1.msra.mxu0 0.0
    %1352 = vmatprep.subr.mxu0 0.0
    %1353 = vmatpush1.msra.mxu0 0.0
    %1354 = vmatprep.subr.mxu0 0.0
    %1355 = vmatpush1.msra.mxu0 0.0
    %1356 = vmatprep.subr.mxu0 0.0
    %1357 = vmatpush1.msra.mxu0 0.0
    %1358 = vmatprep.mubr.f32.mxu0 0.0
    %1359 = vmatmul.mubr.f32.gmra.mrb[0].mxu0 %v1293
    %v1360 = vpop.f32.mrb[0].mxu0
    %v1361 = vadd.f32 0.0, %v1360
    %v1362 = vpop.f32.mrb[0].mxu0
    %1363 = vdwg.mxu0
    %v1364 = vadd.f32 %v1286, %v1361
    %v1365 = vmax.f32 %v1131, %v1364
    %v1366 = vld [vmem:[%s121] sm:$0xff]
    %vm1367 = vcmp.eq.s32.totalorder %v146, 0
    %vm1368 = vcmp.eq.s32.totalorder %v147, 50
    %vm1369 = vmor %vm1367, %vm1368
    %vm1370 = vcmp.eq.s32.totalorder %v430, 100
    %vm1371 = vmor %vm1369, %vm1370
    %v1372 = vsel %vm1371, 1, 0
    %v1373 = vcvt.s32.f32 %v1372
    %vm1374 = vcmp.eq.s32.totalorder %v430, 4294967268
    %vm1375 = vcmp.eq.s32.totalorder %v664, 22
    %vm1376 = vmor %vm1374, %vm1375
    %vm1377 = vcmp.eq.s32.totalorder %v898, 72
    %vm1378 = vmor %vm1376, %vm1377
    %vm1379 = vcmp.eq.s32.totalorder %v1132, 122
    %vm1380 = vmor %vm1378, %vm1379
    %v1381 = vsel %vm1380, 1, 0
    %v1382 = vcvt.s32.f32 %v1381
    %1383 = vmatprep.subr.mxu0 0.0
    %1384 = vmatpush1.msra.mxu0 %v181
    %1385 = vmatprep.subr.mxu0 0.0
    %1386 = vmatpush1.msra.mxu0 %v182
    %1387 = vmatprep.subr.mxu0 0.0
    %1388 = vmatpush1.msra.mxu0 %v183
    %1389 = vmatprep.subr.mxu0 0.0
    %1390 = vmatpush1.msra.mxu0 %v184
    %1391 = vmatprep.subr.mxu0 0.0
    %1392 = vmatpush1.msra.mxu0 %v185
    %1393 = vmatprep.subr.mxu0 0.0
    %1394 = vmatpush1.msra.mxu0 %v186
    %1395 = vmatprep.subr.mxu0 0.0
    %1396 = vmatpush1.msra.mxu0 %v187
    %1397 = vmatprep.subr.mxu0 0.0
    %1398 = vmatpush1.msra.mxu0 %v188
    %1399 = vmatprep.subr.mxu0 0.0
    %1400 = vmatpush1.msra.mxu0 %v189
    %1401 = vmatprep.subr.mxu0 0.0
    %1402 = vmatpush1.msra.mxu0 %v190
    %1403 = vmatprep.subr.mxu0 0.0
    %1404 = vmatpush1.msra.mxu0 %v191
    %1405 = vmatprep.subr.mxu0 0.0
    %1406 = vmatpush1.msra.mxu0 %v192
    %1407 = vmatprep.subr.mxu0 0.0
    %1408 = vmatpush1.msra.mxu0 %v193
    %1409 = vmatprep.subr.mxu0 0.0
    %1410 = vmatpush1.msra.mxu0 %v194
    %1411 = vmatprep.subr.mxu0 0.0
    %1412 = vmatpush1.msra.mxu0 %v195
    %1413 = vmatprep.subr.mxu0 0.0
    %1414 = vmatpush1.msra.mxu0 %v196
    %1415 = vmatprep.subr.mxu0 0.0
    %1416 = vmatpush1.msra.mxu0 0.0
    %1417 = vmatprep.subr.mxu0 0.0
    %1418 = vmatpush1.msra.mxu0 0.0
    %1419 = vmatprep.subr.mxu0 0.0
    %1420 = vmatpush1.msra.mxu0 0.0
    %1421 = vmatprep.subr.mxu0 0.0
    %1422 = vmatpush1.msra.mxu0 0.0
    %1423 = vmatprep.subr.mxu0 0.0
    %1424 = vmatpush1.msra.mxu0 0.0
    %1425 = vmatprep.subr.mxu0 0.0
    %1426 = vmatpush1.msra.mxu0 0.0
    %1427 = vmatprep.subr.mxu0 0.0
    %1428 = vmatpush1.msra.mxu0 0.0
    %1429 = vmatprep.subr.mxu0 0.0
    %1430 = vmatpush1.msra.mxu0 0.0
    %1431 = vmatprep.subr.mxu0 0.0
    %1432 = vmatpush1.msra.mxu0 0.0
    %1433 = vmatprep.subr.mxu0 0.0
    %1434 = vmatpush1.msra.mxu0 0.0
    %1435 = vmatprep.subr.mxu0 0.0
    %1436 = vmatpush1.msra.mxu0 0.0
    %1437 = vmatprep.subr.mxu0 0.0
    %1438 = vmatpush1.msra.mxu0 0.0
    %1439 = vmatprep.subr.mxu0 0.0
    %1440 = vmatpush1.msra.mxu0 0.0
    %1441 = vmatprep.subr.mxu0 0.0
    %1442 = vmatpush1.msra.mxu0 0.0
    %1443 = vmatprep.subr.mxu0 0.0
    %1444 = vmatpush1.msra.mxu0 0.0
    %1445 = vmatprep.subr.mxu0 0.0
    %1446 = vmatpush1.msra.mxu0 0.0
    %1447 = vmatprep.mubr.f32.mxu0 0.0
    %1448 = vmatmul.mubr.f32.gmra.mrb[0].mxu0 %v1382
    %v1449 = vpop.f32.mrb[0].mxu0
    %v1450 = vadd.f32 0.0, %v1449
    %v1451 = vpop.f32.mrb[0].mxu0
    %1452 = vdwg.mxu0
    %1453 = vmatprep.subr.mxu0 0.0
    %1454 = vmatpush1.msra.mxu0 %v155
    %1455 = vmatprep.subr.mxu0 0.0
    %1456 = vmatpush1.msra.mxu0 %v156
    %1457 = vmatprep.subr.mxu0 0.0
    %1458 = vmatpush1.msra.mxu0 %v157
    %1459 = vmatprep.subr.mxu0 0.0
    %1460 = vmatpush1.msra.mxu0 %v158
    %1461 = vmatprep.subr.mxu0 0.0
    %1462 = vmatpush1.msra.mxu0 %v159
    %1463 = vmatprep.subr.mxu0 0.0
    %1464 = vmatpush1.msra.mxu0 %v160
    %1465 = vmatprep.subr.mxu0 0.0
    %1466 = vmatpush1.msra.mxu0 %v161
    %1467 = vmatprep.subr.mxu0 0.0
    %1468 = vmatpush1.msra.mxu0 %v162
    %1469 = vmatprep.subr.mxu0 0.0
    %1470 = vmatpush1.msra.mxu0 %v163
    %1471 = vmatprep.subr.mxu0 0.0
    %1472 = vmatpush1.msra.mxu0 %v164
    %1473 = vmatprep.subr.mxu0 0.0
    %1474 = vmatpush1.msra.mxu0 %v165
    %1475 = vmatprep.subr.mxu0 0.0
    %1476 = vmatpush1.msra.mxu0 %v166
    %1477 = vmatprep.subr.mxu0 0.0
    %1478 = vmatpush1.msra.mxu0 %v167
    %1479 = vmatprep.subr.mxu0 0.0
    %1480 = vmatpush1.msra.mxu0 %v168
    %1481 = vmatprep.subr.mxu0 0.0
    %1482 = vmatpush1.msra.mxu0 %v169
    %1483 = vmatprep.subr.mxu0 0.0
    %1484 = vmatpush1.msra.mxu0 %v170
    %1485 = vmatprep.subr.mxu0 0.0
    %1486 = vmatpush1.msra.mxu0 0.0
    %1487 = vmatprep.subr.mxu0 0.0
    %1488 = vmatpush1.msra.mxu0 0.0
    %1489 = vmatprep.subr.mxu0 0.0
    %1490 = vmatpush1.msra.mxu0 0.0
    %1491 = vmatprep.subr.mxu0 0.0
    %1492 = vmatpush1.msra.mxu0 0.0
    %1493 = vmatprep.subr.mxu0 0.0
    %1494 = vmatpush1.msra.mxu0 0.0
    %1495 = vmatprep.subr.mxu0 0.0
    %1496 = vmatpush1.msra.mxu0 0.0
    %1497 = vmatprep.subr.mxu0 0.0
    %1498 = vmatpush1.msra.mxu0 0.0
    %1499 = vmatprep.subr.mxu0 0.0
    %1500 = vmatpush1.msra.mxu0 0.0
    %1501 = vmatprep.subr.mxu0 0.0
    %1502 = vmatpush1.msra.mxu0 0.0
    %1503 = vmatprep.subr.mxu0 0.0
    %1504 = vmatpush1.msra.mxu0 0.0
    %1505 = vmatprep.subr.mxu0 0.0
    %1506 = vmatpush1.msra.mxu0 0.0
    %1507 = vmatprep.subr.mxu0 0.0
    %1508 = vmatpush1.msra.mxu0 0.0
    %1509 = vmatprep.subr.mxu0 0.0
    %1510 = vmatpush1.msra.mxu0 0.0
    %1511 = vmatprep.subr.mxu0 0.0
    %1512 = vmatpush1.msra.mxu0 0.0
    %1513 = vmatprep.subr.mxu0 0.0
    %1514 = vmatpush1.msra.mxu0 0.0
    %1515 = vmatprep.subr.mxu0 0.0
    %1516 = vmatpush1.msra.mxu0 0.0
    %1517 = vmatprep.mubr.f32.mxu0 0.0
    %1518 = vmatmul.mubr.f32.gmra.mrb[0].mxu0 %v1373
    %v1519 = vpop.f32.mrb[0].mxu0
    %v1520 = vadd.f32 %v1450, %v1519
    %v1521 = vpop.f32.mrb[0].mxu0
    %1522 = vdwg.mxu0
    %vm1523 = vcmp.eq.s32.totalorder %v1132, 4294967290
    %vm1524 = vcmp.eq.s32.totalorder %v1366, 44
    %vm1525 = vmor %vm1523, %vm1524
    %v1526 = vsel %vm1525, 1, 0
    %v1527 = vcvt.s32.f32 %v1526
    %1528 = vmatprep.subr.mxu0 0.0
    %1529 = vmatpush1.msra.mxu0 %v343
    %1530 = vmatprep.subr.mxu0 0.0
    %1531 = vmatpush1.msra.mxu0 %v344
    %1532 = vmatprep.subr.mxu0 0.0
    %1533 = vmatpush1.msra.mxu0 %v345
    %1534 = vmatprep.subr.mxu0 0.0
    %1535 = vmatpush1.msra.mxu0 %v346
    %1536 = vmatprep.subr.mxu0 0.0
    %1537 = vmatpush1.msra.mxu0 %v347
    %1538 = vmatprep.subr.mxu0 0.0
    %1539 = vmatpush1.msra.mxu0 %v348
    %1540 = vmatprep.subr.mxu0 0.0
    %1541 = vmatpush1.msra.mxu0 %v349
    %1542 = vmatprep.subr.mxu0 0.0
    %1543 = vmatpush1.msra.mxu0 %v350
    %1544 = vmatprep.subr.mxu0 0.0
    %1545 = vmatpush1.msra.mxu0 %v351
    %1546 = vmatprep.subr.mxu0 0.0
    %1547 = vmatpush1.msra.mxu0 %v352
    %1548 = vmatprep.subr.mxu0 0.0
    %1549 = vmatpush1.msra.mxu0 %v353
    %1550 = vmatprep.subr.mxu0 0.0
    %1551 = vmatpush1.msra.mxu0 %v354
    %1552 = vmatprep.subr.mxu0 0.0
    %1553 = vmatpush1.msra.mxu0 %v355
    %1554 = vmatprep.subr.mxu0 0.0
    %1555 = vmatpush1.msra.mxu0 %v356
    %1556 = vmatprep.subr.mxu0 0.0
    %1557 = vmatpush1.msra.mxu0 %v357
    %1558 = vmatprep.subr.mxu0 0.0
    %1559 = vmatpush1.msra.mxu0 %v358
    %1560 = vmatprep.subr.mxu0 0.0
    %1561 = vmatpush1.msra.mxu0 0.0
    %1562 = vmatprep.subr.mxu0 0.0
    %1563 = vmatpush1.msra.mxu0 0.0
    %1564 = vmatprep.subr.mxu0 0.0
    %1565 = vmatpush1.msra.mxu0 0.0
    %1566 = vmatprep.subr.mxu0 0.0
    %1567 = vmatpush1.msra.mxu0 0.0
    %1568 = vmatprep.subr.mxu0 0.0
    %1569 = vmatpush1.msra.mxu0 0.0
    %1570 = vmatprep.subr.mxu0 0.0
    %1571 = vmatpush1.msra.mxu0 0.0
    %1572 = vmatprep.subr.mxu0 0.0
    %1573 = vmatpush1.msra.mxu0 0.0
    %1574 = vmatprep.subr.mxu0 0.0
    %1575 = vmatpush1.msra.mxu0 0.0
    %1576 = vmatprep.subr.mxu0 0.0
    %1577 = vmatpush1.msra.mxu0 0.0
    %1578 = vmatprep.subr.mxu0 0.0
    %1579 = vmatpush1.msra.mxu0 0.0
    %1580 = vmatprep.subr.mxu0 0.0
    %1581 = vmatpush1.msra.mxu0 0.0
    %1582 = vmatprep.subr.mxu0 0.0
    %1583 = vmatpush1.msra.mxu0 0.0
    %1584 = vmatprep.subr.mxu0 0.0
    %1585 = vmatpush1.msra.mxu0 0.0
    %1586 = vmatprep.subr.mxu0 0.0
    %1587 = vmatpush1.msra.mxu0 0.0
    %1588 = vmatprep.subr.mxu0 0.0
    %1589 = vmatpush1.msra.mxu0 0.0
    %1590 = vmatprep.subr.mxu0 0.0
    %1591 = vmatpush1.msra.mxu0 0.0
    %1592 = vmatprep.mubr.f32.mxu0 0.0
    %1593 = vmatmul.mubr.f32.gmra.mrb[0].mxu0 %v1527
    %v1594 = vpop.f32.mrb[0].mxu0
    %v1595 = vadd.f32 0.0, %v1594
    %v1596 = vpop.f32.mrb[0].mxu0
    %1597 = vdwg.mxu0
    %v1598 = vadd.f32 %v1520, %v1595
    %v1599 = vmax.f32 %v1365, %v1598
    %v1600 = vld [vmem:[%s127] sm:$0xff]
    %vm1601 = vcmp.eq.s32.totalorder %v147, 0
    %vm1602 = vcmp.eq.s32.totalorder %v430, 50
    %vm1603 = vmor %vm1601, %vm1602
    %vm1604 = vcmp.eq.s32.totalorder %v664, 100
    %vm1605 = vmor %vm1603, %vm1604
    %v1606 = vsel %vm1605, 1, 0
    %v1607 = vcvt.s32.f32 %v1606
    %vm1608 = vcmp.eq.s32.totalorder %v664, 4294967268
    %vm1609 = vcmp.eq.s32.totalorder %v898, 22
    %vm1610 = vmor %vm1608, %vm1609
    %vm1611 = vcmp.eq.s32.totalorder %v1132, 72
    %vm1612 = vmor %vm1610, %vm1611
    %vm1613 = vcmp.eq.s32.totalorder %v1366, 122
    %vm1614 = vmor %vm1612, %vm1613
    %v1615 = vsel %vm1614, 1, 0
    %v1616 = vcvt.s32.f32 %v1615
    %1617 = vmatprep.subr.mxu0 0.0
    %1618 = vmatpush1.msra.mxu0 %v181
    %1619 = vmatprep.subr.mxu0 0.0
    %1620 = vmatpush1.msra.mxu0 %v182
    %1621 = vmatprep.subr.mxu0 0.0
    %1622 = vmatpush1.msra.mxu0 %v183
    %1623 = vmatprep.subr.mxu0 0.0
    %1624 = vmatpush1.msra.mxu0 %v184
    %1625 = vmatprep.subr.mxu0 0.0
    %1626 = vmatpush1.msra.mxu0 %v185
    %1627 = vmatprep.subr.mxu0 0.0
    %1628 = vmatpush1.msra.mxu0 %v186
    %1629 = vmatprep.subr.mxu0 0.0
    %1630 = vmatpush1.msra.mxu0 %v187
    %1631 = vmatprep.subr.mxu0 0.0
    %1632 = vmatpush1.msra.mxu0 %v188
    %1633 = vmatprep.subr.mxu0 0.0
    %1634 = vmatpush1.msra.mxu0 %v189
    %1635 = vmatprep.subr.mxu0 0.0
    %1636 = vmatpush1.msra.mxu0 %v190
    %1637 = vmatprep.subr.mxu0 0.0
    %1638 = vmatpush1.msra.mxu0 %v191
    %1639 = vmatprep.subr.mxu0 0.0
    %1640 = vmatpush1.msra.mxu0 %v192
    %1641 = vmatprep.subr.mxu0 0.0
    %1642 = vmatpush1.msra.mxu0 %v193
    %1643 = vmatprep.subr.mxu0 0.0
    %1644 = vmatpush1.msra.mxu0 %v194
    %1645 = vmatprep.subr.mxu0 0.0
    %1646 = vmatpush1.msra.mxu0 %v195
    %1647 = vmatprep.subr.mxu0 0.0
    %1648 = vmatpush1.msra.mxu0 %v196
    %1649 = vmatprep.subr.mxu0 0.0
    %1650 = vmatpush1.msra.mxu0 0.0
    %1651 = vmatprep.subr.mxu0 0.0
    %1652 = vmatpush1.msra.mxu0 0.0
    %1653 = vmatprep.subr.mxu0 0.0
    %1654 = vmatpush1.msra.mxu0 0.0
    %1655 = vmatprep.subr.mxu0 0.0
    %1656 = vmatpush1.msra.mxu0 0.0
    %1657 = vmatprep.subr.mxu0 0.0
    %1658 = vmatpush1.msra.mxu0 0.0
    %1659 = vmatprep.subr.mxu0 0.0
    %1660 = vmatpush1.msra.mxu0 0.0
    %1661 = vmatprep.subr.mxu0 0.0
    %1662 = vmatpush1.msra.mxu0 0.0
    %1663 = vmatprep.subr.mxu0 0.0
    %1664 = vmatpush1.msra.mxu0 0.0
    %1665 = vmatprep.subr.mxu0 0.0
    %1666 = vmatpush1.msra.mxu0 0.0
    %1667 = vmatprep.subr.mxu0 0.0
    %1668 = vmatpush1.msra.mxu0 0.0
    %1669 = vmatprep.subr.mxu0 0.0
    %1670 = vmatpush1.msra.mxu0 0.0
    %1671 = vmatprep.subr.mxu0 0.0
    %1672 = vmatpush1.msra.mxu0 0.0
    %1673 = vmatprep.subr.mxu0 0.0
    %1674 = vmatpush1.msra.mxu0 0.0
    %1675 = vmatprep.subr.mxu0 0.0
    %1676 = vmatpush1.msra.mxu0 0.0
    %1677 = vmatprep.subr.mxu0 0.0
    %1678 = vmatpush1.msra.mxu0 0.0
    %1679 = vmatprep.subr.mxu0 0.0
    %1680 = vmatpush1.msra.mxu0 0.0
    %1681 = vmatprep.mubr.f32.mxu0 0.0
    %1682 = vmatmul.mubr.f32.gmra.mrb[0].mxu0 %v1616
    %v1683 = vpop.f32.mrb[0].mxu0
    %v1684 = vadd.f32 0.0, %v1683
    %v1685 = vpop.f32.mrb[0].mxu0
    %1686 = vdwg.mxu0
    %1687 = vmatprep.subr.mxu0 0.0
    %1688 = vmatpush1.msra.mxu0 %v155
    %1689 = vmatprep.subr.mxu0 0.0
    %1690 = vmatpush1.msra.mxu0 %v156
    %1691 = vmatprep.subr.mxu0 0.0
    %1692 = vmatpush1.msra.mxu0 %v157
    %1693 = vmatprep.subr.mxu0 0.0
    %1694 = vmatpush1.msra.mxu0 %v158
    %1695 = vmatprep.subr.mxu0 0.0
    %1696 = vmatpush1.msra.mxu0 %v159
    %1697 = vmatprep.subr.mxu0 0.0
    %1698 = vmatpush1.msra.mxu0 %v160
    %1699 = vmatprep.subr.mxu0 0.0
    %1700 = vmatpush1.msra.mxu0 %v161
    %1701 = vmatprep.subr.mxu0 0.0
    %1702 = vmatpush1.msra.mxu0 %v162
    %1703 = vmatprep.subr.mxu0 0.0
    %1704 = vmatpush1.msra.mxu0 %v163
    %1705 = vmatprep.subr.mxu0 0.0
    %1706 = vmatpush1.msra.mxu0 %v164
    %1707 = vmatprep.subr.mxu0 0.0
    %1708 = vmatpush1.msra.mxu0 %v165
    %1709 = vmatprep.subr.mxu0 0.0
    %1710 = vmatpush1.msra.mxu0 %v166
    %1711 = vmatprep.subr.mxu0 0.0
    %1712 = vmatpush1.msra.mxu0 %v167
    %1713 = vmatprep.subr.mxu0 0.0
    %1714 = vmatpush1.msra.mxu0 %v168
    %1715 = vmatprep.subr.mxu0 0.0
    %1716 = vmatpush1.msra.mxu0 %v169
    %1717 = vmatprep.subr.mxu0 0.0
    %1718 = vmatpush1.msra.mxu0 %v170
    %1719 = vmatprep.subr.mxu0 0.0
    %1720 = vmatpush1.msra.mxu0 0.0
    %1721 = vmatprep.subr.mxu0 0.0
    %1722 = vmatpush1.msra.mxu0 0.0
    %1723 = vmatprep.subr.mxu0 0.0
    %1724 = vmatpush1.msra.mxu0 0.0
    %1725 = vmatprep.subr.mxu0 0.0
    %1726 = vmatpush1.msra.mxu0 0.0
    %1727 = vmatprep.subr.mxu0 0.0
    %1728 = vmatpush1.msra.mxu0 0.0
    %1729 = vmatprep.subr.mxu0 0.0
    %1730 = vmatpush1.msra.mxu0 0.0
    %1731 = vmatprep.subr.mxu0 0.0
    %1732 = vmatpush1.msra.mxu0 0.0
    %1733 = vmatprep.subr.mxu0 0.0
    %1734 = vmatpush1.msra.mxu0 0.0
    %1735 = vmatprep.subr.mxu0 0.0
    %1736 = vmatpush1.msra.mxu0 0.0
    %1737 = vmatprep.subr.mxu0 0.0
    %1738 = vmatpush1.msra.mxu0 0.0
    %1739 = vmatprep.subr.mxu0 0.0
    %1740 = vmatpush1.msra.mxu0 0.0
    %1741 = vmatprep.subr.mxu0 0.0
    %1742 = vmatpush1.msra.mxu0 0.0
    %1743 = vmatprep.subr.mxu0 0.0
    %1744 = vmatpush1.msra.mxu0 0.0
    %1745 = vmatprep.subr.mxu0 0.0
    %1746 = vmatpush1.msra.mxu0 0.0
    %1747 = vmatprep.subr.mxu0 0.0
    %1748 = vmatpush1.msra.mxu0 0.0
    %1749 = vmatprep.subr.mxu0 0.0
    %1750 = vmatpush1.msra.mxu0 0.0
    %1751 = vmatprep.mubr.f32.mxu0 0.0
    %1752 = vmatmul.mubr.f32.gmra.mrb[0].mxu0 %v1607
    %v1753 = vpop.f32.mrb[0].mxu0
    %v1754 = vadd.f32 %v1684, %v1753
    %v1755 = vpop.f32.mrb[0].mxu0
    %1756 = vdwg.mxu0
    %vm1757 = vcmp.eq.s32.totalorder %v1366, 4294967290
    %vm1758 = vcmp.eq.s32.totalorder %v1600, 44
    %vm1759 = vmor %vm1757, %vm1758
    %v1760 = vsel %vm1759, 1, 0
    %v1761 = vcvt.s32.f32 %v1760
    %1762 = vmatprep.subr.mxu0 0.0
    %1763 = vmatpush1.msra.mxu0 %v343
    %1764 = vmatprep.subr.mxu0 0.0
    %1765 = vmatpush1.msra.mxu0 %v344
    %1766 = vmatprep.subr.mxu0 0.0
    %1767 = vmatpush1.msra.mxu0 %v345
    %1768 = vmatprep.subr.mxu0 0.0
    %1769 = vmatpush1.msra.mxu0 %v346
    %1770 = vmatprep.subr.mxu0 0.0
    %1771 = vmatpush1.msra.mxu0 %v347
    %1772 = vmatprep.subr.mxu0 0.0
    %1773 = vmatpush1.msra.mxu0 %v348
    %1774 = vmatprep.subr.mxu0 0.0
    %1775 = vmatpush1.msra.mxu0 %v349
    %1776 = vmatprep.subr.mxu0 0.0
    %1777 = vmatpush1.msra.mxu0 %v350
    %1778 = vmatprep.subr.mxu0 0.0
    %1779 = vmatpush1.msra.mxu0 %v351
    %1780 = vmatprep.subr.mxu0 0.0
    %1781 = vmatpush1.msra.mxu0 %v352
    %1782 = vmatprep.subr.mxu0 0.0
    %1783 = vmatpush1.msra.mxu0 %v353
    %1784 = vmatprep.subr.mxu0 0.0
    %1785 = vmatpush1.msra.mxu0 %v354
    %1786 = vmatprep.subr.mxu0 0.0
    %1787 = vmatpush1.msra.mxu0 %v355
    %1788 = vmatprep.subr.mxu0 0.0
    %1789 = vmatpush1.msra.mxu0 %v356
    %1790 = vmatprep.subr.mxu0 0.0
    %1791 = vmatpush1.msra.mxu0 %v357
    %1792 = vmatprep.subr.mxu0 0.0
    %1793 = vmatpush1.msra.mxu0 %v358
    %1794 = vmatprep.subr.mxu0 0.0
    %1795 = vmatpush1.msra.mxu0 0.0
    %1796 = vmatprep.subr.mxu0 0.0
    %1797 = vmatpush1.msra.mxu0 0.0
    %1798 = vmatprep.subr.mxu0 0.0
    %1799 = vmatpush1.msra.mxu0 0.0
    %1800 = vmatprep.subr.mxu0 0.0
    %1801 = vmatpush1.msra.mxu0 0.0
    %1802 = vmatprep.subr.mxu0 0.0
    %1803 = vmatpush1.msra.mxu0 0.0
    %1804 = vmatprep.subr.mxu0 0.0
    %1805 = vmatpush1.msra.mxu0 0.0
    %1806 = vmatprep.subr.mxu0 0.0
    %1807 = vmatpush1.msra.mxu0 0.0
    %1808 = vmatprep.subr.mxu0 0.0
    %1809 = vmatpush1.msra.mxu0 0.0
    %1810 = vmatprep.subr.mxu0 0.0
    %1811 = vmatpush1.msra.mxu0 0.0
    %1812 = vmatprep.subr.mxu0 0.0
    %1813 = vmatpush1.msra.mxu0 0.0
    %1814 = vmatprep.subr.mxu0 0.0
    %1815 = vmatpush1.msra.mxu0 0.0
    %1816 = vmatprep.subr.mxu0 0.0
    %1817 = vmatpush1.msra.mxu0 0.0
    %1818 = vmatprep.subr.mxu0 0.0
    %1819 = vmatpush1.msra.mxu0 0.0
    %1820 = vmatprep.subr.mxu0 0.0
    %1821 = vmatpush1.msra.mxu0 0.0
    %1822 = vmatprep.subr.mxu0 0.0
    %1823 = vmatpush1.msra.mxu0 0.0
    %1824 = vmatprep.subr.mxu0 0.0
    %1825 = vmatpush1.msra.mxu0 0.0
    %1826 = vmatprep.mubr.f32.mxu0 0.0
    %1827 = vmatmul.mubr.f32.gmra.mrb[0].mxu0 %v1761
    %v1828 = vpop.f32.mrb[0].mxu0
    %v1829 = vadd.f32 0.0, %v1828
    %v1830 = vpop.f32.mrb[0].mxu0
    %1831 = vdwg.mxu0
    %v1832 = vadd.f32 %v1754, %v1829
    %v1833 = vmax.f32 %v1599, %v1832
    %v1834 = vld [vmem:[%s133] sm:$0xff]
    %vm1835 = vcmp.eq.s32.totalorder %v430, 0
    %vm1836 = vcmp.eq.s32.totalorder %v664, 50
    %vm1837 = vmor %vm1835, %vm1836
    %vm1838 = vcmp.eq.s32.totalorder %v898, 100
    %vm1839 = vmor %vm1837, %vm1838
    %v1840 = vsel %vm1839, 1, 0
    %v1841 = vcvt.s32.f32 %v1840
    %vm1842 = vcmp.eq.s32.totalorder %v898, 4294967268
    %vm1843 = vcmp.eq.s32.totalorder %v1132, 22
    %vm1844 = vmor %vm1842, %vm1843
    %vm1845 = vcmp.eq.s32.totalorder %v1366, 72
    %vm1846 = vmor %vm1844, %vm1845
    %vm1847 = vcmp.eq.s32.totalorder %v1600, 122
    %vm1848 = vmor %vm1846, %vm1847
    %v1849 = vsel %vm1848, 1, 0
    %v1850 = vcvt.s32.f32 %v1849
    %1851 = vmatprep.subr.mxu0 0.0
    %1852 = vmatpush1.msra.mxu0 %v181
    %1853 = vmatprep.subr.mxu0 0.0
    %1854 = vmatpush1.msra.mxu0 %v182
    %1855 = vmatprep.subr.mxu0 0.0
    %1856 = vmatpush1.msra.mxu0 %v183
    %1857 = vmatprep.subr.mxu0 0.0
    %1858 = vmatpush1.msra.mxu0 %v184
    %1859 = vmatprep.subr.mxu0 0.0
    %1860 = vmatpush1.msra.mxu0 %v185
    %1861 = vmatprep.subr.mxu0 0.0
    %1862 = vmatpush1.msra.mxu0 %v186
    %1863 = vmatprep.subr.mxu0 0.0
    %1864 = vmatpush1.msra.mxu0 %v187
    %1865 = vmatprep.subr.mxu0 0.0
    %1866 = vmatpush1.msra.mxu0 %v188
    %1867 = vmatprep.subr.mxu0 0.0
    %1868 = vmatpush1.msra.mxu0 %v189
    %1869 = vmatprep.subr.mxu0 0.0
    %1870 = vmatpush1.msra.mxu0 %v190
    %1871 = vmatprep.subr.mxu0 0.0
    %1872 = vmatpush1.msra.mxu0 %v191
    %1873 = vmatprep.subr.mxu0 0.0
    %1874 = vmatpush1.msra.mxu0 %v192
    %1875 = vmatprep.subr.mxu0 0.0
    %1876 = vmatpush1.msra.mxu0 %v193
    %1877 = vmatprep.subr.mxu0 0.0
    %1878 = vmatpush1.msra.mxu0 %v194
    %1879 = vmatprep.subr.mxu0 0.0
    %1880 = vmatpush1.msra.mxu0 %v195
    %1881 = vmatprep.subr.mxu0 0.0
    %1882 = vmatpush1.msra.mxu0 %v196
    %1883 = vmatprep.subr.mxu0 0.0
    %1884 = vmatpush1.msra.mxu0 0.0
    %1885 = vmatprep.subr.mxu0 0.0
    %1886 = vmatpush1.msra.mxu0 0.0
    %1887 = vmatprep.subr.mxu0 0.0
    %1888 = vmatpush1.msra.mxu0 0.0
    %1889 = vmatprep.subr.mxu0 0.0
    %1890 = vmatpush1.msra.mxu0 0.0
    %1891 = vmatprep.subr.mxu0 0.0
    %1892 = vmatpush1.msra.mxu0 0.0
    %1893 = vmatprep.subr.mxu0 0.0
    %1894 = vmatpush1.msra.mxu0 0.0
    %1895 = vmatprep.subr.mxu0 0.0
    %1896 = vmatpush1.msra.mxu0 0.0
    %1897 = vmatprep.subr.mxu0 0.0
    %1898 = vmatpush1.msra.mxu0 0.0
    %1899 = vmatprep.subr.mxu0 0.0
    %1900 = vmatpush1.msra.mxu0 0.0
    %1901 = vmatprep.subr.mxu0 0.0
    %1902 = vmatpush1.msra.mxu0 0.0
    %1903 = vmatprep.subr.mxu0 0.0
    %1904 = vmatpush1.msra.mxu0 0.0
    %1905 = vmatprep.subr.mxu0 0.0
    %1906 = vmatpush1.msra.mxu0 0.0
    %1907 = vmatprep.subr.mxu0 0.0
    %1908 = vmatpush1.msra.mxu0 0.0
    %1909 = vmatprep.subr.mxu0 0.0
    %1910 = vmatpush1.msra.mxu0 0.0
    %1911 = vmatprep.subr.mxu0 0.0
    %1912 = vmatpush1.msra.mxu0 0.0
    %1913 = vmatprep.subr.mxu0 0.0
    %1914 = vmatpush1.msra.mxu0 0.0
    %1915 = vmatprep.mubr.f32.mxu0 0.0
    %1916 = vmatmul.mubr.f32.gmra.mrb[0].mxu0 %v1850
    %v1917 = vpop.f32.mrb[0].mxu0
    %v1918 = vadd.f32 0.0, %v1917
    %v1919 = vpop.f32.mrb[0].mxu0
    %1920 = vdwg.mxu0
    %1921 = vmatprep.subr.mxu0 0.0
    %1922 = vmatpush1.msra.mxu0 %v155
    %1923 = vmatprep.subr.mxu0 0.0
    %1924 = vmatpush1.msra.mxu0 %v156
    %1925 = vmatprep.subr.mxu0 0.0
    %1926 = vmatpush1.msra.mxu0 %v157
    %1927 = vmatprep.subr.mxu0 0.0
    %1928 = vmatpush1.msra.mxu0 %v158
    %1929 = vmatprep.subr.mxu0 0.0
    %1930 = vmatpush1.msra.mxu0 %v159
    %1931 = vmatprep.subr.mxu0 0.0
    %1932 = vmatpush1.msra.mxu0 %v160
    %1933 = vmatprep.subr.mxu0 0.0
    %1934 = vmatpush1.msra.mxu0 %v161
    %1935 = vmatprep.subr.mxu0 0.0
    %1936 = vmatpush1.msra.mxu0 %v162
    %1937 = vmatprep.subr.mxu0 0.0
    %1938 = vmatpush1.msra.mxu0 %v163
    %1939 = vmatprep.subr.mxu0 0.0
    %1940 = vmatpush1.msra.mxu0 %v164
    %1941 = vmatprep.subr.mxu0 0.0
    %1942 = vmatpush1.msra.mxu0 %v165
    %1943 = vmatprep.subr.mxu0 0.0
    %1944 = vmatpush1.msra.mxu0 %v166
    %1945 = vmatprep.subr.mxu0 0.0
    %1946 = vmatpush1.msra.mxu0 %v167
    %1947 = vmatprep.subr.mxu0 0.0
    %1948 = vmatpush1.msra.mxu0 %v168
    %1949 = vmatprep.subr.mxu0 0.0
    %1950 = vmatpush1.msra.mxu0 %v169
    %1951 = vmatprep.subr.mxu0 0.0
    %1952 = vmatpush1.msra.mxu0 %v170
    %1953 = vmatprep.subr.mxu0 0.0
    %1954 = vmatpush1.msra.mxu0 0.0
    %1955 = vmatprep.subr.mxu0 0.0
    %1956 = vmatpush1.msra.mxu0 0.0
    %1957 = vmatprep.subr.mxu0 0.0
    %1958 = vmatpush1.msra.mxu0 0.0
    %1959 = vmatprep.subr.mxu0 0.0
    %1960 = vmatpush1.msra.mxu0 0.0
    %1961 = vmatprep.subr.mxu0 0.0
    %1962 = vmatpush1.msra.mxu0 0.0
    %1963 = vmatprep.subr.mxu0 0.0
    %1964 = vmatpush1.msra.mxu0 0.0
    %1965 = vmatprep.subr.mxu0 0.0
    %1966 = vmatpush1.msra.mxu0 0.0
    %1967 = vmatprep.subr.mxu0 0.0
    %1968 = vmatpush1.msra.mxu0 0.0
    %1969 = vmatprep.subr.mxu0 0.0
    %1970 = vmatpush1.msra.mxu0 0.0
    %1971 = vmatprep.subr.mxu0 0.0
    %1972 = vmatpush1.msra.mxu0 0.0
    %1973 = vmatprep.subr.mxu0 0.0
    %1974 = vmatpush1.msra.mxu0 0.0
    %1975 = vmatprep.subr.mxu0 0.0
    %1976 = vmatpush1.msra.mxu0 0.0
    %1977 = vmatprep.subr.mxu0 0.0
    %1978 = vmatpush1.msra.mxu0 0.0
    %1979 = vmatprep.subr.mxu0 0.0
    %1980 = vmatpush1.msra.mxu0 0.0
    %1981 = vmatprep.subr.mxu0 0.0
    %1982 = vmatpush1.msra.mxu0 0.0
    %1983 = vmatprep.subr.mxu0 0.0
    %1984 = vmatpush1.msra.mxu0 0.0
    %1985 = vmatprep.mubr.f32.mxu0 0.0
    %1986 = vmatmul.mubr.f32.gmra.mrb[0].mxu0 %v1841
    %v1987 = vpop.f32.mrb[0].mxu0
    %v1988 = vadd.f32 %v1918, %v1987
    %v1989 = vpop.f32.mrb[0].mxu0
    %1990 = vdwg.mxu0
    %vm1991 = vcmp.eq.s32.totalorder %v1600, 4294967290
    %vm1992 = vcmp.eq.s32.totalorder %v1834, 44
    %vm1993 = vmor %vm1991, %vm1992
    %v1994 = vsel %vm1993, 1, 0
    %v1995 = vcvt.s32.f32 %v1994
    %1996 = vmatprep.subr.mxu0 0.0
    %1997 = vmatpush1.msra.mxu0 %v343
    %1998 = vmatprep.subr.mxu0 0.0
    %1999 = vmatpush1.msra.mxu0 %v344
    %2000 = vmatprep.subr.mxu0 0.0
    %2001 = vmatpush1.msra.mxu0 %v345
    %2002 = vmatprep.subr.mxu0 0.0
    %2003 = vmatpush1.msra.mxu0 %v346
    %2004 = vmatprep.subr.mxu0 0.0
    %2005 = vmatpush1.msra.mxu0 %v347
    %2006 = vmatprep.subr.mxu0 0.0
    %2007 = vmatpush1.msra.mxu0 %v348
    %2008 = vmatprep.subr.mxu0 0.0
    %2009 = vmatpush1.msra.mxu0 %v349
    %2010 = vmatprep.subr.mxu0 0.0
    %2011 = vmatpush1.msra.mxu0 %v350
    %2012 = vmatprep.subr.mxu0 0.0
    %2013 = vmatpush1.msra.mxu0 %v351
    %2014 = vmatprep.subr.mxu0 0.0
    %2015 = vmatpush1.msra.mxu0 %v352
    %2016 = vmatprep.subr.mxu0 0.0
    %2017 = vmatpush1.msra.mxu0 %v353
    %2018 = vmatprep.subr.mxu0 0.0
    %2019 = vmatpush1.msra.mxu0 %v354
    %2020 = vmatprep.subr.mxu0 0.0
    %2021 = vmatpush1.msra.mxu0 %v355
    %2022 = vmatprep.subr.mxu0 0.0
    %2023 = vmatpush1.msra.mxu0 %v356
    %2024 = vmatprep.subr.mxu0 0.0
    %2025 = vmatpush1.msra.mxu0 %v357
    %2026 = vmatprep.subr.mxu0 0.0
    %2027 = vmatpush1.msra.mxu0 %v358
    %2028 = vmatprep.subr.mxu0 0.0
    %2029 = vmatpush1.msra.mxu0 0.0
    %2030 = vmatprep.subr.mxu0 0.0
    %2031 = vmatpush1.msra.mxu0 0.0
    %2032 = vmatprep.subr.mxu0 0.0
    %2033 = vmatpush1.msra.mxu0 0.0
    %2034 = vmatprep.subr.mxu0 0.0
    %2035 = vmatpush1.msra.mxu0 0.0
    %2036 = vmatprep.subr.mxu0 0.0
    %2037 = vmatpush1.msra.mxu0 0.0
    %2038 = vmatprep.subr.mxu0 0.0
    %2039 = vmatpush1.msra.mxu0 0.0
    %2040 = vmatprep.subr.mxu0 0.0
    %2041 = vmatpush1.msra.mxu0 0.0
    %2042 = vmatprep.subr.mxu0 0.0
    %2043 = vmatpush1.msra.mxu0 0.0
    %2044 = vmatprep.subr.mxu0 0.0
    %2045 = vmatpush1.msra.mxu0 0.0
    %2046 = vmatprep.subr.mxu0 0.0
    %2047 = vmatpush1.msra.mxu0 0.0
    %2048 = vmatprep.subr.mxu0 0.0
    %2049 = vmatpush1.msra.mxu0 0.0
    %2050 = vmatprep.subr.mxu0 0.0
    %2051 = vmatpush1.msra.mxu0 0.0
    %2052 = vmatprep.subr.mxu0 0.0
    %2053 = vmatpush1.msra.mxu0 0.0
    %2054 = vmatprep.subr.mxu0 0.0
    %2055 = vmatpush1.msra.mxu0 0.0
    %2056 = vmatprep.subr.mxu0 0.0
    %2057 = vmatpush1.msra.mxu0 0.0
    %2058 = vmatprep.subr.mxu0 0.0
    %2059 = vmatpush1.msra.mxu0 0.0
    %2060 = vmatprep.mubr.f32.mxu0 0.0
    %2061 = vmatmul.mubr.f32.gmra.mrb[0].mxu0 %v1995
    %v2062 = vpop.f32.mrb[0].mxu0
    %v2063 = vadd.f32 0.0, %v2062
    %v2064 = vpop.f32.mrb[0].mxu0
    %2065 = vdwg.mxu0
    %v2066 = vadd.f32 %v1988, %v2063
    %v2067 = vmax.f32 %v1833, %v2066
    %v2068 = vld [vmem:[%s139] sm:$0xff]
    %vm2069 = vcmp.eq.s32.totalorder %v664, 0
    %vm2070 = vcmp.eq.s32.totalorder %v898, 50
    %vm2071 = vmor %vm2069, %vm2070
    %vm2072 = vcmp.eq.s32.totalorder %v1132, 100
    %vm2073 = vmor %vm2071, %vm2072
    %v2074 = vsel %vm2073, 1, 0
    %v2075 = vcvt.s32.f32 %v2074
    %vm2076 = vcmp.eq.s32.totalorder %v1132, 4294967268
    %vm2077 = vcmp.eq.s32.totalorder %v1366, 22
    %vm2078 = vmor %vm2076, %vm2077
    %vm2079 = vcmp.eq.s32.totalorder %v1600, 72
    %vm2080 = vmor %vm2078, %vm2079
    %vm2081 = vcmp.eq.s32.totalorder %v1834, 122
    %vm2082 = vmor %vm2080, %vm2081
    %v2083 = vsel %vm2082, 1, 0
    %v2084 = vcvt.s32.f32 %v2083
    %2085 = vmatprep.subr.mxu0 0.0
    %2086 = vmatpush1.msra.mxu0 %v181
    %2087 = vmatprep.subr.mxu0 0.0
    %2088 = vmatpush1.msra.mxu0 %v182
    %2089 = vmatprep.subr.mxu0 0.0
    %2090 = vmatpush1.msra.mxu0 %v183
    %2091 = vmatprep.subr.mxu0 0.0
    %2092 = vmatpush1.msra.mxu0 %v184
    %2093 = vmatprep.subr.mxu0 0.0
    %2094 = vmatpush1.msra.mxu0 %v185
    %2095 = vmatprep.subr.mxu0 0.0
    %2096 = vmatpush1.msra.mxu0 %v186
    %2097 = vmatprep.subr.mxu0 0.0
    %2098 = vmatpush1.msra.mxu0 %v187
    %2099 = vmatprep.subr.mxu0 0.0
    %2100 = vmatpush1.msra.mxu0 %v188
    %2101 = vmatprep.subr.mxu0 0.0
    %2102 = vmatpush1.msra.mxu0 %v189
    %2103 = vmatprep.subr.mxu0 0.0
    %2104 = vmatpush1.msra.mxu0 %v190
    %2105 = vmatprep.subr.mxu0 0.0
    %2106 = vmatpush1.msra.mxu0 %v191
    %2107 = vmatprep.subr.mxu0 0.0
    %2108 = vmatpush1.msra.mxu0 %v192
    %2109 = vmatprep.subr.mxu0 0.0
    %2110 = vmatpush1.msra.mxu0 %v193
    %2111 = vmatprep.subr.mxu0 0.0
    %2112 = vmatpush1.msra.mxu0 %v194
    %2113 = vmatprep.subr.mxu0 0.0
    %2114 = vmatpush1.msra.mxu0 %v195
    %2115 = vmatprep.subr.mxu0 0.0
    %2116 = vmatpush1.msra.mxu0 %v196
    %2117 = vmatprep.subr.mxu0 0.0
    %2118 = vmatpush1.msra.mxu0 0.0
    %2119 = vmatprep.subr.mxu0 0.0
    %2120 = vmatpush1.msra.mxu0 0.0
    %2121 = vmatprep.subr.mxu0 0.0
    %2122 = vmatpush1.msra.mxu0 0.0
    %2123 = vmatprep.subr.mxu0 0.0
    %2124 = vmatpush1.msra.mxu0 0.0
    %2125 = vmatprep.subr.mxu0 0.0
    %2126 = vmatpush1.msra.mxu0 0.0
    %2127 = vmatprep.subr.mxu0 0.0
    %2128 = vmatpush1.msra.mxu0 0.0
    %2129 = vmatprep.subr.mxu0 0.0
    %2130 = vmatpush1.msra.mxu0 0.0
    %2131 = vmatprep.subr.mxu0 0.0
    %2132 = vmatpush1.msra.mxu0 0.0
    %2133 = vmatprep.subr.mxu0 0.0
    %2134 = vmatpush1.msra.mxu0 0.0
    %2135 = vmatprep.subr.mxu0 0.0
    %2136 = vmatpush1.msra.mxu0 0.0
    %2137 = vmatprep.subr.mxu0 0.0
    %2138 = vmatpush1.msra.mxu0 0.0
    %2139 = vmatprep.subr.mxu0 0.0
    %2140 = vmatpush1.msra.mxu0 0.0
    %2141 = vmatprep.subr.mxu0 0.0
    %2142 = vmatpush1.msra.mxu0 0.0
    %2143 = vmatprep.subr.mxu0 0.0
    %2144 = vmatpush1.msra.mxu0 0.0
    %2145 = vmatprep.subr.mxu0 0.0
    %2146 = vmatpush1.msra.mxu0 0.0
    %2147 = vmatprep.subr.mxu0 0.0
    %2148 = vmatpush1.msra.mxu0 0.0
    %2149 = vmatprep.mubr.f32.mxu0 0.0
    %2150 = vmatmul.mubr.f32.gmra.mrb[0].mxu0 %v2084
    %v2151 = vpop.f32.mrb[0].mxu0
    %v2152 = vadd.f32 0.0, %v2151
    %v2153 = vpop.f32.mrb[0].mxu0
    %2154 = vdwg.mxu0
    %2155 = vmatprep.subr.mxu0 0.0
    %2156 = vmatpush1.msra.mxu0 %v155
    %2157 = vmatprep.subr.mxu0 0.0
    %2158 = vmatpush1.msra.mxu0 %v156
    %2159 = vmatprep.subr.mxu0 0.0
    %2160 = vmatpush1.msra.mxu0 %v157
    %2161 = vmatprep.subr.mxu0 0.0
    %2162 = vmatpush1.msra.mxu0 %v158
    %2163 = vmatprep.subr.mxu0 0.0
    %2164 = vmatpush1.msra.mxu0 %v159
    %2165 = vmatprep.subr.mxu0 0.0
    %2166 = vmatpush1.msra.mxu0 %v160
    %2167 = vmatprep.subr.mxu0 0.0
    %2168 = vmatpush1.msra.mxu0 %v161
    %2169 = vmatprep.subr.mxu0 0.0
    %2170 = vmatpush1.msra.mxu0 %v162
    %2171 = vmatprep.subr.mxu0 0.0
    %2172 = vmatpush1.msra.mxu0 %v163
    %2173 = vmatprep.subr.mxu0 0.0
    %2174 = vmatpush1.msra.mxu0 %v164
    %2175 = vmatprep.subr.mxu0 0.0
    %2176 = vmatpush1.msra.mxu0 %v165
    %2177 = vmatprep.subr.mxu0 0.0
    %2178 = vmatpush1.msra.mxu0 %v166
    %2179 = vmatprep.subr.mxu0 0.0
    %2180 = vmatpush1.msra.mxu0 %v167
    %2181 = vmatprep.subr.mxu0 0.0
    %2182 = vmatpush1.msra.mxu0 %v168
    %2183 = vmatprep.subr.mxu0 0.0
    %2184 = vmatpush1.msra.mxu0 %v169
    %2185 = vmatprep.subr.mxu0 0.0
    %2186 = vmatpush1.msra.mxu0 %v170
    %2187 = vmatprep.subr.mxu0 0.0
    %2188 = vmatpush1.msra.mxu0 0.0
    %2189 = vmatprep.subr.mxu0 0.0
    %2190 = vmatpush1.msra.mxu0 0.0
    %2191 = vmatprep.subr.mxu0 0.0
    %2192 = vmatpush1.msra.mxu0 0.0
    %2193 = vmatprep.subr.mxu0 0.0
    %2194 = vmatpush1.msra.mxu0 0.0
    %2195 = vmatprep.subr.mxu0 0.0
    %2196 = vmatpush1.msra.mxu0 0.0
    %2197 = vmatprep.subr.mxu0 0.0
    %2198 = vmatpush1.msra.mxu0 0.0
    %2199 = vmatprep.subr.mxu0 0.0
    %2200 = vmatpush1.msra.mxu0 0.0
    %2201 = vmatprep.subr.mxu0 0.0
    %2202 = vmatpush1.msra.mxu0 0.0
    %2203 = vmatprep.subr.mxu0 0.0
    %2204 = vmatpush1.msra.mxu0 0.0
    %2205 = vmatprep.subr.mxu0 0.0
    %2206 = vmatpush1.msra.mxu0 0.0
    %2207 = vmatprep.subr.mxu0 0.0
    %2208 = vmatpush1.msra.mxu0 0.0
    %2209 = vmatprep.subr.mxu0 0.0
    %2210 = vmatpush1.msra.mxu0 0.0
    %2211 = vmatprep.subr.mxu0 0.0
    %2212 = vmatpush1.msra.mxu0 0.0
    %2213 = vmatprep.subr.mxu0 0.0
    %2214 = vmatpush1.msra.mxu0 0.0
    %2215 = vmatprep.subr.mxu0 0.0
    %2216 = vmatpush1.msra.mxu0 0.0
    %2217 = vmatprep.subr.mxu0 0.0
    %2218 = vmatpush1.msra.mxu0 0.0
    %2219 = vmatprep.mubr.f32.mxu0 0.0
    %2220 = vmatmul.mubr.f32.gmra.mrb[0].mxu0 %v2075
    %v2221 = vpop.f32.mrb[0].mxu0
    %v2222 = vadd.f32 %v2152, %v2221
    %v2223 = vpop.f32.mrb[0].mxu0
    %2224 = vdwg.mxu0
    %vm2225 = vcmp.eq.s32.totalorder %v1834, 4294967290
    %vm2226 = vcmp.eq.s32.totalorder %v2068, 44
    %vm2227 = vmor %vm2225, %vm2226
    %v2228 = vsel %vm2227, 1, 0
    %v2229 = vcvt.s32.f32 %v2228
    %2230 = vmatprep.subr.mxu0 0.0
    %2231 = vmatpush1.msra.mxu0 %v343
    %2232 = vmatprep.subr.mxu0 0.0
    %2233 = vmatpush1.msra.mxu0 %v344
    %2234 = vmatprep.subr.mxu0 0.0
    %2235 = vmatpush1.msra.mxu0 %v345
    %2236 = vmatprep.subr.mxu0 0.0
    %2237 = vmatpush1.msra.mxu0 %v346
    %2238 = vmatprep.subr.mxu0 0.0
    %2239 = vmatpush1.msra.mxu0 %v347
    %2240 = vmatprep.subr.mxu0 0.0
    %2241 = vmatpush1.msra.mxu0 %v348
    %2242 = vmatprep.subr.mxu0 0.0
    %2243 = vmatpush1.msra.mxu0 %v349
    %2244 = vmatprep.subr.mxu0 0.0
    %2245 = vmatpush1.msra.mxu0 %v350
    %2246 = vmatprep.subr.mxu0 0.0
    %2247 = vmatpush1.msra.mxu0 %v351
    %2248 = vmatprep.subr.mxu0 0.0
    %2249 = vmatpush1.msra.mxu0 %v352
    %2250 = vmatprep.subr.mxu0 0.0
    %2251 = vmatpush1.msra.mxu0 %v353
    %2252 = vmatprep.subr.mxu0 0.0
    %2253 = vmatpush1.msra.mxu0 %v354
    %2254 = vmatprep.subr.mxu0 0.0
    %2255 = vmatpush1.msra.mxu0 %v355
    %2256 = vmatprep.subr.mxu0 0.0
    %2257 = vmatpush1.msra.mxu0 %v356
    %2258 = vmatprep.subr.mxu0 0.0
    %2259 = vmatpush1.msra.mxu0 %v357
    %2260 = vmatprep.subr.mxu0 0.0
    %2261 = vmatpush1.msra.mxu0 %v358
    %2262 = vmatprep.subr.mxu0 0.0
    %2263 = vmatpush1.msra.mxu0 0.0
    %2264 = vmatprep.subr.mxu0 0.0
    %2265 = vmatpush1.msra.mxu0 0.0
    %2266 = vmatprep.subr.mxu0 0.0
    %2267 = vmatpush1.msra.mxu0 0.0
    %2268 = vmatprep.subr.mxu0 0.0
    %2269 = vmatpush1.msra.mxu0 0.0
    %2270 = vmatprep.subr.mxu0 0.0
    %2271 = vmatpush1.msra.mxu0 0.0
    %2272 = vmatprep.subr.mxu0 0.0
    %2273 = vmatpush1.msra.mxu0 0.0
    %2274 = vmatprep.subr.mxu0 0.0
    %2275 = vmatpush1.msra.mxu0 0.0
    %2276 = vmatprep.subr.mxu0 0.0
    %2277 = vmatpush1.msra.mxu0 0.0
    %2278 = vmatprep.subr.mxu0 0.0
    %2279 = vmatpush1.msra.mxu0 0.0
    %2280 = vmatprep.subr.mxu0 0.0
    %2281 = vmatpush1.msra.mxu0 0.0
    %2282 = vmatprep.subr.mxu0 0.0
    %2283 = vmatpush1.msra.mxu0 0.0
    %2284 = vmatprep.subr.mxu0 0.0
    %2285 = vmatpush1.msra.mxu0 0.0
    %2286 = vmatprep.subr.mxu0 0.0
    %2287 = vmatpush1.msra.mxu0 0.0
    %2288 = vmatprep.subr.mxu0 0.0
    %2289 = vmatpush1.msra.mxu0 0.0
    %2290 = vmatprep.subr.mxu0 0.0
    %2291 = vmatpush1.msra.mxu0 0.0
    %2292 = vmatprep.subr.mxu0 0.0
    %2293 = vmatpush1.msra.mxu0 0.0
    %2294 = vmatprep.mubr.f32.mxu0 0.0
    %2295 = vmatmul.mubr.f32.gmra.mrb[0].mxu0 %v2229
    %v2296 = vpop.f32.mrb[0].mxu0
    %v2297 = vadd.f32 0.0, %v2296
    %v2298 = vpop.f32.mrb[0].mxu0
    %2299 = vdwg.mxu0
    %v2300 = vadd.f32 %v2222, %v2297
    %v2301 = vmax.f32 %v2067, %v2300
    %v2302 = vld [vmem:[%s2] sm:$0x1]
    %v2304 = vlaneseq
    %v2305 = vshrl.u32 %v2304, 7
    %v2306 = vsub.s32 0, %v2305
    %v2307 = vrot.slane %v2302, %v2306
    %v2309 = vadd.f32 %v2301, %v2307
    %v2310 = vmax.f32 %v2309, 0.0
    %v2311 = vld [vmem:[%s3] sm:$0x1]
    %v2312 = vld [vmem:[#allocation3] sm:$0x1]
    %2314 = vset.pattern.permute.xlu0 0
    %2315 = vperm.xlu0 %2314, %v2312
    %v2316 = vpop.permute.xlu0 %2315
    %v2318 = vlaneseq
    %v2319 = vshrl.u32 %v2318, 7
    %v2320 = vsub.s32 0, %v2319
    %v2321 = vrot.slane %v2316, %v2320
    %2322 = vmatprep.subr.mxu0 0.0
    %2323 = vmatpush1.xpose.msra.mxu0 %v2310
    %2324 = vmatprep.subr.mxu0 0.0
    %2325 = vmatpush1.xpose.msra.mxu0 0.0
    %2326 = vmatprep.subr.mxu0 0.0
    %2327 = vmatpush1.xpose.msra.mxu0 0.0
    %2328 = vmatprep.subr.mxu0 0.0
    %2329 = vmatpush1.xpose.msra.mxu0 0.0
    %2330 = vmatprep.subr.mxu0 0.0
    %2331 = vmatpush1.xpose.msra.mxu0 0.0
    %2332 = vmatprep.subr.mxu0 0.0
    %2333 = vmatpush1.xpose.msra.mxu0 0.0
    %2334 = vmatprep.subr.mxu0 0.0
    %2335 = vmatpush1.xpose.msra.mxu0 0.0
    %2336 = vmatprep.subr.mxu0 0.0
    %2337 = vmatpush1.xpose.msra.mxu0 0.0
    %2338 = vmatprep.subr.mxu0 0.0
    %2339 = vmatpush1.xpose.msra.mxu0 0.0
    %2340 = vmatprep.subr.mxu0 0.0
    %2341 = vmatpush1.xpose.msra.mxu0 0.0
    %2342 = vmatprep.subr.mxu0 0.0
    %2343 = vmatpush1.xpose.msra.mxu0 0.0
    %2344 = vmatprep.subr.mxu0 0.0
    %2345 = vmatpush1.xpose.msra.mxu0 0.0
    %2346 = vmatprep.subr.mxu0 0.0
    %2347 = vmatpush1.xpose.msra.mxu0 0.0
    %2348 = vmatprep.subr.mxu0 0.0
    %2349 = vmatpush1.xpose.msra.mxu0 0.0
    %2350 = vmatprep.subr.mxu0 0.0
    %2351 = vmatpush1.xpose.msra.mxu0 0.0
    %2352 = vmatprep.subr.mxu0 0.0
    %2353 = vmatpush1.xpose.msra.mxu0 0.0
    %2354 = vmatprep.subr.mxu0 0.0
    %2355 = vmatpush1.xpose.msra.mxu0 0.0
    %2356 = vmatprep.subr.mxu0 0.0
    %2357 = vmatpush1.xpose.msra.mxu0 0.0
    %2358 = vmatprep.subr.mxu0 0.0
    %2359 = vmatpush1.xpose.msra.mxu0 0.0
    %2360 = vmatprep.subr.mxu0 0.0
    %2361 = vmatpush1.xpose.msra.mxu0 0.0
    %2362 = vmatprep.subr.mxu0 0.0
    %2363 = vmatpush1.xpose.msra.mxu0 0.0
    %2364 = vmatprep.subr.mxu0 0.0
    %2365 = vmatpush1.xpose.msra.mxu0 0.0
    %2366 = vmatprep.subr.mxu0 0.0
    %2367 = vmatpush1.xpose.msra.mxu0 0.0
    %2368 = vmatprep.subr.mxu0 0.0
    %2369 = vmatpush1.xpose.msra.mxu0 0.0
    %2370 = vmatprep.subr.mxu0 0.0
    %2371 = vmatpush1.xpose.msra.mxu0 0.0
    %2372 = vmatprep.subr.mxu0 0.0
    %2373 = vmatpush1.xpose.msra.mxu0 0.0
    %2374 = vmatprep.subr.mxu0 0.0
    %2375 = vmatpush1.xpose.msra.mxu0 0.0
    %2376 = vmatprep.subr.mxu0 0.0
    %2377 = vmatpush1.xpose.msra.mxu0 0.0
    %2378 = vmatprep.subr.mxu0 0.0
    %2379 = vmatpush1.xpose.msra.mxu0 0.0
    %2380 = vmatprep.subr.mxu0 0.0
    %2381 = vmatpush1.xpose.msra.mxu0 0.0
    %2382 = vmatprep.subr.mxu0 0.0
    %2383 = vmatpush1.xpose.msra.mxu0 0.0
    %2384 = vmatprep.subr.mxu0 0.0
    %2385 = vmatpush1.xpose.msra.mxu0 0.0
    %2386 = vmatprep.mubr.f32.mxu0 0.0
    %2387 = vmatmul.mubr.f32.gmra.mrb[0].mxu0 %v2311
    %v2388 = vpop.f32.mrb[0].mxu0
    %v2389 = vadd.f32 %v2321, %v2388
    %v2390 = vpop.f32.mrb[0].mxu0
    %2391 = vdwg.mxu0
    %v2392 = vxor.u32 %v2389, 2147483648
    %v2393 = vmul.f32 %v2392, 1.442695
    %v2394 = vpow.pop %v2393
    %v2395 = vadd.f32 %v2394, 1.0
    %v2396 = vrcp.pop %v2395
    %v2397 = vmul.f32 1.0, %v2396
    %vm2398 = vcmask 57344
    %2399 = vst.msk [vmem:[#allocation9] sm:$0x1] %vm2398, %v2397
    // Predicated region
    $region30: #{tpu_custom_call.1} parent=1 // pred_check
      _
    $region31: #{tpu_custom_call.1} parent=1 // pred_check_branch
      %2401 = sbr.rel (0) target = $region33
    $region32: #{tpu_custom_call.1} parent=1 // pred_region
      %s2403 = ssub.s32 16, 16
      %2404 = vsyncadd [#allocation6], %s2403
      %s2406 = sshll.u32 [#allocation9], 4
      %s2407 = int_to_ptr.vmem [resolvable:$true] %s2406
      %2409 = dma.vmem_to_hbm [thread:$0]  %s2407, 16, %s5, [#allocation6]
    $region33: #{tpu_custom_call.1} parent=1 // pred_fallthru
      _
    // Predicated region
    $region34: #{tpu_custom_call.1} parent=1 // pred_check
      _
    $region35: #{tpu_custom_call.1} parent=1 // pred_check_branch
      %2411 = sbr.rel (0) target = $region37
    $region36: #{tpu_custom_call.1} parent=1 // pred_region
      %2412 = dma.done [#allocation6], 16
    $region37: #{tpu_custom_call.1} parent=1 // pred_fallthru
      _
    %2413 = vsyncpa [#allocation5], 1
    %2414 = vsyncpa [#allocation8], 1
    %2415 = vsyncpa [#allocation6], 1

</llo_original>
